<compile_context>
chip_gen: v5e
topology: v5e:2x2
jax: 0.10.0
libtpu: 0.0.40
codegen_flags: <defaults>
</compile_context>

<pallas_src>
import functools
import numpy as np

import jax
import jax.numpy as jnp
from jax.experimental import pallas as pl
from jax.experimental.pallas import tpu as pltpu


# ---------------------------------------------------------------------------
# Fused encoder (+ merge_fc + fc) kernel: grid over layers, state in VMEM scratch
# ---------------------------------------------------------------------------

def _encoder_kernel(x0_ref, bias_ref, embg_ref, embb_ref,
                    qkvw_ref, qkvb_ref, aow_ref, aob_ref,
                    ln1g_ref, ln1b_ref, iw_ref, ib_ref,
                    ow_ref, ob_ref, ln2g_ref, ln2b_ref,
                    *rest, nH, merge):
    if merge:
        mergew_ref, mergeb_ref, fcw_ref, fcb_ref, logits_ref, x_sc, merge_sc = rest
    else:
        fcw_ref, fcb_ref, logits_ref, x_sc = rest

    l = pl.program_id(0)
    BS, H = x0_ref.shape
    B, _, S = bias_ref.shape
    Dh = H // nH
    scale = 1.0 / float(np.sqrt(Dh))

    def layernorm(x, g, b):
        mu = jnp.mean(x, axis=-1, keepdims=True)
        var = jnp.mean((x - mu) ** 2, axis=-1, keepdims=True)
        return (x - mu) * jax.lax.rsqrt(var + 1e-12) * g + b

    def matmul(a, w):
        # bf16 MXU operands, f32 accumulation.
        return jnp.dot(a.astype(jnp.bfloat16), w.astype(jnp.bfloat16),
                       preferred_element_type=jnp.float32)

    @pl.when(l == 0)
    def _():
        # embedding LayerNorm once, then keep the residual stream resident in VMEM.
        x_sc[...] = layernorm(x0_ref[...], embg_ref[...], embb_ref[...])
        if merge:
            merge_sc[...] = jnp.zeros_like(merge_sc)

    x = x_sc[...]                                   # (BS, H) f32

    # ---- self-attention (fused QKV, per-head in-register) ----
    qkv = matmul(x, qkvw_ref[0]) + qkvb_ref[0]      # (BS, 3H) f32
    bias = bias_ref[...]                            # (B, 1, S) additive mask, broadcast over heads

    attn_acc = None
    ao_w = aow_ref[0]                               # (H, H) bf16
    for h in range(nH):
        qh = qkv[:, h * Dh:(h + 1) * Dh].reshape(B, S, Dh)
        kh = qkv[:, H + h * Dh:H + (h + 1) * Dh].reshape(B, S, Dh)
        vh = qkv[:, 2 * H + h * Dh:2 * H + (h + 1) * Dh].reshape(B, S, Dh)
        s = jnp.einsum("bqd,bkd->bqk",
                       qh.astype(jnp.bfloat16), kh.astype(jnp.bfloat16),
                       preferred_element_type=jnp.float32) * scale
        s = s + bias
        s = s - jnp.max(s, axis=-1, keepdims=True)
        p = jnp.exp(s)
        p = p * pl.reciprocal(jnp.sum(p, axis=-1, keepdims=True), approx=True)
        ctx_h = jnp.einsum("bqk,bkd->bqd",
                           p.astype(jnp.bfloat16), vh.astype(jnp.bfloat16),
                           preferred_element_type=jnp.float32).reshape(BS, Dh)
        # per-head slice of the output projection -> accumulate (avoids lane-dim concat of heads)
        part = matmul(ctx_h, ao_w[h * Dh:(h + 1) * Dh, :])
        attn_acc = part if attn_acc is None else attn_acc + part
    attn_out = attn_acc + aob_ref[0]

    x = layernorm(x + attn_out, ln1g_ref[0], ln1b_ref[0])

    # ---- FFN ----
    inter = matmul(x, iw_ref[0]) + ib_ref[0]
    # TODO(synk): HF BERT uses the exact erf GELU; tanh approximation kept (known-good lowering).
    inter = jax.nn.gelu(inter, approximate=True)
    ffn = matmul(inter, ow_ref[0]) + ob_ref[0]
    x = layernorm(x + ffn, ln2g_ref[0], ln2b_ref[0])
    x_sc[...] = x

    if merge:
        # merge_fc(concat(h_1..h_L)) == sum_l h_l @ merge_w[l]  -> accumulate layer-by-layer.
        merge_sc[...] = merge_sc[...] + matmul(x, mergew_ref[0])

    @pl.when(l == pl.num_programs(0) - 1)
    def _():
        if merge:
            seq_out = merge_sc[...] + mergeb_ref[...]
        else:
            seq_out = x
        # nn.Dropout is identity at inference time.
        logits_ref[...] = matmul(seq_out, fcw_ref[...]) + fcb_ref[...]


def fused_encoder_logits(params, x0, bias, cfg):
    B = bias.shape[0]
    S = bias.shape[2]
    H, I, T = cfg["hidden"], cfg["intermediate"], cfg["label_size"]
    L, nH = cfg["layers"], cfg["heads"]
    BS = B * S
    merge = cfg["merge_weight"]
    wdt = jnp.bfloat16

    inputs = [
        x0,                                              # (BS, H) f32
        bias,                                            # (B, 1, S) f32
        params["emb_ln_g"].reshape(1, H),
        params["emb_ln_b"].reshape(1, H),
        params["qkv_w"].astype(wdt),                     # (L, H, 3H)
        params["qkv_b"],                                 # (L, 1, 3H)
        params["ao_w"].astype(wdt),                      # (L, H, H)
        params["ao_b"],                                  # (L, 1, H)
        params["ln1_g"], params["ln1_b"],                # (L, 1, H)
        params["i_w"].astype(wdt), params["i_b"],        # (L, H, I), (L, 1, I)
        params["o_w"].astype(wdt), params["o_b"],        # (L, I, H), (L, 1, H)
        params["ln2_g"], params["ln2_b"],                # (L, 1, H)
    ]
    in_specs = [
        pl.BlockSpec((BS, H), lambda l: (0, 0)),
        pl.BlockSpec((B, 1, S), lambda l: (0, 0, 0)),
        pl.BlockSpec((1, H), lambda l: (0, 0)),
        pl.BlockSpec((1, H), lambda l: (0, 0)),
        pl.BlockSpec((1, H, 3 * H), lambda l: (l, 0, 0)),
        pl.BlockSpec((1, 1, 3 * H), lambda l: (l, 0, 0)),
        pl.BlockSpec((1, H, H), lambda l: (l, 0, 0)),
        pl.BlockSpec((1, 1, H), lambda l: (l, 0, 0)),
        pl.BlockSpec((1, 1, H), lambda l: (l, 0, 0)),
        pl.BlockSpec((1, 1, H), lambda l: (l, 0, 0)),
        pl.BlockSpec((1, H, I), lambda l: (l, 0, 0)),
        pl.BlockSpec((1, 1, I), lambda l: (l, 0, 0)),
        pl.BlockSpec((1, I, H), lambda l: (l, 0, 0)),
        pl.BlockSpec((1, 1, H), lambda l: (l, 0, 0)),
        pl.BlockSpec((1, 1, H), lambda l: (l, 0, 0)),
        pl.BlockSpec((1, 1, H), lambda l: (l, 0, 0)),
    ]
    scratch = [pltpu.VMEM((BS, H), jnp.float32)]         # residual stream
    if merge:
        inputs += [params["merge_w"].astype(wdt),        # (L, H, H)
                   params["merge_b"].reshape(1, H)]
        in_specs += [pl.BlockSpec((1, H, H), lambda l: (l, 0, 0)),
                     pl.BlockSpec((1, H), lambda l: (0, 0))]
        scratch.append(pltpu.VMEM((BS, H), jnp.float32)) # merge_fc accumulator
    inputs += [params["fc_w"].astype(wdt), params["fc_b"].reshape(1, T)]
    in_specs += [pl.BlockSpec((H, T), lambda l: (0, 0)),
                 pl.BlockSpec((1, T), lambda l: (0, 0))]

    return pl.pallas_call(
        functools.partial(_encoder_kernel, nH=nH, merge=merge),
        out_shape=jax.ShapeDtypeStruct((BS, T), jnp.float32),
        grid=(L,),
        in_specs=in_specs,
        out_specs=pl.BlockSpec((BS, T), lambda l: (0, 0)),
        scratch_shapes=scratch,
        compiler_params=pltpu.CompilerParams(dimension_semantics=("arbitrary",)),
    )(*inputs)


# ---------------------------------------------------------------------------
# CRF Viterbi decode kernel: forward recursion + on-device backtrace
# ---------------------------------------------------------------------------

def _viterbi_kernel(emis_ref, mask_ref, start_ref, end_ref, trans_t_ref, tags_ref):
    # emissions: (S, B, T) time-major; mask: (S, B, 1) f32; trans_t[j, i] = transitions[i, j].
    S, B, T = emis_ref.shape
    trans_t = trans_t_ref[...]

    # ---- forward (max-product) recursion; backpointers stay live on-chip ----
    score = start_ref[...] + emis_ref[0]                       # (B, T)
    hist = []
    # TODO(synk): switch to lax.fori_loop + a VMEM backpointer scratch for long sequences (S >> 16).
    for t in range(1, S):
        # nxt[b, j, i] = score[b, i] + transitions[i, j] + emissions[t, b, j]
        nxt = score[:, None, :] + trans_t[None, :, :] + emis_ref[t][:, :, None]   # (B, Tnext, Tprev)
        best = jnp.max(nxt, axis=-1)
        idx = jnp.argmax(nxt, axis=-1).astype(jnp.int32)       # backpointers, (B, T)
        cond = mask_ref[t] > 0.5                               # (B, 1)
        score = jnp.where(cond, best, score)
        hist.append(idx)
    score = score + end_ref[...]

    # ---- on-device backtrace (replaces the host argmax walk / D2H of history) ----
    iota_tag = jax.lax.broadcasted_iota(jnp.int32, (B, T), 1)
    iota_pos = jax.lax.broadcasted_iota(jnp.int32, (B, S), 1)
    max_score = jnp.max(score, axis=-1, keepdims=True)
    best_last = jnp.min(jnp.where(score >= max_score, iota_tag, T),
                        axis=-1, keepdims=True)                # first argmax, (B, 1) int32

    tags = jnp.zeros((B, S), jnp.int32)
    cur = best_last
    # NOTE: assumes the mask is contiguous (mask[0] all ones, no interior zeros), like torchcrf.
    for t in range(S - 1, -1, -1):
        valid = mask_ref[t] > 0.5                              # (B, 1)
        if t == S - 1:
            nxt_valid = jnp.zeros_like(valid)
            stepped = cur
        else:
            nxt_valid = mask_ref[t + 1] > 0.5
            onehot = iota_tag == cur                           # (B, T)
            stepped = jnp.sum(jnp.where(onehot, hist[t], 0), axis=-1, keepdims=True)
        is_last = jnp.logical_and(valid, jnp.logical_not(nxt_valid))
        cur = jnp.where(is_last, best_last, jnp.where(nxt_valid, stepped, cur))
        tags = jnp.where(iota_pos == t, jnp.where(valid, cur, 0), tags)
    tags_ref[...] = tags


def pallas_viterbi_decode(emissions, mask_sb1, start, end, transitions):
    S, B, T = emissions.shape
    return pl.pallas_call(
        _viterbi_kernel,
        out_shape=jax.ShapeDtypeStruct((B, S), jnp.int32),
    )(emissions, mask_sb1, start.reshape(1, T), end.reshape(1, T), transitions.T)


# ---------------------------------------------------------------------------
# Parameter init (deterministic, synthetic) and forward glue
# ---------------------------------------------------------------------------

def init_params(key, cfg):
    H, L, I = cfg["hidden"], cfg["layers"], cfg["intermediate"]
    V, P, T = cfg["vocab"], cfg["max_pos"], cfg["label_size"]
    keys = iter(jax.random.split(key, 32))

    def nrm(shape):
        return 0.02 * jax.random.normal(next(keys), shape, jnp.float32)

    params = {
        "word_emb": nrm((V, H)),
        "pos_emb": nrm((P, H)),
        "emb_ln_g": jnp.ones((H,), jnp.float32),
        "emb_ln_b": jnp.zeros((H,), jnp.float32),
        # per-layer weights stacked on a leading L axis (fused QKV: (L, H, 3H)).
        "qkv_w": nrm((L, H, 3 * H)), "qkv_b": jnp.zeros((L, 1, 3 * H), jnp.float32),
        "ao_w": nrm((L, H, H)), "ao_b": jnp.zeros((L, 1, H), jnp.float32),
        "ln1_g": jnp.ones((L, 1, H), jnp.float32), "ln1_b": jnp.zeros((L, 1, H), jnp.float32),
        "i_w": nrm((L, H, I)), "i_b": jnp.zeros((L, 1, I), jnp.float32),
        "o_w": nrm((L, I, H)), "o_b": jnp.zeros((L, 1, H), jnp.float32),
        "ln2_g": jnp.ones((L, 1, H), jnp.float32), "ln2_b": jnp.zeros((L, 1, H), jnp.float32),
        "fc_w": nrm((H, T)), "fc_b": jnp.zeros((T,), jnp.float32),
        # torchcrf init: uniform(-0.1, 0.1)
        "crf_start": jax.random.uniform(next(keys), (T,), jnp.float32, -0.1, 0.1),
        "crf_end": jax.random.uniform(next(keys), (T,), jnp.float32, -0.1, 0.1),
        "crf_trans": jax.random.uniform(next(keys), (T, T), jnp.float32, -0.1, 0.1),
    }
    if cfg["merge_weight"]:
        # merge_fc weight split per layer: concat(h_1..h_L) @ W == sum_l h_l @ W[l].
        params["merge_w"] = nrm((L, H, H))
        params["merge_b"] = jnp.zeros((H,), jnp.float32)
    return params


def device_forward(params, input_ids, attention_mask, *, cfg):
    """Device part of Model.forward: logits + dense Viterbi tag tensor (B, S)."""
    B, S = input_ids.shape
    H, T = cfg["hidden"], cfg["label_size"]

    # Embedding gather + position add in XLA; everything else is fused Pallas.
    x0 = (params["word_emb"][input_ids] + params["pos_emb"][:S][None, :, :]).reshape(B * S, H)
    bias = ((1.0 - attention_mask.astype(jnp.float32)) * -1e9)[:, None, :]   # (B, 1, S)

    logits = fused_encoder_logits(params, x0, bias, cfg).reshape(B, S, T)

    # CRF decode (batch_first=True): torchcrf transposes to time-major internally; do the same.
    emissions = jnp.transpose(logits, (1, 0, 2))                              # (S, B, T)
    mask_sb = jnp.transpose(attention_mask, (1, 0)).astype(jnp.float32).reshape(S, B, 1)
    tags = pallas_viterbi_decode(emissions, mask_sb, params["crf_start"],
                                 params["crf_end"], params["crf_trans"])      # (B, S) int32
    return tags, logits


def decode_tag_lists(tags_dense, attention_mask):
    """Build the variable-length List[List[int]] (host side, single tiny D2H of (B, S) int32)."""
    tags_np = np.asarray(tags_dense)
    lengths = np.asarray(attention_mask).sum(axis=1).astype(np.int64)
    return [tags_np[b, :lengths[b]].tolist() for b in range(tags_np.shape[0])]


# ---------------------------------------------------------------------------
# Main
# ---------------------------------------------------------------------------

if __name__ == "__main__":
    cfg = dict(
        vocab=64,
        hidden=32,
        heads=2,
        layers=2,
        intermediate=64,
        max_pos=16,
        label_size=8,
        merge_weight=True,
    )
    key = jax.random.PRNGKey(0)
    pkey, dkey = jax.random.split(key)
    params = init_params(pkey, cfg)

    B, S = 2, 8
    input_ids = jax.random.randint(dkey, (B, S), 0, cfg["vocab"], dtype=jnp.int32)
    # first timestep must be valid for every sequence (mask[0].all() assertion in CRF).
    attention_mask = jnp.array([[1] * S, [1] * 6 + [0] * 2], dtype=jnp.int32)

    fwd = jax.jit(functools.partial(device_forward, cfg=cfg))
    tags_dense, logits = fwd(params, input_ids, attention_mask)
    jax.block_until_ready((tags_dense, logits))

    best_tags_list = decode_tag_lists(tags_dense, attention_mask)
    assert len(best_tags_list) == B
    assert all(len(t) == int(attention_mask[b].sum()) for b, t in enumerate(best_tags_list))
    print("KERNEL_OK")
</pallas_src>

<mosaic_0001>
module attributes {stable_mosaic.version = 11 : i64} {
  func.func @_encoder_kernel(%arg0: i32, %arg1: memref<16x32xf32, #tpu.memory_space<vmem>>, %arg2: memref<2x1x8xf32, #tpu.memory_space<vmem>>, %arg3: memref<1x32xf32, #tpu.memory_space<vmem>>, %arg4: memref<1x32xf32, #tpu.memory_space<vmem>>, %arg5: memref<1x32x96xbf16, #tpu.memory_space<vmem>>, %arg6: memref<1x1x96xf32, #tpu.memory_space<vmem>>, %arg7: memref<1x32x32xbf16, #tpu.memory_space<vmem>>, %arg8: memref<1x1x32xf32, #tpu.memory_space<vmem>>, %arg9: memref<1x1x32xf32, #tpu.memory_space<vmem>>, %arg10: memref<1x1x32xf32, #tpu.memory_space<vmem>>, %arg11: memref<1x32x64xbf16, #tpu.memory_space<vmem>>, %arg12: memref<1x1x64xf32, #tpu.memory_space<vmem>>, %arg13: memref<1x64x32xbf16, #tpu.memory_space<vmem>>, %arg14: memref<1x1x32xf32, #tpu.memory_space<vmem>>, %arg15: memref<1x1x32xf32, #tpu.memory_space<vmem>>, %arg16: memref<1x1x32xf32, #tpu.memory_space<vmem>>, %arg17: memref<1x32x32xbf16, #tpu.memory_space<vmem>>, %arg18: memref<1x32xf32, #tpu.memory_space<vmem>>, %arg19: memref<32x8xbf16, #tpu.memory_space<vmem>>, %arg20: memref<1x8xf32, #tpu.memory_space<vmem>>, %arg21: memref<16x8xf32, #tpu.memory_space<vmem>>, %arg22: memref<16x32xf32, #tpu.memory_space<vmem>>, %arg23: memref<16x32xf32, #tpu.memory_space<vmem>>) attributes {dimension_semantics = [#tpu.dimension_semantics<arbitrary>], iteration_bounds = array<i64: 2>, scalar_prefetch = 0 : i64, scratch_operands = 2 : i64, tpu.core_type = #tpu.core_type<tc>, window_params = [{pipeline_mode = #tpu.pipeline_mode<synchronous>, transform_indices = @transform_0, window_bounds = array<i64: 16, 32>}, {pipeline_mode = #tpu.pipeline_mode<synchronous>, transform_indices = @transform_1, window_bounds = array<i64: 2, 1, 8>}, {pipeline_mode = #tpu.pipeline_mode<synchronous>, transform_indices = @transform_2, window_bounds = array<i64: 1, 32>}, {pipeline_mode = #tpu.pipeline_mode<synchronous>, transform_indices = @transform_3, window_bounds = array<i64: 1, 32>}, {transform_indices = @transform_4, window_bounds = array<i64: 1, 32, 96>}, {transform_indices = @transform_5, window_bounds = array<i64: 1, 1, 96>}, {transform_indices = @transform_6, window_bounds = array<i64: 1, 32, 32>}, {transform_indices = @transform_7, window_bounds = array<i64: 1, 1, 32>}, {transform_indices = @transform_8, window_bounds = array<i64: 1, 1, 32>}, {transform_indices = @transform_9, window_bounds = array<i64: 1, 1, 32>}, {transform_indices = @transform_10, window_bounds = array<i64: 1, 32, 64>}, {transform_indices = @transform_11, window_bounds = array<i64: 1, 1, 64>}, {transform_indices = @transform_12, window_bounds = array<i64: 1, 64, 32>}, {transform_indices = @transform_13, window_bounds = array<i64: 1, 1, 32>}, {transform_indices = @transform_14, window_bounds = array<i64: 1, 1, 32>}, {transform_indices = @transform_15, window_bounds = array<i64: 1, 1, 32>}, {transform_indices = @transform_16, window_bounds = array<i64: 1, 32, 32>}, {pipeline_mode = #tpu.pipeline_mode<synchronous>, transform_indices = @transform_17, window_bounds = array<i64: 1, 32>}, {pipeline_mode = #tpu.pipeline_mode<synchronous>, transform_indices = @transform_18, window_bounds = array<i64: 32, 8>}, {pipeline_mode = #tpu.pipeline_mode<synchronous>, transform_indices = @transform_19, window_bounds = array<i64: 1, 8>}, {pipeline_mode = #tpu.pipeline_mode<synchronous>, transform_indices = @transform_20, window_bounds = array<i64: 16, 8>}]} {
    %c0_i32 = arith.constant 0 : i32
    %0 = arith.cmpi eq, %arg0, %c0_i32 : i32
    %1 = arith.extui %0 : i1 to i32
    %c0_i32_0 = arith.constant 0 : i32
    %2 = arith.cmpi ne, %1, %c0_i32_0 : i32
    scf.if %2 {
      %c0_80 = arith.constant 0 : index
      %c0_81 = arith.constant 0 : index
      %174 = vector.load %arg1[%c0_80, %c0_81] : memref<16x32xf32, #tpu.memory_space<vmem>>, vector<16x32xf32>
      %c0_82 = arith.constant 0 : index
      %c0_83 = arith.constant 0 : index
      %175 = vector.load %arg3[%c0_82, %c0_83] : memref<1x32xf32, #tpu.memory_space<vmem>>, vector<1x32xf32>
      %c0_84 = arith.constant 0 : index
      %c0_85 = arith.constant 0 : index
      %176 = vector.load %arg4[%c0_84, %c0_85] : memref<1x32xf32, #tpu.memory_space<vmem>>, vector<1x32xf32>
      %cst_86 = arith.constant dense<0.000000e+00> : vector<16xf32>
      %177 = vector.multi_reduction <add>, %174, %cst_86 [1] : vector<16x32xf32> to vector<16xf32>
      %178 = vector.shape_cast %177 : vector<16xf32> to vector<16x1xf32>
      %cst_87 = arith.constant 3.200000e+01 : f32
      %179 = vector.broadcast %cst_87 : f32 to vector<16x1xf32>
      %180 = arith.divf %178, %179 : vector<16x1xf32>
      %181 = vector.broadcast %180 : vector<16x1xf32> to vector<16x32xf32>
      %182 = arith.subf %174, %181 : vector<16x32xf32>
      %183 = arith.mulf %182, %182 : vector<16x32xf32>
      %cst_88 = arith.constant dense<0.000000e+00> : vector<16xf32>
      %184 = vector.multi_reduction <add>, %183, %cst_88 [1] : vector<16x32xf32> to vector<16xf32>
      %185 = vector.shape_cast %184 : vector<16xf32> to vector<16x1xf32>
      %cst_89 = arith.constant 3.200000e+01 : f32
      %186 = vector.broadcast %cst_89 : f32 to vector<16x1xf32>
      %187 = arith.divf %185, %186 : vector<16x1xf32>
      %188 = vector.broadcast %180 : vector<16x1xf32> to vector<16x32xf32>
      %189 = arith.subf %174, %188 : vector<16x32xf32>
      %cst_90 = arith.constant 9.99999996E-13 : f32
      %190 = vector.broadcast %cst_90 : f32 to vector<16x1xf32>
      %191 = arith.addf %187, %190 : vector<16x1xf32>
      %192 = math.rsqrt %191 : vector<16x1xf32>
      %193 = vector.broadcast %192 : vector<16x1xf32> to vector<16x32xf32>
      %194 = arith.mulf %189, %193 : vector<16x32xf32>
      %195 = vector.broadcast %175 : vector<1x32xf32> to vector<16x32xf32>
      %196 = arith.mulf %194, %195 : vector<16x32xf32>
      %197 = vector.broadcast %176 : vector<1x32xf32> to vector<16x32xf32>
      %198 = arith.addf %196, %197 : vector<16x32xf32>
      %c0_91 = arith.constant 0 : index
      %c0_92 = arith.constant 0 : index
      %199 = vector.load %arg22[%c0_91, %c0_92] : memref<16x32xf32, #tpu.memory_space<vmem>>, vector<16x32xf32>
      tpu.vector_store %arg22[%c0_91, %c0_92], %198 {strides = array<i32>} : memref<16x32xf32, #tpu.memory_space<vmem>>, vector<16x32xf32>,
      %cst_93 = arith.constant 0.000000e+00 : f32
      %200 = vector.broadcast %cst_93 : f32 to vector<16x32xf32>
      %c0_94 = arith.constant 0 : index
      %c0_95 = arith.constant 0 : index
      %201 = vector.load %arg23[%c0_94, %c0_95] : memref<16x32xf32, #tpu.memory_space<vmem>>, vector<16x32xf32>
      tpu.vector_store %arg23[%c0_94, %c0_95], %200 {strides = array<i32>} : memref<16x32xf32, #tpu.memory_space<vmem>>, vector<16x32xf32>,
    } else {
    }
    %c0 = arith.constant 0 : index
    %c0_1 = arith.constant 0 : index
    %3 = vector.load %arg22[%c0, %c0_1] : memref<16x32xf32, #tpu.memory_space<vmem>>, vector<16x32xf32>
    %c0_2 = arith.constant 0 : index
    %c0_3 = arith.constant 0 : index
    %c0_4 = arith.constant 0 : index
    %4 = vector.load %arg5[%c0_2, %c0_3, %c0_4] : memref<1x32x96xbf16, #tpu.memory_space<vmem>>, vector<1x32x96xbf16>
    %5 = vector.shape_cast %4 : vector<1x32x96xbf16> to vector<32x96xbf16>
    %6 = arith.truncf %3 : vector<16x32xf32> to vector<16x32xbf16>
    %cst = arith.constant dense<0.000000e+00> : vector<16x96xf32>
    %7 = tpu.matmul %6, %5, %cst {dimension_numbers = #tpu.dot_dimension_numbers<[1], [0], [0], [1], [0, 0, 1, 1], [], []>} : vector<16x32xbf16>, vector<32x96xbf16>, vector<16x96xf32> -> vector<16x96xf32>
    %c0_5 = arith.constant 0 : index
    %c0_6 = arith.constant 0 : index
    %c0_7 = arith.constant 0 : index
    %8 = vector.load %arg6[%c0_5, %c0_6, %c0_7] : memref<1x1x96xf32, #tpu.memory_space<vmem>>, vector<1x1x96xf32>
    %9 = vector.shape_cast %8 : vector<1x1x96xf32> to vector<1x96xf32>
    %10 = vector.broadcast %9 : vector<1x96xf32> to vector<16x96xf32>
    %11 = arith.addf %7, %10 : vector<16x96xf32>
    %c0_8 = arith.constant 0 : index
    %c0_9 = arith.constant 0 : index
    %c0_10 = arith.constant 0 : index
    %12 = vector.load %arg2[%c0_8, %c0_9, %c0_10] : memref<2x1x8xf32, #tpu.memory_space<vmem>>, vector<2x1x8xf32>
    %c0_11 = arith.constant 0 : index
    %c0_12 = arith.constant 0 : index
    %c0_13 = arith.constant 0 : index
    %13 = vector.load %arg7[%c0_11, %c0_12, %c0_13] : memref<1x32x32xbf16, #tpu.memory_space<vmem>>, vector<1x32x32xbf16>
    %14 = vector.shape_cast %13 : vector<1x32x32xbf16> to vector<32x32xbf16>
    %15 = vector.extract_strided_slice %11 {offsets = [0, 0], sizes = [16, 16], strides = [1, 1]} : vector<16x96xf32> to vector<16x16xf32>
    %16 = vector.shape_cast %15 : vector<16x16xf32> to vector<2x8x16xf32>
    %17 = vector.extract_strided_slice %11 {offsets = [0, 32], sizes = [16, 16], strides = [1, 1]} : vector<16x96xf32> to vector<16x16xf32>
    %18 = vector.shape_cast %17 : vector<16x16xf32> to vector<2x8x16xf32>
    %19 = vector.extract_strided_slice %11 {offsets = [0, 64], sizes = [16, 16], strides = [1, 1]} : vector<16x96xf32> to vector<16x16xf32>
    %20 = vector.shape_cast %19 : vector<16x16xf32> to vector<2x8x16xf32>
    %21 = arith.truncf %16 : vector<2x8x16xf32> to vector<2x8x16xbf16>
    %22 = arith.truncf %18 : vector<2x8x16xf32> to vector<2x8x16xbf16>
    "tpu.trace_start"() <{level = 10 : i32, message = "bqd,bkd->bqk"}> : () -> ()
    %cst_14 = arith.constant dense<0.000000e+00> : vector<2x8x8xf32>
    %23 = tpu.matmul %21, %22, %cst_14 {dimension_numbers = #tpu.dot_dimension_numbers<[2], [2], [1], [1], [0, 0, 0, 1, 1, 1], [0], [0]>} : vector<2x8x16xbf16>, vector<2x8x16xbf16>, vector<2x8x8xf32> -> vector<2x8x8xf32>
    "tpu.trace_stop"() : () -> ()
    %cst_15 = arith.constant 2.500000e-01 : f32
    %24 = vector.broadcast %cst_15 : f32 to vector<2x8x8xf32>
    %25 = arith.mulf %23, %24 : vector<2x8x8xf32>
    %26 = vector.broadcast %12 : vector<2x1x8xf32> to vector<2x8x8xf32>
    %27 = arith.addf %25, %26 : vector<2x8x8xf32>
    %cst_16 = arith.constant dense<0xFF800000> : vector<2x8xf32>
    %28 = vector.multi_reduction <maximumf>, %27, %cst_16 [2] : vector<2x8x8xf32> to vector<2x8xf32>
    %29 = vector.shape_cast %28 : vector<2x8xf32> to vector<2x8x1xf32>
    %30 = vector.broadcast %29 : vector<2x8x1xf32> to vector<2x8x8xf32>
    %31 = arith.subf %27, %30 : vector<2x8x8xf32>
    %32 = math.exp %31 : vector<2x8x8xf32>
    %cst_17 = arith.constant dense<0.000000e+00> : vector<2x8xf32>
    %33 = vector.multi_reduction <add>, %32, %cst_17 [2] : vector<2x8x8xf32> to vector<2x8xf32>
    %34 = vector.shape_cast %33 : vector<2x8xf32> to vector<2x8x1xf32>
    %35 = tpu.reciprocal %34 {approx = true} : vector<2x8x1xf32> -> vector<2x8x1xf32>
    %36 = vector.broadcast %35 : vector<2x8x1xf32> to vector<2x8x8xf32>
    %37 = arith.mulf %32, %36 : vector<2x8x8xf32>
    %38 = arith.truncf %37 : vector<2x8x8xf32> to vector<2x8x8xbf16>
    %39 = arith.truncf %20 : vector<2x8x16xf32> to vector<2x8x16xbf16>
    "tpu.trace_start"() <{level = 10 : i32, message = "bqk,bkd->bqd"}> : () -> ()
    %cst_18 = arith.constant dense<0.000000e+00> : vector<2x8x16xf32>
    %40 = tpu.matmul %38, %39, %cst_18 {dimension_numbers = #tpu.dot_dimension_numbers<[2], [1], [1], [2], [0, 0, 0, 1, 1, 2], [0], [0]>} : vector<2x8x8xbf16>, vector<2x8x16xbf16>, vector<2x8x16xf32> -> vector<2x8x16xf32>
    "tpu.trace_stop"() : () -> ()
    %41 = vector.shape_cast %40 : vector<2x8x16xf32> to vector<16x16xf32>
    %42 = vector.extract_strided_slice %14 {offsets = [0, 0], sizes = [16, 32], strides = [1, 1]} : vector<32x32xbf16> to vector<16x32xbf16>
    %43 = arith.truncf %41 : vector<16x16xf32> to vector<16x16xbf16>
    %cst_19 = arith.constant dense<0.000000e+00> : vector<16x32xf32>
    %44 = tpu.matmul %43, %42, %cst_19 {dimension_numbers = #tpu.dot_dimension_numbers<[1], [0], [0], [1], [0, 0, 1, 1], [], []>} : vector<16x16xbf16>, vector<16x32xbf16>, vector<16x32xf32> -> vector<16x32xf32>
    %45 = vector.extract_strided_slice %11 {offsets = [0, 16], sizes = [16, 16], strides = [1, 1]} : vector<16x96xf32> to vector<16x16xf32>
    %46 = vector.shape_cast %45 : vector<16x16xf32> to vector<2x8x16xf32>
    %47 = vector.extract_strided_slice %11 {offsets = [0, 48], sizes = [16, 16], strides = [1, 1]} : vector<16x96xf32> to vector<16x16xf32>
    %48 = vector.shape_cast %47 : vector<16x16xf32> to vector<2x8x16xf32>
    %49 = vector.extract_strided_slice %11 {offsets = [0, 80], sizes = [16, 16], strides = [1, 1]} : vector<16x96xf32> to vector<16x16xf32>
    %50 = vector.shape_cast %49 : vector<16x16xf32> to vector<2x8x16xf32>
    %51 = arith.truncf %46 : vector<2x8x16xf32> to vector<2x8x16xbf16>
    %52 = arith.truncf %48 : vector<2x8x16xf32> to vector<2x8x16xbf16>
    "tpu.trace_start"() <{level = 10 : i32, message = "bqd,bkd->bqk"}> : () -> ()
    %cst_20 = arith.constant dense<0.000000e+00> : vector<2x8x8xf32>
    %53 = tpu.matmul %51, %52, %cst_20 {dimension_numbers = #tpu.dot_dimension_numbers<[2], [2], [1], [1], [0, 0, 0, 1, 1, 1], [0], [0]>} : vector<2x8x16xbf16>, vector<2x8x16xbf16>, vector<2x8x8xf32> -> vector<2x8x8xf32>
    "tpu.trace_stop"() : () -> ()
    %cst_21 = arith.constant 2.500000e-01 : f32
    %54 = vector.broadcast %cst_21 : f32 to vector<2x8x8xf32>
    %55 = arith.mulf %53, %54 : vector<2x8x8xf32>
    %56 = vector.broadcast %12 : vector<2x1x8xf32> to vector<2x8x8xf32>
    %57 = arith.addf %55, %56 : vector<2x8x8xf32>
    %cst_22 = arith.constant dense<0xFF800000> : vector<2x8xf32>
    %58 = vector.multi_reduction <maximumf>, %57, %cst_22 [2] : vector<2x8x8xf32> to vector<2x8xf32>
    %59 = vector.shape_cast %58 : vector<2x8xf32> to vector<2x8x1xf32>
    %60 = vector.broadcast %59 : vector<2x8x1xf32> to vector<2x8x8xf32>
    %61 = arith.subf %57, %60 : vector<2x8x8xf32>
    %62 = math.exp %61 : vector<2x8x8xf32>
    %cst_23 = arith.constant dense<0.000000e+00> : vector<2x8xf32>
    %63 = vector.multi_reduction <add>, %62, %cst_23 [2] : vector<2x8x8xf32> to vector<2x8xf32>
    %64 = vector.shape_cast %63 : vector<2x8xf32> to vector<2x8x1xf32>
    %65 = tpu.reciprocal %64 {approx = true} : vector<2x8x1xf32> -> vector<2x8x1xf32>
    %66 = vector.broadcast %65 : vector<2x8x1xf32> to vector<2x8x8xf32>
    %67 = arith.mulf %62, %66 : vector<2x8x8xf32>
    %68 = arith.truncf %67 : vector<2x8x8xf32> to vector<2x8x8xbf16>
    %69 = arith.truncf %50 : vector<2x8x16xf32> to vector<2x8x16xbf16>
    "tpu.trace_start"() <{level = 10 : i32, message = "bqk,bkd->bqd"}> : () -> ()
    %cst_24 = arith.constant dense<0.000000e+00> : vector<2x8x16xf32>
    %70 = tpu.matmul %68, %69, %cst_24 {dimension_numbers = #tpu.dot_dimension_numbers<[2], [1], [1], [2], [0, 0, 0, 1, 1, 2], [0], [0]>} : vector<2x8x8xbf16>, vector<2x8x16xbf16>, vector<2x8x16xf32> -> vector<2x8x16xf32>
    "tpu.trace_stop"() : () -> ()
    %71 = vector.shape_cast %70 : vector<2x8x16xf32> to vector<16x16xf32>
    %72 = vector.extract_strided_slice %14 {offsets = [16, 0], sizes = [16, 32], strides = [1, 1]} : vector<32x32xbf16> to vector<16x32xbf16>
    %73 = arith.truncf %71 : vector<16x16xf32> to vector<16x16xbf16>
    %cst_25 = arith.constant dense<0.000000e+00> : vector<16x32xf32>
    %74 = tpu.matmul %73, %72, %cst_25 {dimension_numbers = #tpu.dot_dimension_numbers<[1], [0], [0], [1], [0, 0, 1, 1], [], []>} : vector<16x16xbf16>, vector<16x32xbf16>, vector<16x32xf32> -> vector<16x32xf32>
    %75 = arith.addf %44, %74 : vector<16x32xf32>
    %c0_26 = arith.constant 0 : index
    %c0_27 = arith.constant 0 : index
    %c0_28 = arith.constant 0 : index
    %76 = vector.load %arg8[%c0_26, %c0_27, %c0_28] : memref<1x1x32xf32, #tpu.memory_space<vmem>>, vector<1x1x32xf32>
    %77 = vector.shape_cast %76 : vector<1x1x32xf32> to vector<1x32xf32>
    %78 = vector.broadcast %77 : vector<1x32xf32> to vector<16x32xf32>
    %79 = arith.addf %75, %78 : vector<16x32xf32>
    %80 = arith.addf %3, %79 : vector<16x32xf32>
    %c0_29 = arith.constant 0 : index
    %c0_30 = arith.constant 0 : index
    %c0_31 = arith.constant 0 : index
    %81 = vector.load %arg9[%c0_29, %c0_30, %c0_31] : memref<1x1x32xf32, #tpu.memory_space<vmem>>, vector<1x1x32xf32>
    %82 = vector.shape_cast %81 : vector<1x1x32xf32> to vector<1x32xf32>
    %c0_32 = arith.constant 0 : index
    %c0_33 = arith.constant 0 : index
    %c0_34 = arith.constant 0 : index
    %83 = vector.load %arg10[%c0_32, %c0_33, %c0_34] : memref<1x1x32xf32, #tpu.memory_space<vmem>>, vector<1x1x32xf32>
    %84 = vector.shape_cast %83 : vector<1x1x32xf32> to vector<1x32xf32>
    %cst_35 = arith.constant dense<0.000000e+00> : vector<16xf32>
    %85 = vector.multi_reduction <add>, %80, %cst_35 [1] : vector<16x32xf32> to vector<16xf32>
    %86 = vector.shape_cast %85 : vector<16xf32> to vector<16x1xf32>
    %cst_36 = arith.constant 3.200000e+01 : f32
    %87 = vector.broadcast %cst_36 : f32 to vector<16x1xf32>
    %88 = arith.divf %86, %87 : vector<16x1xf32>
    %89 = vector.broadcast %88 : vector<16x1xf32> to vector<16x32xf32>
    %90 = arith.subf %80, %89 : vector<16x32xf32>
    %91 = arith.mulf %90, %90 : vector<16x32xf32>
    %cst_37 = arith.constant dense<0.000000e+00> : vector<16xf32>
    %92 = vector.multi_reduction <add>, %91, %cst_37 [1] : vector<16x32xf32> to vector<16xf32>
    %93 = vector.shape_cast %92 : vector<16xf32> to vector<16x1xf32>
    %cst_38 = arith.constant 3.200000e+01 : f32
    %94 = vector.broadcast %cst_38 : f32 to vector<16x1xf32>
    %95 = arith.divf %93, %94 : vector<16x1xf32>
    %96 = vector.broadcast %88 : vector<16x1xf32> to vector<16x32xf32>
    %97 = arith.subf %80, %96 : vector<16x32xf32>
    %cst_39 = arith.constant 9.99999996E-13 : f32
    %98 = vector.broadcast %cst_39 : f32 to vector<16x1xf32>
    %99 = arith.addf %95, %98 : vector<16x1xf32>
    %100 = math.rsqrt %99 : vector<16x1xf32>
    %101 = vector.broadcast %100 : vector<16x1xf32> to vector<16x32xf32>
    %102 = arith.mulf %97, %101 : vector<16x32xf32>
    %103 = vector.broadcast %82 : vector<1x32xf32> to vector<16x32xf32>
    %104 = arith.mulf %102, %103 : vector<16x32xf32>
    %105 = vector.broadcast %84 : vector<1x32xf32> to vector<16x32xf32>
    %106 = arith.addf %104, %105 : vector<16x32xf32>
    %c0_40 = arith.constant 0 : index
    %c0_41 = arith.constant 0 : index
    %c0_42 = arith.constant 0 : index
    %107 = vector.load %arg11[%c0_40, %c0_41, %c0_42] : memref<1x32x64xbf16, #tpu.memory_space<vmem>>, vector<1x32x64xbf16>
    %108 = vector.shape_cast %107 : vector<1x32x64xbf16> to vector<32x64xbf16>
    %109 = arith.truncf %106 : vector<16x32xf32> to vector<16x32xbf16>
    %cst_43 = arith.constant dense<0.000000e+00> : vector<16x64xf32>
    %110 = tpu.matmul %109, %108, %cst_43 {dimension_numbers = #tpu.dot_dimension_numbers<[1], [0], [0], [1], [0, 0, 1, 1], [], []>} : vector<16x32xbf16>, vector<32x64xbf16>, vector<16x64xf32> -> vector<16x64xf32>
    %c0_44 = arith.constant 0 : index
    %c0_45 = arith.constant 0 : index
    %c0_46 = arith.constant 0 : index
    %111 = vector.load %arg12[%c0_44, %c0_45, %c0_46] : memref<1x1x64xf32, #tpu.memory_space<vmem>>, vector<1x1x64xf32>
    %112 = vector.shape_cast %111 : vector<1x1x64xf32> to vector<1x64xf32>
    %113 = vector.broadcast %112 : vector<1x64xf32> to vector<16x64xf32>
    %114 = arith.addf %110, %113 : vector<16x64xf32>
    %115 = arith.mulf %114, %114 : vector<16x64xf32>
    %116 = arith.mulf %114, %115 : vector<16x64xf32>
    %cst_47 = arith.constant 4.471500e-02 : f32
    %117 = vector.broadcast %cst_47 : f32 to vector<16x64xf32>
    %118 = arith.mulf %117, %116 : vector<16x64xf32>
    %119 = arith.addf %114, %118 : vector<16x64xf32>
    %cst_48 = arith.constant 0.797884583 : f32
    %120 = vector.broadcast %cst_48 : f32 to vector<16x64xf32>
    %121 = arith.mulf %120, %119 : vector<16x64xf32>
    %122 = math.tanh %121 : vector<16x64xf32>
    %cst_49 = arith.constant 1.000000e+00 : f32
    %123 = vector.broadcast %cst_49 : f32 to vector<16x64xf32>
    %124 = arith.addf %123, %122 : vector<16x64xf32>
    %cst_50 = arith.constant 5.000000e-01 : f32
    %125 = vector.broadcast %cst_50 : f32 to vector<16x64xf32>
    %126 = arith.mulf %125, %124 : vector<16x64xf32>
    %127 = arith.mulf %114, %126 : vector<16x64xf32>
    %c0_51 = arith.constant 0 : index
    %c0_52 = arith.constant 0 : index
    %c0_53 = arith.constant 0 : index
    %128 = vector.load %arg13[%c0_51, %c0_52, %c0_53] : memref<1x64x32xbf16, #tpu.memory_space<vmem>>, vector<1x64x32xbf16>
    %129 = vector.shape_cast %128 : vector<1x64x32xbf16> to vector<64x32xbf16>
    %130 = arith.truncf %127 : vector<16x64xf32> to vector<16x64xbf16>
    %cst_54 = arith.constant dense<0.000000e+00> : vector<16x32xf32>
    %131 = tpu.matmul %130, %129, %cst_54 {dimension_numbers = #tpu.dot_dimension_numbers<[1], [0], [0], [1], [0, 0, 1, 1], [], []>} : vector<16x64xbf16>, vector<64x32xbf16>, vector<16x32xf32> -> vector<16x32xf32>
    %c0_55 = arith.constant 0 : index
    %c0_56 = arith.constant 0 : index
    %c0_57 = arith.constant 0 : index
    %132 = vector.load %arg14[%c0_55, %c0_56, %c0_57] : memref<1x1x32xf32, #tpu.memory_space<vmem>>, vector<1x1x32xf32>
    %133 = vector.shape_cast %132 : vector<1x1x32xf32> to vector<1x32xf32>
    %134 = vector.broadcast %133 : vector<1x32xf32> to vector<16x32xf32>
    %135 = arith.addf %131, %134 : vector<16x32xf32>
    %136 = arith.addf %106, %135 : vector<16x32xf32>
    %c0_58 = arith.constant 0 : index
    %c0_59 = arith.constant 0 : index
    %c0_60 = arith.constant 0 : index
    %137 = vector.load %arg15[%c0_58, %c0_59, %c0_60] : memref<1x1x32xf32, #tpu.memory_space<vmem>>, vector<1x1x32xf32>
    %138 = vector.shape_cast %137 : vector<1x1x32xf32> to vector<1x32xf32>
    %c0_61 = arith.constant 0 : index
    %c0_62 = arith.constant 0 : index
    %c0_63 = arith.constant 0 : index
    %139 = vector.load %arg16[%c0_61, %c0_62, %c0_63] : memref<1x1x32xf32, #tpu.memory_space<vmem>>, vector<1x1x32xf32>
    %140 = vector.shape_cast %139 : vector<1x1x32xf32> to vector<1x32xf32>
    %cst_64 = arith.constant dense<0.000000e+00> : vector<16xf32>
    %141 = vector.multi_reduction <add>, %136, %cst_64 [1] : vector<16x32xf32> to vector<16xf32>
    %142 = vector.shape_cast %141 : vector<16xf32> to vector<16x1xf32>
    %cst_65 = arith.constant 3.200000e+01 : f32
    %143 = vector.broadcast %cst_65 : f32 to vector<16x1xf32>
    %144 = arith.divf %142, %143 : vector<16x1xf32>
    %145 = vector.broadcast %144 : vector<16x1xf32> to vector<16x32xf32>
    %146 = arith.subf %136, %145 : vector<16x32xf32>
    %147 = arith.mulf %146, %146 : vector<16x32xf32>
    %cst_66 = arith.constant dense<0.000000e+00> : vector<16xf32>
    %148 = vector.multi_reduction <add>, %147, %cst_66 [1] : vector<16x32xf32> to vector<16xf32>
    %149 = vector.shape_cast %148 : vector<16xf32> to vector<16x1xf32>
    %cst_67 = arith.constant 3.200000e+01 : f32
    %150 = vector.broadcast %cst_67 : f32 to vector<16x1xf32>
    %151 = arith.divf %149, %150 : vector<16x1xf32>
    %152 = vector.broadcast %144 : vector<16x1xf32> to vector<16x32xf32>
    %153 = arith.subf %136, %152 : vector<16x32xf32>
    %cst_68 = arith.constant 9.99999996E-13 : f32
    %154 = vector.broadcast %cst_68 : f32 to vector<16x1xf32>
    %155 = arith.addf %151, %154 : vector<16x1xf32>
    %156 = math.rsqrt %155 : vector<16x1xf32>
    %157 = vector.broadcast %156 : vector<16x1xf32> to vector<16x32xf32>
    %158 = arith.mulf %153, %157 : vector<16x32xf32>
    %159 = vector.broadcast %138 : vector<1x32xf32> to vector<16x32xf32>
    %160 = arith.mulf %158, %159 : vector<16x32xf32>
    %161 = vector.broadcast %140 : vector<1x32xf32> to vector<16x32xf32>
    %162 = arith.addf %160, %161 : vector<16x32xf32>
    %c0_69 = arith.constant 0 : index
    %c0_70 = arith.constant 0 : index
    %163 = vector.load %arg22[%c0_69, %c0_70] : memref<16x32xf32, #tpu.memory_space<vmem>>, vector<16x32xf32>
    tpu.vector_store %arg22[%c0_69, %c0_70], %162 {strides = array<i32>} : memref<16x32xf32, #tpu.memory_space<vmem>>, vector<16x32xf32>,
    %c0_71 = arith.constant 0 : index
    %c0_72 = arith.constant 0 : index
    %164 = vector.load %arg23[%c0_71, %c0_72] : memref<16x32xf32, #tpu.memory_space<vmem>>, vector<16x32xf32>
    %c0_73 = arith.constant 0 : index
    %c0_74 = arith.constant 0 : index
    %c0_75 = arith.constant 0 : index
    %165 = vector.load %arg17[%c0_73, %c0_74, %c0_75] : memref<1x32x32xbf16, #tpu.memory_space<vmem>>, vector<1x32x32xbf16>
    %166 = vector.shape_cast %165 : vector<1x32x32xbf16> to vector<32x32xbf16>
    %167 = arith.truncf %162 : vector<16x32xf32> to vector<16x32xbf16>
    %cst_76 = arith.constant dense<0.000000e+00> : vector<16x32xf32>
    %168 = tpu.matmul %167, %166, %cst_76 {dimension_numbers = #tpu.dot_dimension_numbers<[1], [0], [0], [1], [0, 0, 1, 1], [], []>} : vector<16x32xbf16>, vector<32x32xbf16>, vector<16x32xf32> -> vector<16x32xf32>
    %169 = arith.addf %164, %168 : vector<16x32xf32>
    %c0_77 = arith.constant 0 : index
    %c0_78 = arith.constant 0 : index
    %170 = vector.load %arg23[%c0_77, %c0_78] : memref<16x32xf32, #tpu.memory_space<vmem>>, vector<16x32xf32>
    tpu.vector_store %arg23[%c0_77, %c0_78], %169 {strides = array<i32>} : memref<16x32xf32, #tpu.memory_space<vmem>>, vector<16x32xf32>,
    %c1_i32 = arith.constant 1 : i32
    %171 = arith.cmpi eq, %arg0, %c1_i32 : i32
    %172 = arith.extui %171 : i1 to i32
    %c0_i32_79 = arith.constant 0 : i32
    %173 = arith.cmpi ne, %172, %c0_i32_79 : i32
    scf.if %173 {
      %c0_80 = arith.constant 0 : index
      %c0_81 = arith.constant 0 : index
      %174 = vector.load %arg23[%c0_80, %c0_81] : memref<16x32xf32, #tpu.memory_space<vmem>>, vector<16x32xf32>
      %c0_82 = arith.constant 0 : index
      %c0_83 = arith.constant 0 : index
      %175 = vector.load %arg18[%c0_82, %c0_83] : memref<1x32xf32, #tpu.memory_space<vmem>>, vector<1x32xf32>
      %176 = vector.broadcast %175 : vector<1x32xf32> to vector<16x32xf32>
      %177 = arith.addf %174, %176 : vector<16x32xf32>
      %c0_84 = arith.constant 0 : index
      %c0_85 = arith.constant 0 : index
      %178 = vector.load %arg19[%c0_84, %c0_85] : memref<32x8xbf16, #tpu.memory_space<vmem>>, vector<32x8xbf16>
      %179 = arith.truncf %177 : vector<16x32xf32> to vector<16x32xbf16>
      %cst_86 = arith.constant dense<0.000000e+00> : vector<16x8xf32>
      %180 = tpu.matmul %179, %178, %cst_86 {dimension_numbers = #tpu.dot_dimension_numbers<[1], [0], [0], [1], [0, 0, 1, 1], [], []>} : vector<16x32xbf16>, vector<32x8xbf16>, vector<16x8xf32> -> vector<16x8xf32>
      %c0_87 = arith.constant 0 : index
      %c0_88 = arith.constant 0 : index
      %181 = vector.load %arg20[%c0_87, %c0_88] : memref<1x8xf32, #tpu.memory_space<vmem>>, vector<1x8xf32>
      %182 = vector.broadcast %181 : vector<1x8xf32> to vector<16x8xf32>
      %183 = arith.addf %180, %182 : vector<16x8xf32>
      %c0_89 = arith.constant 0 : index
      %c0_90 = arith.constant 0 : index
      %184 = vector.load %arg21[%c0_89, %c0_90] : memref<16x8xf32, #tpu.memory_space<vmem>>, vector<16x8xf32>
      tpu.vector_store %arg21[%c0_89, %c0_90], %183 {strides = array<i32>} : memref<16x8xf32, #tpu.memory_space<vmem>>, vector<16x8xf32>,
    } else {
    }
    return
  }
  func.func @transform_0(%arg0: i32) -> (i32, i32) {
    %c0_i32 = arith.constant 0 : i32
    %c0_i32_0 = arith.constant 0 : i32
    %c0_i32_1 = arith.constant 0 : i32
    return %c0_i32, %c0_i32_0 : i32, i32
  }
  func.func @transform_1(%arg0: i32) -> (i32, i32, i32) {
    %c0_i32 = arith.constant 0 : i32
    %c0_i32_0 = arith.constant 0 : i32
    %c0_i32_1 = arith.constant 0 : i32
    %c0_i32_2 = arith.constant 0 : i32
    return %c0_i32, %c0_i32_0, %c0_i32_1 : i32, i32, i32
  }
  func.func @transform_2(%arg0: i32) -> (i32, i32) {
    %c0_i32 = arith.constant 0 : i32
    %c0_i32_0 = arith.constant 0 : i32
    %c0_i32_1 = arith.constant 0 : i32
    return %c0_i32, %c0_i32_0 : i32, i32
  }
  func.func @transform_3(%arg0: i32) -> (i32, i32) {
    %c0_i32 = arith.constant 0 : i32
    %c0_i32_0 = arith.constant 0 : i32
    %c0_i32_1 = arith.constant 0 : i32
    return %c0_i32, %c0_i32_0 : i32, i32
  }
  func.func @transform_4(%arg0: i32) -> (i32, i32, i32) {
    %c0_i32 = arith.constant 0 : i32
    %c0_i32_0 = arith.constant 0 : i32
    %c0_i32_1 = arith.constant 0 : i32
    return %arg0, %c0_i32, %c0_i32_0 : i32, i32, i32
  }
  func.func @transform_5(%arg0: i32) -> (i32, i32, i32) {
    %c0_i32 = arith.constant 0 : i32
    %c0_i32_0 = arith.constant 0 : i32
    %c0_i32_1 = arith.constant 0 : i32
    return %arg0, %c0_i32, %c0_i32_0 : i32, i32, i32
  }
  func.func @transform_6(%arg0: i32) -> (i32, i32, i32) {
    %c0_i32 = arith.constant 0 : i32
    %c0_i32_0 = arith.constant 0 : i32
    %c0_i32_1 = arith.constant 0 : i32
    return %arg0, %c0_i32, %c0_i32_0 : i32, i32, i32
  }
  func.func @transform_7(%arg0: i32) -> (i32, i32, i32) {
    %c0_i32 = arith.constant 0 : i32
    %c0_i32_0 = arith.constant 0 : i32
    %c0_i32_1 = arith.constant 0 : i32
    return %arg0, %c0_i32, %c0_i32_0 : i32, i32, i32
  }
  func.func @transform_8(%arg0: i32) -> (i32, i32, i32) {
    %c0_i32 = arith.constant 0 : i32
    %c0_i32_0 = arith.constant 0 : i32
    %c0_i32_1 = arith.constant 0 : i32
    return %arg0, %c0_i32, %c0_i32_0 : i32, i32, i32
  }
  func.func @transform_9(%arg0: i32) -> (i32, i32, i32) {
    %c0_i32 = arith.constant 0 : i32
    %c0_i32_0 = arith.constant 0 : i32
    %c0_i32_1 = arith.constant 0 : i32
    return %arg0, %c0_i32, %c0_i32_0 : i32, i32, i32
  }
  func.func @transform_10(%arg0: i32) -> (i32, i32, i32) {
    %c0_i32 = arith.constant 0 : i32
    %c0_i32_0 = arith.constant 0 : i32
    %c0_i32_1 = arith.constant 0 : i32
    return %arg0, %c0_i32, %c0_i32_0 : i32, i32, i32
  }
  func.func @transform_11(%arg0: i32) -> (i32, i32, i32) {
    %c0_i32 = arith.constant 0 : i32
    %c0_i32_0 = arith.constant 0 : i32
    %c0_i32_1 = arith.constant 0 : i32
    return %arg0, %c0_i32, %c0_i32_0 : i32, i32, i32
  }
  func.func @transform_12(%arg0: i32) -> (i32, i32, i32) {
    %c0_i32 = arith.constant 0 : i32
    %c0_i32_0 = arith.constant 0 : i32
    %c0_i32_1 = arith.constant 0 : i32
    return %arg0, %c0_i32, %c0_i32_0 : i32, i32, i32
  }
  func.func @transform_13(%arg0: i32) -> (i32, i32, i32) {
    %c0_i32 = arith.constant 0 : i32
    %c0_i32_0 = arith.constant 0 : i32
    %c0_i32_1 = arith.constant 0 : i32
    return %arg0, %c0_i32, %c0_i32_0 : i32, i32, i32
  }
  func.func @transform_14(%arg0: i32) -> (i32, i32, i32) {
    %c0_i32 = arith.constant 0 : i32
    %c0_i32_0 = arith.constant 0 : i32
    %c0_i32_1 = arith.constant 0 : i32
    return %arg0, %c0_i32, %c0_i32_0 : i32, i32, i32
  }
  func.func @transform_15(%arg0: i32) -> (i32, i32, i32) {
    %c0_i32 = arith.constant 0 : i32
    %c0_i32_0 = arith.constant 0 : i32
    %c0_i32_1 = arith.constant 0 : i32
    return %arg0, %c0_i32, %c0_i32_0 : i32, i32, i32
  }
  func.func @transform_16(%arg0: i32) -> (i32, i32, i32) {
    %c0_i32 = arith.constant 0 : i32
    %c0_i32_0 = arith.constant 0 : i32
    %c0_i32_1 = arith.constant 0 : i32
    return %arg0, %c0_i32, %c0_i32_0 : i32, i32, i32
  }
  func.func @transform_17(%arg0: i32) -> (i32, i32) {
    %c0_i32 = arith.constant 0 : i32
    %c0_i32_0 = arith.constant 0 : i32
    %c0_i32_1 = arith.constant 0 : i32
    return %c0_i32, %c0_i32_0 : i32, i32
  }
  func.func @transform_18(%arg0: i32) -> (i32, i32) {
    %c0_i32 = arith.constant 0 : i32
    %c0_i32_0 = arith.constant 0 : i32
    %c0_i32_1 = arith.constant 0 : i32
    return %c0_i32, %c0_i32_0 : i32, i32
  }
  func.func @transform_19(%arg0: i32) -> (i32, i32) {
    %c0_i32 = arith.constant 0 : i32
    %c0_i32_0 = arith.constant 0 : i32
    %c0_i32_1 = arith.constant 0 : i32
    return %c0_i32, %c0_i32_0 : i32, i32
  }
  func.func @transform_20(%arg0: i32) -> (i32, i32) {
    %c0_i32 = arith.constant 0 : i32
    %c0_i32_0 = arith.constant 0 : i32
    %c0_i32_1 = arith.constant 0 : i32
    return %c0_i32, %c0_i32_0 : i32, i32
  }
}

module attributes {stable_mosaic.version = 11 : i64} {
  func.func @_viterbi_kernel(%arg0: memref<8x2x8xf32, #tpu.memory_space<vmem>>, %arg1: memref<8x2x1xf32, #tpu.memory_space<vmem>>, %arg2: memref<1x8xf32, #tpu.memory_space<vmem>>, %arg3: memref<1x8xf32, #tpu.memory_space<vmem>>, %arg4: memref<8x8xf32, #tpu.memory_space<vmem>>, %arg5: memref<2x8xi32, #tpu.memory_space<vmem>>) attributes {dimension_semantics = [], scalar_prefetch = 0 : i64, scratch_operands = 0 : i64, tpu.core_type = #tpu.core_type<tc>} {
    %c0 = arith.constant 0 : index
    %c0_0 = arith.constant 0 : index
    %0 = vector.load %arg4[%c0, %c0_0] : memref<8x8xf32, #tpu.memory_space<vmem>>, vector<8x8xf32>
    %c0_1 = arith.constant 0 : index
    %c0_2 = arith.constant 0 : index
    %1 = vector.load %arg2[%c0_1, %c0_2] : memref<1x8xf32, #tpu.memory_space<vmem>>, vector<1x8xf32>
    %c0_3 = arith.constant 0 : index
    %c0_4 = arith.constant 0 : index
    %c0_5 = arith.constant 0 : index
    %2 = vector.load %arg0[%c0_3, %c0_4, %c0_5] : memref<8x2x8xf32, #tpu.memory_space<vmem>>, vector<1x2x8xf32>
    %3 = vector.shape_cast %2 : vector<1x2x8xf32> to vector<2x8xf32>
    %4 = vector.broadcast %1 : vector<1x8xf32> to vector<2x8xf32>
    %5 = arith.addf %4, %3 : vector<2x8xf32>
    %6 = vector.shape_cast %5 : vector<2x8xf32> to vector<2x1x8xf32>
    %7 = vector.shape_cast %0 : vector<8x8xf32> to vector<1x8x8xf32>
    %8 = vector.broadcast %6 : vector<2x1x8xf32> to vector<2x8x8xf32>
    %9 = vector.broadcast %7 : vector<1x8x8xf32> to vector<2x8x8xf32>
    %10 = arith.addf %8, %9 : vector<2x8x8xf32>
    %c1 = arith.constant 1 : index
    %c0_6 = arith.constant 0 : index
    %c0_7 = arith.constant 0 : index
    %11 = vector.load %arg0[%c1, %c0_6, %c0_7] : memref<8x2x8xf32, #tpu.memory_space<vmem>>, vector<1x2x8xf32>
    %12 = vector.shape_cast %11 : vector<1x2x8xf32> to vector<2x8xf32>
    %13 = vector.shape_cast %12 : vector<2x8xf32> to vector<2x8x1xf32>
    %14 = vector.broadcast %13 : vector<2x8x1xf32> to vector<2x8x8xf32>
    %15 = arith.addf %10, %14 : vector<2x8x8xf32>
    %cst = arith.constant dense<0xFF800000> : vector<2x8xf32>
    %16 = vector.multi_reduction <maximumf>, %15, %cst [2] : vector<2x8x8xf32> to vector<2x8xf32>
    %17 = tpu.reduce_index %15 {axis = 2 : i32, kind = #tpu.reduction_kind<arg_max>} : vector<2x8x8xf32> -> vector<2x8xi32>
    %c1_8 = arith.constant 1 : index
    %c0_9 = arith.constant 0 : index
    %c0_10 = arith.constant 0 : index
    %18 = vector.load %arg1[%c1_8, %c0_9, %c0_10] : memref<8x2x1xf32, #tpu.memory_space<vmem>>, vector<1x2x1xf32>
    %19 = vector.shape_cast %18 : vector<1x2x1xf32> to vector<2x1xf32>
    %cst_11 = arith.constant 5.000000e-01 : f32
    %20 = vector.broadcast %cst_11 : f32 to vector<2x1xf32>
    %21 = arith.cmpf ogt, %19, %20 : vector<2x1xf32>
    %22 = vector.shape_cast %21 : vector<2x1xi1> to vector<2x1xi1>
    %23 = vector.broadcast %22 : vector<2x1xi1> to vector<2x8xi1>
    %24 = arith.select %23, %16, %5 : vector<2x8xi1>, vector<2x8xf32>
    %25 = vector.shape_cast %24 : vector<2x8xf32> to vector<2x1x8xf32>
    %26 = vector.shape_cast %0 : vector<8x8xf32> to vector<1x8x8xf32>
    %27 = vector.broadcast %25 : vector<2x1x8xf32> to vector<2x8x8xf32>
    %28 = vector.broadcast %26 : vector<1x8x8xf32> to vector<2x8x8xf32>
    %29 = arith.addf %27, %28 : vector<2x8x8xf32>
    %c2 = arith.constant 2 : index
    %c0_12 = arith.constant 0 : index
    %c0_13 = arith.constant 0 : index
    %30 = vector.load %arg0[%c2, %c0_12, %c0_13] : memref<8x2x8xf32, #tpu.memory_space<vmem>>, vector<1x2x8xf32>
    %31 = vector.shape_cast %30 : vector<1x2x8xf32> to vector<2x8xf32>
    %32 = vector.shape_cast %31 : vector<2x8xf32> to vector<2x8x1xf32>
    %33 = vector.broadcast %32 : vector<2x8x1xf32> to vector<2x8x8xf32>
    %34 = arith.addf %29, %33 : vector<2x8x8xf32>
    %cst_14 = arith.constant dense<0xFF800000> : vector<2x8xf32>
    %35 = vector.multi_reduction <maximumf>, %34, %cst_14 [2] : vector<2x8x8xf32> to vector<2x8xf32>
    %36 = tpu.reduce_index %34 {axis = 2 : i32, kind = #tpu.reduction_kind<arg_max>} : vector<2x8x8xf32> -> vector<2x8xi32>
    %c2_15 = arith.constant 2 : index
    %c0_16 = arith.constant 0 : index
    %c0_17 = arith.constant 0 : index
    %37 = vector.load %arg1[%c2_15, %c0_16, %c0_17] : memref<8x2x1xf32, #tpu.memory_space<vmem>>, vector<1x2x1xf32>
    %38 = vector.shape_cast %37 : vector<1x2x1xf32> to vector<2x1xf32>
    %cst_18 = arith.constant 5.000000e-01 : f32
    %39 = vector.broadcast %cst_18 : f32 to vector<2x1xf32>
    %40 = arith.cmpf ogt, %38, %39 : vector<2x1xf32>
    %41 = vector.shape_cast %40 : vector<2x1xi1> to vector<2x1xi1>
    %42 = vector.broadcast %41 : vector<2x1xi1> to vector<2x8xi1>
    %43 = arith.select %42, %35, %24 : vector<2x8xi1>, vector<2x8xf32>
    %44 = vector.shape_cast %43 : vector<2x8xf32> to vector<2x1x8xf32>
    %45 = vector.shape_cast %0 : vector<8x8xf32> to vector<1x8x8xf32>
    %46 = vector.broadcast %44 : vector<2x1x8xf32> to vector<2x8x8xf32>
    %47 = vector.broadcast %45 : vector<1x8x8xf32> to vector<2x8x8xf32>
    %48 = arith.addf %46, %47 : vector<2x8x8xf32>
    %c3 = arith.constant 3 : index
    %c0_19 = arith.constant 0 : index
    %c0_20 = arith.constant 0 : index
    %49 = vector.load %arg0[%c3, %c0_19, %c0_20] : memref<8x2x8xf32, #tpu.memory_space<vmem>>, vector<1x2x8xf32>
    %50 = vector.shape_cast %49 : vector<1x2x8xf32> to vector<2x8xf32>
    %51 = vector.shape_cast %50 : vector<2x8xf32> to vector<2x8x1xf32>
    %52 = vector.broadcast %51 : vector<2x8x1xf32> to vector<2x8x8xf32>
    %53 = arith.addf %48, %52 : vector<2x8x8xf32>
    %cst_21 = arith.constant dense<0xFF800000> : vector<2x8xf32>
    %54 = vector.multi_reduction <maximumf>, %53, %cst_21 [2] : vector<2x8x8xf32> to vector<2x8xf32>
    %55 = tpu.reduce_index %53 {axis = 2 : i32, kind = #tpu.reduction_kind<arg_max>} : vector<2x8x8xf32> -> vector<2x8xi32>
    %c3_22 = arith.constant 3 : index
    %c0_23 = arith.constant 0 : index
    %c0_24 = arith.constant 0 : index
    %56 = vector.load %arg1[%c3_22, %c0_23, %c0_24] : memref<8x2x1xf32, #tpu.memory_space<vmem>>, vector<1x2x1xf32>
    %57 = vector.shape_cast %56 : vector<1x2x1xf32> to vector<2x1xf32>
    %cst_25 = arith.constant 5.000000e-01 : f32
    %58 = vector.broadcast %cst_25 : f32 to vector<2x1xf32>
    %59 = arith.cmpf ogt, %57, %58 : vector<2x1xf32>
    %60 = vector.shape_cast %59 : vector<2x1xi1> to vector<2x1xi1>
    %61 = vector.broadcast %60 : vector<2x1xi1> to vector<2x8xi1>
    %62 = arith.select %61, %54, %43 : vector<2x8xi1>, vector<2x8xf32>
    %63 = vector.shape_cast %62 : vector<2x8xf32> to vector<2x1x8xf32>
    %64 = vector.shape_cast %0 : vector<8x8xf32> to vector<1x8x8xf32>
    %65 = vector.broadcast %63 : vector<2x1x8xf32> to vector<2x8x8xf32>
    %66 = vector.broadcast %64 : vector<1x8x8xf32> to vector<2x8x8xf32>
    %67 = arith.addf %65, %66 : vector<2x8x8xf32>
    %c4 = arith.constant 4 : index
    %c0_26 = arith.constant 0 : index
    %c0_27 = arith.constant 0 : index
    %68 = vector.load %arg0[%c4, %c0_26, %c0_27] : memref<8x2x8xf32, #tpu.memory_space<vmem>>, vector<1x2x8xf32>
    %69 = vector.shape_cast %68 : vector<1x2x8xf32> to vector<2x8xf32>
    %70 = vector.shape_cast %69 : vector<2x8xf32> to vector<2x8x1xf32>
    %71 = vector.broadcast %70 : vector<2x8x1xf32> to vector<2x8x8xf32>
    %72 = arith.addf %67, %71 : vector<2x8x8xf32>
    %cst_28 = arith.constant dense<0xFF800000> : vector<2x8xf32>
    %73 = vector.multi_reduction <maximumf>, %72, %cst_28 [2] : vector<2x8x8xf32> to vector<2x8xf32>
    %74 = tpu.reduce_index %72 {axis = 2 : i32, kind = #tpu.reduction_kind<arg_max>} : vector<2x8x8xf32> -> vector<2x8xi32>
    %c4_29 = arith.constant 4 : index
    %c0_30 = arith.constant 0 : index
    %c0_31 = arith.constant 0 : index
    %75 = vector.load %arg1[%c4_29, %c0_30, %c0_31] : memref<8x2x1xf32, #tpu.memory_space<vmem>>, vector<1x2x1xf32>
    %76 = vector.shape_cast %75 : vector<1x2x1xf32> to vector<2x1xf32>
    %cst_32 = arith.constant 5.000000e-01 : f32
    %77 = vector.broadcast %cst_32 : f32 to vector<2x1xf32>
    %78 = arith.cmpf ogt, %76, %77 : vector<2x1xf32>
    %79 = vector.shape_cast %78 : vector<2x1xi1> to vector<2x1xi1>
    %80 = vector.broadcast %79 : vector<2x1xi1> to vector<2x8xi1>
    %81 = arith.select %80, %73, %62 : vector<2x8xi1>, vector<2x8xf32>
    %82 = vector.shape_cast %81 : vector<2x8xf32> to vector<2x1x8xf32>
    %83 = vector.shape_cast %0 : vector<8x8xf32> to vector<1x8x8xf32>
    %84 = vector.broadcast %82 : vector<2x1x8xf32> to vector<2x8x8xf32>
    %85 = vector.broadcast %83 : vector<1x8x8xf32> to vector<2x8x8xf32>
    %86 = arith.addf %84, %85 : vector<2x8x8xf32>
    %c5 = arith.constant 5 : index
    %c0_33 = arith.constant 0 : index
    %c0_34 = arith.constant 0 : index
    %87 = vector.load %arg0[%c5, %c0_33, %c0_34] : memref<8x2x8xf32, #tpu.memory_space<vmem>>, vector<1x2x8xf32>
    %88 = vector.shape_cast %87 : vector<1x2x8xf32> to vector<2x8xf32>
    %89 = vector.shape_cast %88 : vector<2x8xf32> to vector<2x8x1xf32>
    %90 = vector.broadcast %89 : vector<2x8x1xf32> to vector<2x8x8xf32>
    %91 = arith.addf %86, %90 : vector<2x8x8xf32>
    %cst_35 = arith.constant dense<0xFF800000> : vector<2x8xf32>
    %92 = vector.multi_reduction <maximumf>, %91, %cst_35 [2] : vector<2x8x8xf32> to vector<2x8xf32>
    %93 = tpu.reduce_index %91 {axis = 2 : i32, kind = #tpu.reduction_kind<arg_max>} : vector<2x8x8xf32> -> vector<2x8xi32>
    %c5_36 = arith.constant 5 : index
    %c0_37 = arith.constant 0 : index
    %c0_38 = arith.constant 0 : index
    %94 = vector.load %arg1[%c5_36, %c0_37, %c0_38] : memref<8x2x1xf32, #tpu.memory_space<vmem>>, vector<1x2x1xf32>
    %95 = vector.shape_cast %94 : vector<1x2x1xf32> to vector<2x1xf32>
    %cst_39 = arith.constant 5.000000e-01 : f32
    %96 = vector.broadcast %cst_39 : f32 to vector<2x1xf32>
    %97 = arith.cmpf ogt, %95, %96 : vector<2x1xf32>
    %98 = vector.shape_cast %97 : vector<2x1xi1> to vector<2x1xi1>
    %99 = vector.broadcast %98 : vector<2x1xi1> to vector<2x8xi1>
    %100 = arith.select %99, %92, %81 : vector<2x8xi1>, vector<2x8xf32>
    %101 = vector.shape_cast %100 : vector<2x8xf32> to vector<2x1x8xf32>
    %102 = vector.shape_cast %0 : vector<8x8xf32> to vector<1x8x8xf32>
    %103 = vector.broadcast %101 : vector<2x1x8xf32> to vector<2x8x8xf32>
    %104 = vector.broadcast %102 : vector<1x8x8xf32> to vector<2x8x8xf32>
    %105 = arith.addf %103, %104 : vector<2x8x8xf32>
    %c6 = arith.constant 6 : index
    %c0_40 = arith.constant 0 : index
    %c0_41 = arith.constant 0 : index
    %106 = vector.load %arg0[%c6, %c0_40, %c0_41] : memref<8x2x8xf32, #tpu.memory_space<vmem>>, vector<1x2x8xf32>
    %107 = vector.shape_cast %106 : vector<1x2x8xf32> to vector<2x8xf32>
    %108 = vector.shape_cast %107 : vector<2x8xf32> to vector<2x8x1xf32>
    %109 = vector.broadcast %108 : vector<2x8x1xf32> to vector<2x8x8xf32>
    %110 = arith.addf %105, %109 : vector<2x8x8xf32>
    %cst_42 = arith.constant dense<0xFF800000> : vector<2x8xf32>
    %111 = vector.multi_reduction <maximumf>, %110, %cst_42 [2] : vector<2x8x8xf32> to vector<2x8xf32>
    %112 = tpu.reduce_index %110 {axis = 2 : i32, kind = #tpu.reduction_kind<arg_max>} : vector<2x8x8xf32> -> vector<2x8xi32>
    %c6_43 = arith.constant 6 : index
    %c0_44 = arith.constant 0 : index
    %c0_45 = arith.constant 0 : index
    %113 = vector.load %arg1[%c6_43, %c0_44, %c0_45] : memref<8x2x1xf32, #tpu.memory_space<vmem>>, vector<1x2x1xf32>
    %114 = vector.shape_cast %113 : vector<1x2x1xf32> to vector<2x1xf32>
    %cst_46 = arith.constant 5.000000e-01 : f32
    %115 = vector.broadcast %cst_46 : f32 to vector<2x1xf32>
    %116 = arith.cmpf ogt, %114, %115 : vector<2x1xf32>
    %117 = vector.shape_cast %116 : vector<2x1xi1> to vector<2x1xi1>
    %118 = vector.broadcast %117 : vector<2x1xi1> to vector<2x8xi1>
    %119 = arith.select %118, %111, %100 : vector<2x8xi1>, vector<2x8xf32>
    %120 = vector.shape_cast %119 : vector<2x8xf32> to vector<2x1x8xf32>
    %121 = vector.shape_cast %0 : vector<8x8xf32> to vector<1x8x8xf32>
    %122 = vector.broadcast %120 : vector<2x1x8xf32> to vector<2x8x8xf32>
    %123 = vector.broadcast %121 : vector<1x8x8xf32> to vector<2x8x8xf32>
    %124 = arith.addf %122, %123 : vector<2x8x8xf32>
    %c7 = arith.constant 7 : index
    %c0_47 = arith.constant 0 : index
    %c0_48 = arith.constant 0 : index
    %125 = vector.load %arg0[%c7, %c0_47, %c0_48] : memref<8x2x8xf32, #tpu.memory_space<vmem>>, vector<1x2x8xf32>
    %126 = vector.shape_cast %125 : vector<1x2x8xf32> to vector<2x8xf32>
    %127 = vector.shape_cast %126 : vector<2x8xf32> to vector<2x8x1xf32>
    %128 = vector.broadcast %127 : vector<2x8x1xf32> to vector<2x8x8xf32>
    %129 = arith.addf %124, %128 : vector<2x8x8xf32>
    %cst_49 = arith.constant dense<0xFF800000> : vector<2x8xf32>
    %130 = vector.multi_reduction <maximumf>, %129, %cst_49 [2] : vector<2x8x8xf32> to vector<2x8xf32>
    %131 = tpu.reduce_index %129 {axis = 2 : i32, kind = #tpu.reduction_kind<arg_max>} : vector<2x8x8xf32> -> vector<2x8xi32>
    %c7_50 = arith.constant 7 : index
    %c0_51 = arith.constant 0 : index
    %c0_52 = arith.constant 0 : index
    %132 = vector.load %arg1[%c7_50, %c0_51, %c0_52] : memref<8x2x1xf32, #tpu.memory_space<vmem>>, vector<1x2x1xf32>
    %133 = vector.shape_cast %132 : vector<1x2x1xf32> to vector<2x1xf32>
    %cst_53 = arith.constant 5.000000e-01 : f32
    %134 = vector.broadcast %cst_53 : f32 to vector<2x1xf32>
    %135 = arith.cmpf ogt, %133, %134 : vector<2x1xf32>
    %136 = vector.shape_cast %135 : vector<2x1xi1> to vector<2x1xi1>
    %137 = vector.broadcast %136 : vector<2x1xi1> to vector<2x8xi1>
    %138 = arith.select %137, %130, %119 : vector<2x8xi1>, vector<2x8xf32>
    %c0_54 = arith.constant 0 : index
    %c0_55 = arith.constant 0 : index
    %139 = vector.load %arg3[%c0_54, %c0_55] : memref<1x8xf32, #tpu.memory_space<vmem>>, vector<1x8xf32>
    %140 = vector.broadcast %139 : vector<1x8xf32> to vector<2x8xf32>
    %141 = arith.addf %138, %140 : vector<2x8xf32>
    %142 = tpu.iota {dimensions = array<i32: 1>} : vector<2x8xi32>
    %143 = tpu.iota {dimensions = array<i32: 1>} : vector<2x8xi32>
    %cst_56 = arith.constant dense<0xFF800000> : vector<2xf32>
    %144 = vector.multi_reduction <maximumf>, %141, %cst_56 [1] : vector<2x8xf32> to vector<2xf32>
    %145 = vector.shape_cast %144 : vector<2xf32> to vector<2x1xf32>
    %146 = vector.broadcast %145 : vector<2x1xf32> to vector<2x8xf32>
    %147 = arith.cmpf oge, %141, %146 : vector<2x8xf32>
    %c8_i32 = arith.constant 8 : i32
    %148 = vector.broadcast %c8_i32 : i32 to vector<2x8xi32>
    %149 = arith.select %147, %142, %148 : vector<2x8xi1>, vector<2x8xi32>
    %cst_57 = arith.constant dense<2147483647> : vector<2xi32>
    %150 = vector.multi_reduction <minsi>, %149, %cst_57 [1] : vector<2x8xi32> to vector<2xi32>
    %151 = vector.shape_cast %150 : vector<2xi32> to vector<2x1xi32>
    %c0_i32 = arith.constant 0 : i32
    %152 = vector.broadcast %c0_i32 : i32 to vector<2x8xi32>
    %c7_58 = arith.constant 7 : index
    %c0_59 = arith.constant 0 : index
    %c0_60 = arith.constant 0 : index
    %153 = vector.load %arg1[%c7_58, %c0_59, %c0_60] : memref<8x2x1xf32, #tpu.memory_space<vmem>>, vector<1x2x1xf32>
    %154 = vector.shape_cast %153 : vector<1x2x1xf32> to vector<2x1xf32>
    %cst_61 = arith.constant 5.000000e-01 : f32
    %155 = vector.broadcast %cst_61 : f32 to vector<2x1xf32>
    %156 = arith.cmpf ogt, %154, %155 : vector<2x1xf32>
    %false = arith.constant false
    %157 = vector.broadcast %false : i1 to vector<2x1xi1>
    %cst_62 = arith.constant dense<true> : vector<2x1xi1>
    %158 = arith.xori %157, %cst_62 : vector<2x1xi1>
    %159 = arith.andi %156, %158 : vector<2x1xi1>
    %160 = arith.select %157, %151, %151 : vector<2x1xi1>, vector<2x1xi32>
    %161 = arith.select %159, %151, %160 : vector<2x1xi1>, vector<2x1xi32>
    %c7_i32 = arith.constant 7 : i32
    %162 = vector.broadcast %c7_i32 : i32 to vector<2x8xi32>
    %163 = arith.cmpi eq, %143, %162 : vector<2x8xi32>
    %c0_i32_63 = arith.constant 0 : i32
    %164 = vector.broadcast %c0_i32_63 : i32 to vector<2x1xi32>
    %165 = arith.select %156, %161, %164 : vector<2x1xi1>, vector<2x1xi32>
    %166 = vector.shape_cast %165 : vector<2x1xi32> to vector<2x1xi32>
    %167 = vector.broadcast %166 : vector<2x1xi32> to vector<2x8xi32>
    %168 = arith.select %163, %167, %152 : vector<2x8xi1>, vector<2x8xi32>
    %c6_64 = arith.constant 6 : index
    %c0_65 = arith.constant 0 : index
    %c0_66 = arith.constant 0 : index
    %169 = vector.load %arg1[%c6_64, %c0_65, %c0_66] : memref<8x2x1xf32, #tpu.memory_space<vmem>>, vector<1x2x1xf32>
    %170 = vector.shape_cast %169 : vector<1x2x1xf32> to vector<2x1xf32>
    %cst_67 = arith.constant 5.000000e-01 : f32
    %171 = vector.broadcast %cst_67 : f32 to vector<2x1xf32>
    %172 = arith.cmpf ogt, %170, %171 : vector<2x1xf32>
    %c7_68 = arith.constant 7 : index
    %c0_69 = arith.constant 0 : index
    %c0_70 = arith.constant 0 : index
    %173 = vector.load %arg1[%c7_68, %c0_69, %c0_70] : memref<8x2x1xf32, #tpu.memory_space<vmem>>, vector<1x2x1xf32>
    %174 = vector.shape_cast %173 : vector<1x2x1xf32> to vector<2x1xf32>
    %cst_71 = arith.constant 5.000000e-01 : f32
    %175 = vector.broadcast %cst_71 : f32 to vector<2x1xf32>
    %176 = arith.cmpf ogt, %174, %175 : vector<2x1xf32>
    %177 = vector.broadcast %161 : vector<2x1xi32> to vector<2x8xi32>
    %178 = arith.cmpi eq, %142, %177 : vector<2x8xi32>
    %c0_i32_72 = arith.constant 0 : i32
    %179 = vector.broadcast %c0_i32_72 : i32 to vector<2x8xi32>
    %180 = arith.select %178, %131, %179 : vector<2x8xi1>, vector<2x8xi32>
    %cst_73 = arith.constant dense<0> : vector<2xi32>
    %181 = vector.multi_reduction <add>, %180, %cst_73 [1] : vector<2x8xi32> to vector<2xi32>
    %182 = vector.shape_cast %181 : vector<2xi32> to vector<2x1xi32>
    %cst_74 = arith.constant dense<true> : vector<2x1xi1>
    %183 = arith.xori %176, %cst_74 : vector<2x1xi1>
    %184 = arith.andi %172, %183 : vector<2x1xi1>
    %185 = arith.select %176, %182, %161 : vector<2x1xi1>, vector<2x1xi32>
    %186 = arith.select %184, %151, %185 : vector<2x1xi1>, vector<2x1xi32>
    %c6_i32 = arith.constant 6 : i32
    %187 = vector.broadcast %c6_i32 : i32 to vector<2x8xi32>
    %188 = arith.cmpi eq, %143, %187 : vector<2x8xi32>
    %c0_i32_75 = arith.constant 0 : i32
    %189 = vector.broadcast %c0_i32_75 : i32 to vector<2x1xi32>
    %190 = arith.select %172, %186, %189 : vector<2x1xi1>, vector<2x1xi32>
    %191 = vector.shape_cast %190 : vector<2x1xi32> to vector<2x1xi32>
    %192 = vector.broadcast %191 : vector<2x1xi32> to vector<2x8xi32>
    %193 = arith.select %188, %192, %168 : vector<2x8xi1>, vector<2x8xi32>
    %c5_76 = arith.constant 5 : index
    %c0_77 = arith.constant 0 : index
    %c0_78 = arith.constant 0 : index
    %194 = vector.load %arg1[%c5_76, %c0_77, %c0_78] : memref<8x2x1xf32, #tpu.memory_space<vmem>>, vector<1x2x1xf32>
    %195 = vector.shape_cast %194 : vector<1x2x1xf32> to vector<2x1xf32>
    %cst_79 = arith.constant 5.000000e-01 : f32
    %196 = vector.broadcast %cst_79 : f32 to vector<2x1xf32>
    %197 = arith.cmpf ogt, %195, %196 : vector<2x1xf32>
    %c6_80 = arith.constant 6 : index
    %c0_81 = arith.constant 0 : index
    %c0_82 = arith.constant 0 : index
    %198 = vector.load %arg1[%c6_80, %c0_81, %c0_82] : memref<8x2x1xf32, #tpu.memory_space<vmem>>, vector<1x2x1xf32>
    %199 = vector.shape_cast %198 : vector<1x2x1xf32> to vector<2x1xf32>
    %cst_83 = arith.constant 5.000000e-01 : f32
    %200 = vector.broadcast %cst_83 : f32 to vector<2x1xf32>
    %201 = arith.cmpf ogt, %199, %200 : vector<2x1xf32>
    %202 = vector.broadcast %186 : vector<2x1xi32> to vector<2x8xi32>
    %203 = arith.cmpi eq, %142, %202 : vector<2x8xi32>
    %c0_i32_84 = arith.constant 0 : i32
    %204 = vector.broadcast %c0_i32_84 : i32 to vector<2x8xi32>
    %205 = arith.select %203, %112, %204 : vector<2x8xi1>, vector<2x8xi32>
    %cst_85 = arith.constant dense<0> : vector<2xi32>
    %206 = vector.multi_reduction <add>, %205, %cst_85 [1] : vector<2x8xi32> to vector<2xi32>
    %207 = vector.shape_cast %206 : vector<2xi32> to vector<2x1xi32>
    %cst_86 = arith.constant dense<true> : vector<2x1xi1>
    %208 = arith.xori %201, %cst_86 : vector<2x1xi1>
    %209 = arith.andi %197, %208 : vector<2x1xi1>
    %210 = arith.select %201, %207, %186 : vector<2x1xi1>, vector<2x1xi32>
    %211 = arith.select %209, %151, %210 : vector<2x1xi1>, vector<2x1xi32>
    %c5_i32 = arith.constant 5 : i32
    %212 = vector.broadcast %c5_i32 : i32 to vector<2x8xi32>
    %213 = arith.cmpi eq, %143, %212 : vector<2x8xi32>
    %c0_i32_87 = arith.constant 0 : i32
    %214 = vector.broadcast %c0_i32_87 : i32 to vector<2x1xi32>
    %215 = arith.select %197, %211, %214 : vector<2x1xi1>, vector<2x1xi32>
    %216 = vector.shape_cast %215 : vector<2x1xi32> to vector<2x1xi32>
    %217 = vector.broadcast %216 : vector<2x1xi32> to vector<2x8xi32>
    %218 = arith.select %213, %217, %193 : vector<2x8xi1>, vector<2x8xi32>
    %c4_88 = arith.constant 4 : index
    %c0_89 = arith.constant 0 : index
    %c0_90 = arith.constant 0 : index
    %219 = vector.load %arg1[%c4_88, %c0_89, %c0_90] : memref<8x2x1xf32, #tpu.memory_space<vmem>>, vector<1x2x1xf32>
    %220 = vector.shape_cast %219 : vector<1x2x1xf32> to vector<2x1xf32>
    %cst_91 = arith.constant 5.000000e-01 : f32
    %221 = vector.broadcast %cst_91 : f32 to vector<2x1xf32>
    %222 = arith.cmpf ogt, %220, %221 : vector<2x1xf32>
    %c5_92 = arith.constant 5 : index
    %c0_93 = arith.constant 0 : index
    %c0_94 = arith.constant 0 : index
    %223 = vector.load %arg1[%c5_92, %c0_93, %c0_94] : memref<8x2x1xf32, #tpu.memory_space<vmem>>, vector<1x2x1xf32>
    %224 = vector.shape_cast %223 : vector<1x2x1xf32> to vector<2x1xf32>
    %cst_95 = arith.constant 5.000000e-01 : f32
    %225 = vector.broadcast %cst_95 : f32 to vector<2x1xf32>
    %226 = arith.cmpf ogt, %224, %225 : vector<2x1xf32>
    %227 = vector.broadcast %211 : vector<2x1xi32> to vector<2x8xi32>
    %228 = arith.cmpi eq, %142, %227 : vector<2x8xi32>
    %c0_i32_96 = arith.constant 0 : i32
    %229 = vector.broadcast %c0_i32_96 : i32 to vector<2x8xi32>
    %230 = arith.select %228, %93, %229 : vector<2x8xi1>, vector<2x8xi32>
    %cst_97 = arith.constant dense<0> : vector<2xi32>
    %231 = vector.multi_reduction <add>, %230, %cst_97 [1] : vector<2x8xi32> to vector<2xi32>
    %232 = vector.shape_cast %231 : vector<2xi32> to vector<2x1xi32>
    %cst_98 = arith.constant dense<true> : vector<2x1xi1>
    %233 = arith.xori %226, %cst_98 : vector<2x1xi1>
    %234 = arith.andi %222, %233 : vector<2x1xi1>
    %235 = arith.select %226, %232, %211 : vector<2x1xi1>, vector<2x1xi32>
    %236 = arith.select %234, %151, %235 : vector<2x1xi1>, vector<2x1xi32>
    %c4_i32 = arith.constant 4 : i32
    %237 = vector.broadcast %c4_i32 : i32 to vector<2x8xi32>
    %238 = arith.cmpi eq, %143, %237 : vector<2x8xi32>
    %c0_i32_99 = arith.constant 0 : i32
    %239 = vector.broadcast %c0_i32_99 : i32 to vector<2x1xi32>
    %240 = arith.select %222, %236, %239 : vector<2x1xi1>, vector<2x1xi32>
    %241 = vector.shape_cast %240 : vector<2x1xi32> to vector<2x1xi32>
    %242 = vector.broadcast %241 : vector<2x1xi32> to vector<2x8xi32>
    %243 = arith.select %238, %242, %218 : vector<2x8xi1>, vector<2x8xi32>
    %c3_100 = arith.constant 3 : index
    %c0_101 = arith.constant 0 : index
    %c0_102 = arith.constant 0 : index
    %244 = vector.load %arg1[%c3_100, %c0_101, %c0_102] : memref<8x2x1xf32, #tpu.memory_space<vmem>>, vector<1x2x1xf32>
    %245 = vector.shape_cast %244 : vector<1x2x1xf32> to vector<2x1xf32>
    %cst_103 = arith.constant 5.000000e-01 : f32
    %246 = vector.broadcast %cst_103 : f32 to vector<2x1xf32>
    %247 = arith.cmpf ogt, %245, %246 : vector<2x1xf32>
    %c4_104 = arith.constant 4 : index
    %c0_105 = arith.constant 0 : index
    %c0_106 = arith.constant 0 : index
    %248 = vector.load %arg1[%c4_104, %c0_105, %c0_106] : memref<8x2x1xf32, #tpu.memory_space<vmem>>, vector<1x2x1xf32>
    %249 = vector.shape_cast %248 : vector<1x2x1xf32> to vector<2x1xf32>
    %cst_107 = arith.constant 5.000000e-01 : f32
    %250 = vector.broadcast %cst_107 : f32 to vector<2x1xf32>
    %251 = arith.cmpf ogt, %249, %250 : vector<2x1xf32>
    %252 = vector.broadcast %236 : vector<2x1xi32> to vector<2x8xi32>
    %253 = arith.cmpi eq, %142, %252 : vector<2x8xi32>
    %c0_i32_108 = arith.constant 0 : i32
    %254 = vector.broadcast %c0_i32_108 : i32 to vector<2x8xi32>
    %255 = arith.select %253, %74, %254 : vector<2x8xi1>, vector<2x8xi32>
    %cst_109 = arith.constant dense<0> : vector<2xi32>
    %256 = vector.multi_reduction <add>, %255, %cst_109 [1] : vector<2x8xi32> to vector<2xi32>
    %257 = vector.shape_cast %256 : vector<2xi32> to vector<2x1xi32>
    %cst_110 = arith.constant dense<true> : vector<2x1xi1>
    %258 = arith.xori %251, %cst_110 : vector<2x1xi1>
    %259 = arith.andi %247, %258 : vector<2x1xi1>
    %260 = arith.select %251, %257, %236 : vector<2x1xi1>, vector<2x1xi32>
    %261 = arith.select %259, %151, %260 : vector<2x1xi1>, vector<2x1xi32>
    %c3_i32 = arith.constant 3 : i32
    %262 = vector.broadcast %c3_i32 : i32 to vector<2x8xi32>
    %263 = arith.cmpi eq, %143, %262 : vector<2x8xi32>
    %c0_i32_111 = arith.constant 0 : i32
    %264 = vector.broadcast %c0_i32_111 : i32 to vector<2x1xi32>
    %265 = arith.select %247, %261, %264 : vector<2x1xi1>, vector<2x1xi32>
    %266 = vector.shape_cast %265 : vector<2x1xi32> to vector<2x1xi32>
    %267 = vector.broadcast %266 : vector<2x1xi32> to vector<2x8xi32>
    %268 = arith.select %263, %267, %243 : vector<2x8xi1>, vector<2x8xi32>
    %c2_112 = arith.constant 2 : index
    %c0_113 = arith.constant 0 : index
    %c0_114 = arith.constant 0 : index
    %269 = vector.load %arg1[%c2_112, %c0_113, %c0_114] : memref<8x2x1xf32, #tpu.memory_space<vmem>>, vector<1x2x1xf32>
    %270 = vector.shape_cast %269 : vector<1x2x1xf32> to vector<2x1xf32>
    %cst_115 = arith.constant 5.000000e-01 : f32
    %271 = vector.broadcast %cst_115 : f32 to vector<2x1xf32>
    %272 = arith.cmpf ogt, %270, %271 : vector<2x1xf32>
    %c3_116 = arith.constant 3 : index
    %c0_117 = arith.constant 0 : index
    %c0_118 = arith.constant 0 : index
    %273 = vector.load %arg1[%c3_116, %c0_117, %c0_118] : memref<8x2x1xf32, #tpu.memory_space<vmem>>, vector<1x2x1xf32>
    %274 = vector.shape_cast %273 : vector<1x2x1xf32> to vector<2x1xf32>
    %cst_119 = arith.constant 5.000000e-01 : f32
    %275 = vector.broadcast %cst_119 : f32 to vector<2x1xf32>
    %276 = arith.cmpf ogt, %274, %275 : vector<2x1xf32>
    %277 = vector.broadcast %261 : vector<2x1xi32> to vector<2x8xi32>
    %278 = arith.cmpi eq, %142, %277 : vector<2x8xi32>
    %c0_i32_120 = arith.constant 0 : i32
    %279 = vector.broadcast %c0_i32_120 : i32 to vector<2x8xi32>
    %280 = arith.select %278, %55, %279 : vector<2x8xi1>, vector<2x8xi32>
    %cst_121 = arith.constant dense<0> : vector<2xi32>
    %281 = vector.multi_reduction <add>, %280, %cst_121 [1] : vector<2x8xi32> to vector<2xi32>
    %282 = vector.shape_cast %281 : vector<2xi32> to vector<2x1xi32>
    %cst_122 = arith.constant dense<true> : vector<2x1xi1>
    %283 = arith.xori %276, %cst_122 : vector<2x1xi1>
    %284 = arith.andi %272, %283 : vector<2x1xi1>
    %285 = arith.select %276, %282, %261 : vector<2x1xi1>, vector<2x1xi32>
    %286 = arith.select %284, %151, %285 : vector<2x1xi1>, vector<2x1xi32>
    %c2_i32 = arith.constant 2 : i32
    %287 = vector.broadcast %c2_i32 : i32 to vector<2x8xi32>
    %288 = arith.cmpi eq, %143, %287 : vector<2x8xi32>
    %c0_i32_123 = arith.constant 0 : i32
    %289 = vector.broadcast %c0_i32_123 : i32 to vector<2x1xi32>
    %290 = arith.select %272, %286, %289 : vector<2x1xi1>, vector<2x1xi32>
    %291 = vector.shape_cast %290 : vector<2x1xi32> to vector<2x1xi32>
    %292 = vector.broadcast %291 : vector<2x1xi32> to vector<2x8xi32>
    %293 = arith.select %288, %292, %268 : vector<2x8xi1>, vector<2x8xi32>
    %c1_124 = arith.constant 1 : index
    %c0_125 = arith.constant 0 : index
    %c0_126 = arith.constant 0 : index
    %294 = vector.load %arg1[%c1_124, %c0_125, %c0_126] : memref<8x2x1xf32, #tpu.memory_space<vmem>>, vector<1x2x1xf32>
    %295 = vector.shape_cast %294 : vector<1x2x1xf32> to vector<2x1xf32>
    %cst_127 = arith.constant 5.000000e-01 : f32
    %296 = vector.broadcast %cst_127 : f32 to vector<2x1xf32>
    %297 = arith.cmpf ogt, %295, %296 : vector<2x1xf32>
    %c2_128 = arith.constant 2 : index
    %c0_129 = arith.constant 0 : index
    %c0_130 = arith.constant 0 : index
    %298 = vector.load %arg1[%c2_128, %c0_129, %c0_130] : memref<8x2x1xf32, #tpu.memory_space<vmem>>, vector<1x2x1xf32>
    %299 = vector.shape_cast %298 : vector<1x2x1xf32> to vector<2x1xf32>
    %cst_131 = arith.constant 5.000000e-01 : f32
    %300 = vector.broadcast %cst_131 : f32 to vector<2x1xf32>
    %301 = arith.cmpf ogt, %299, %300 : vector<2x1xf32>
    %302 = vector.broadcast %286 : vector<2x1xi32> to vector<2x8xi32>
    %303 = arith.cmpi eq, %142, %302 : vector<2x8xi32>
    %c0_i32_132 = arith.constant 0 : i32
    %304 = vector.broadcast %c0_i32_132 : i32 to vector<2x8xi32>
    %305 = arith.select %303, %36, %304 : vector<2x8xi1>, vector<2x8xi32>
    %cst_133 = arith.constant dense<0> : vector<2xi32>
    %306 = vector.multi_reduction <add>, %305, %cst_133 [1] : vector<2x8xi32> to vector<2xi32>
    %307 = vector.shape_cast %306 : vector<2xi32> to vector<2x1xi32>
    %cst_134 = arith.constant dense<true> : vector<2x1xi1>
    %308 = arith.xori %301, %cst_134 : vector<2x1xi1>
    %309 = arith.andi %297, %308 : vector<2x1xi1>
    %310 = arith.select %301, %307, %286 : vector<2x1xi1>, vector<2x1xi32>
    %311 = arith.select %309, %151, %310 : vector<2x1xi1>, vector<2x1xi32>
    %c1_i32 = arith.constant 1 : i32
    %312 = vector.broadcast %c1_i32 : i32 to vector<2x8xi32>
    %313 = arith.cmpi eq, %143, %312 : vector<2x8xi32>
    %c0_i32_135 = arith.constant 0 : i32
    %314 = vector.broadcast %c0_i32_135 : i32 to vector<2x1xi32>
    %315 = arith.select %297, %311, %314 : vector<2x1xi1>, vector<2x1xi32>
    %316 = vector.shape_cast %315 : vector<2x1xi32> to vector<2x1xi32>
    %317 = vector.broadcast %316 : vector<2x1xi32> to vector<2x8xi32>
    %318 = arith.select %313, %317, %293 : vector<2x8xi1>, vector<2x8xi32>
    %c0_136 = arith.constant 0 : index
    %c0_137 = arith.constant 0 : index
    %c0_138 = arith.constant 0 : index
    %319 = vector.load %arg1[%c0_136, %c0_137, %c0_138] : memref<8x2x1xf32, #tpu.memory_space<vmem>>, vector<1x2x1xf32>
    %320 = vector.shape_cast %319 : vector<1x2x1xf32> to vector<2x1xf32>
    %cst_139 = arith.constant 5.000000e-01 : f32
    %321 = vector.broadcast %cst_139 : f32 to vector<2x1xf32>
    %322 = arith.cmpf ogt, %320, %321 : vector<2x1xf32>
    %c1_140 = arith.constant 1 : index
    %c0_141 = arith.constant 0 : index
    %c0_142 = arith.constant 0 : index
    %323 = vector.load %arg1[%c1_140, %c0_141, %c0_142] : memref<8x2x1xf32, #tpu.memory_space<vmem>>, vector<1x2x1xf32>
    %324 = vector.shape_cast %323 : vector<1x2x1xf32> to vector<2x1xf32>
    %cst_143 = arith.constant 5.000000e-01 : f32
    %325 = vector.broadcast %cst_143 : f32 to vector<2x1xf32>
    %326 = arith.cmpf ogt, %324, %325 : vector<2x1xf32>
    %327 = vector.broadcast %311 : vector<2x1xi32> to vector<2x8xi32>
    %328 = arith.cmpi eq, %142, %327 : vector<2x8xi32>
    %c0_i32_144 = arith.constant 0 : i32
    %329 = vector.broadcast %c0_i32_144 : i32 to vector<2x8xi32>
    %330 = arith.select %328, %17, %329 : vector<2x8xi1>, vector<2x8xi32>
    %cst_145 = arith.constant dense<0> : vector<2xi32>
    %331 = vector.multi_reduction <add>, %330, %cst_145 [1] : vector<2x8xi32> to vector<2xi32>
    %332 = vector.shape_cast %331 : vector<2xi32> to vector<2x1xi32>
    %cst_146 = arith.constant dense<true> : vector<2x1xi1>
    %333 = arith.xori %326, %cst_146 : vector<2x1xi1>
    %334 = arith.andi %322, %333 : vector<2x1xi1>
    %335 = arith.select %326, %332, %311 : vector<2x1xi1>, vector<2x1xi32>
    %336 = arith.select %334, %151, %335 : vector<2x1xi1>, vector<2x1xi32>
    %c0_i32_147 = arith.constant 0 : i32
    %337 = vector.broadcast %c0_i32_147 : i32 to vector<2x8xi32>
    %338 = arith.cmpi eq, %143, %337 : vector<2x8xi32>
    %c0_i32_148 = arith.constant 0 : i32
    %339 = vector.broadcast %c0_i32_148 : i32 to vector<2x1xi32>
    %340 = arith.select %322, %336, %339 : vector<2x1xi1>, vector<2x1xi32>
    %341 = vector.shape_cast %340 : vector<2x1xi32> to vector<2x1xi32>
    %342 = vector.broadcast %341 : vector<2x1xi32> to vector<2x8xi32>
    %343 = arith.select %338, %342, %318 : vector<2x8xi1>, vector<2x8xi32>
    %c0_149 = arith.constant 0 : index
    %c0_150 = arith.constant 0 : index
    %344 = vector.load %arg5[%c0_149, %c0_150] : memref<2x8xi32, #tpu.memory_space<vmem>>, vector<2x8xi32>
    tpu.vector_store %arg5[%c0_149, %c0_150], %343 {strides = array<i32>} : memref<2x8xi32, #tpu.memory_space<vmem>>, vector<2x8xi32>,
    return
  }
}

</mosaic_0001>

<llo_original>
// kernel: device_forward.3
$region0: #{device_forward.3}
  #allocation0 [shape = 'u32[]', space=smem, size = 0x4, offset = 0x4, fixed_abs, tag = 'smem constant byte address 0x4 - core index']
  #allocation1 [shape = 'u32[72,128]{1,0:T(1,128)}', space=vmem, size = 0x9000, scoped, tag = 'internal scratch']
  %s0 = inlined_call_operand.vmem [shape: f32[8,2,8], index: 0, kind: input, shape index: {}]
  %s1 = inlined_call_operand.vmem [shape: f32[8,2,1], index: 1, kind: input, shape index: {}]
  %s2 = inlined_call_operand.vmem [shape: f32[1,8], index: 2, kind: input, shape index: {}]
  %s3 = inlined_call_operand.vmem [shape: f32[1,8], index: 3, kind: input, shape index: {}]
  %s4 = inlined_call_operand.vmem [shape: f32[8,8], index: 4, kind: input, shape index: {}]
  %s5 = inlined_call_operand.hbm [shape: s32[2,8], index: 5, kind: output, shape index: {}]
  %s6 = sld [smem:[#allocation0]]
  $region30: #{device_forward.3} parent=0
    _
  %s8 = ssub.s32 1, %s6
  %s9 = scalar_select 0, %s8, %s6
  $region1: #{device_forward.3} parent=0
    #allocation2 [shape = 'u8[1024]{0}', space=vmem, size = 0x400, scoped, tag = 'output window, operand 0, single buffered']
    #allocation3 [shape = 's32[1]{0}', space=sflag, size = 0x4, scoped, tag = 'scoped memory for device_forward.3']
    %10 = vsyncpa [#allocation3], 0
    // Predicated region
    $region2: #{device_forward.3} parent=1 // pred_check
      _
    $region3: #{device_forward.3} parent=1 // pred_check_branch
      %12 = sbr.rel (0) target = $region5
    $region4: #{device_forward.3} parent=1 // pred_region
      _
    $region5: #{device_forward.3} parent=1 // pred_fallthru
      _
    // Predicated region
    $region6: #{device_forward.3} parent=1 // pred_check
      _
    $region7: #{device_forward.3} parent=1 // pred_check_branch
      %14 = sbr.rel (0) target = $region9
    $region8: #{device_forward.3} parent=1 // pred_region
      _
    $region9: #{device_forward.3} parent=1 // pred_fallthru
      _
    // Predicated region
    $region10: #{device_forward.3} parent=1 // pred_check
      _
    $region11: #{device_forward.3} parent=1 // pred_check_branch
      %16 = sbr.rel (0) target = $region13
    $region12: #{device_forward.3} parent=1 // pred_region
      _
    $region13: #{device_forward.3} parent=1 // pred_fallthru
      _
    // Predicated region
    $region14: #{device_forward.3} parent=1 // pred_check
      _
    $region15: #{device_forward.3} parent=1 // pred_check_branch
      %18 = sbr.rel (0) target = $region17
    $region16: #{device_forward.3} parent=1 // pred_region
      _
    $region17: #{device_forward.3} parent=1 // pred_fallthru
      _
    // Predicated region
    $region18: #{device_forward.3} parent=1 // pred_check
      _
    $region19: #{device_forward.3} parent=1 // pred_check_branch
      %20 = sbr.rel (0) target = $region21
    $region20: #{device_forward.3} parent=1 // pred_region
      _
    $region21: #{device_forward.3} parent=1 // pred_fallthru
      _
    %v21 = vld [vmem:[%s4] sm:$0xff]
    %v22 = vld [vmem:[%s2] sm:$0x1]
    %v23 = vld [vmem:[%s0] sm:$0x3]
    %v25 = vperm.slane %v22, 0
    %v27 = vadd.f32 %v25, %v23
    %v29 = vrot.slane %v27, 1
    %v30 = vperm.slane %v27, 0
    %v31 = vperm.slane %v29, 0
    %v34 = vadd.f32 %v30, %v21
    %v35 = vadd.f32 %v31, %v21
    %s36 = scalar_lea.vmem %s0, 2
    %v37 = vld [vmem:[%s36] sm:$0x3]
    %v38 = vperm.slane %v37, 0
    %v39 = vlaneseq
    %v40 = vshrl.u32 %v39, 7
    %42 = vset.pattern.permute.xlu0 %v40
    %43 = vperm.xlu0 %42, %v38
    %v44 = vpop.permute.xlu0 %43
    %v45 = vperm.slane %v37, 1
    %v46 = vlaneseq
    %v47 = vshrl.u32 %v46, 7
    %49 = vset.pattern.permute.xlu0 %v47
    %50 = vperm.xlu0 %49, %v45
    %v51 = vpop.permute.xlu0 %50
    %v52 = vadd.f32 %v34, %v44
    %v53 = vadd.f32 %v35, %v51
    %vm54 = vcmask 64512
    %v55 = vsel %vm54, %v52, -inf
    %56 = vmax.xlane.f32.xlu0 %v55
    %v57 = vpop.xlane.xlu0 %56
    %v58 = vsel %vm54, %v53, -inf
    %59 = vmax.xlane.f32.xlu0 %v58
    %v60 = vpop.xlane.xlu0 %59
    %61 = vmax.index.xlane.f32.xlu0 %v55
    %v62 = vpop.xlane.xlu0 %61
    %63 = vmax.index.xlane.f32.xlu0 %v58
    %v64 = vpop.xlane.xlu0 %63
    %s65 = scalar_lea.vmem %s1, 2
    %v66 = vld [vmem:[%s65] sm:$0x3]
    %vm67 = vcmp.gt.f32.partialorder %v66, 0.5
    %v68 = vsel %vm67, 1, 0
    %69 = vset.pattern.permute.xlu0 0
    %70 = vperm.xlu0 %69, %v68
    %v71 = vpop.permute.xlu0 %70
    %vm72 = vcmp.eq.s32.totalorder %v71, 1
    %v75 = vlaneseq
    %v76 = vand.u32 %v75, 127
    %v77 = vperm.slane %v57, %v76
    %v78 = vperm.slane %v60, %v76
    %vm79 = vcmask 1041409
    %v80 = vsel %vm79, %v78, %v77
    %v82 = vsel %vm72, %v80, %v27
    %v84 = vrot.slane %v82, 1
    %v85 = vperm.slane %v82, 0
    %v86 = vperm.slane %v84, 0
    %v89 = vadd.f32 %v85, %v21
    %v90 = vadd.f32 %v86, %v21
    %s91 = scalar_lea.vmem %s0, 4
    %v92 = vld [vmem:[%s91] sm:$0x3]
    %v93 = vperm.slane %v92, 0
    %v94 = vlaneseq
    %v95 = vshrl.u32 %v94, 7
    %97 = vset.pattern.permute.xlu0 %v95
    %98 = vperm.xlu0 %97, %v93
    %v99 = vpop.permute.xlu0 %98
    %v100 = vperm.slane %v92, 1
    %v101 = vlaneseq
    %v102 = vshrl.u32 %v101, 7
    %104 = vset.pattern.permute.xlu0 %v102
    %105 = vperm.xlu0 %104, %v100
    %v106 = vpop.permute.xlu0 %105
    %v107 = vadd.f32 %v89, %v99
    %v108 = vadd.f32 %v90, %v106
    %v109 = vsel %vm54, %v107, -inf
    %110 = vmax.xlane.f32.xlu0 %v109
    %v111 = vpop.xlane.xlu0 %110
    %v112 = vsel %vm54, %v108, -inf
    %113 = vmax.xlane.f32.xlu0 %v112
    %v114 = vpop.xlane.xlu0 %113
    %115 = vmax.index.xlane.f32.xlu0 %v109
    %v116 = vpop.xlane.xlu0 %115
    %117 = vmax.index.xlane.f32.xlu0 %v112
    %v118 = vpop.xlane.xlu0 %117
    %s119 = scalar_lea.vmem %s1, 4
    %v120 = vld [vmem:[%s119] sm:$0x3]
    %vm121 = vcmp.gt.f32.partialorder %v120, 0.5
    %v122 = vsel %vm121, 1, 0
    %123 = vset.pattern.permute.xlu0 0
    %124 = vperm.xlu0 %123, %v122
    %v125 = vpop.permute.xlu0 %124
    %vm126 = vcmp.eq.s32.totalorder %v125, 1
    %v129 = vperm.slane %v111, %v76
    %v130 = vperm.slane %v114, %v76
    %v131 = vsel %vm79, %v130, %v129
    %v133 = vsel %vm126, %v131, %v82
    %v135 = vrot.slane %v133, 1
    %v136 = vperm.slane %v133, 0
    %v137 = vperm.slane %v135, 0
    %v140 = vadd.f32 %v136, %v21
    %v141 = vadd.f32 %v137, %v21
    %s142 = scalar_lea.vmem %s0, 6
    %v143 = vld [vmem:[%s142] sm:$0x3]
    %v144 = vperm.slane %v143, 0
    %v145 = vlaneseq
    %v146 = vshrl.u32 %v145, 7
    %148 = vset.pattern.permute.xlu0 %v146
    %149 = vperm.xlu0 %148, %v144
    %v150 = vpop.permute.xlu0 %149
    %v151 = vperm.slane %v143, 1
    %v152 = vlaneseq
    %v153 = vshrl.u32 %v152, 7
    %155 = vset.pattern.permute.xlu0 %v153
    %156 = vperm.xlu0 %155, %v151
    %v157 = vpop.permute.xlu0 %156
    %v158 = vadd.f32 %v140, %v150
    %v159 = vadd.f32 %v141, %v157
    %v160 = vsel %vm54, %v158, -inf
    %161 = vmax.xlane.f32.xlu0 %v160
    %v162 = vpop.xlane.xlu0 %161
    %v163 = vsel %vm54, %v159, -inf
    %164 = vmax.xlane.f32.xlu0 %v163
    %v165 = vpop.xlane.xlu0 %164
    %166 = vmax.index.xlane.f32.xlu0 %v160
    %v167 = vpop.xlane.xlu0 %166
    %168 = vmax.index.xlane.f32.xlu0 %v163
    %v169 = vpop.xlane.xlu0 %168
    %s170 = scalar_lea.vmem %s1, 6
    %v171 = vld [vmem:[%s170] sm:$0x3]
    %vm172 = vcmp.gt.f32.partialorder %v171, 0.5
    %v173 = vsel %vm172, 1, 0
    %174 = vset.pattern.permute.xlu0 0
    %175 = vperm.xlu0 %174, %v173
    %v176 = vpop.permute.xlu0 %175
    %vm177 = vcmp.eq.s32.totalorder %v176, 1
    %v180 = vperm.slane %v162, %v76
    %v181 = vperm.slane %v165, %v76
    %v182 = vsel %vm79, %v181, %v180
    %v184 = vsel %vm177, %v182, %v133
    %v186 = vrot.slane %v184, 1
    %v187 = vperm.slane %v184, 0
    %v188 = vperm.slane %v186, 0
    %v191 = vadd.f32 %v187, %v21
    %v192 = vadd.f32 %v188, %v21
    %s193 = scalar_lea.vmem %s0, 8
    %v194 = vld [vmem:[%s193] sm:$0x3]
    %v195 = vperm.slane %v194, 0
    %v196 = vlaneseq
    %v197 = vshrl.u32 %v196, 7
    %199 = vset.pattern.permute.xlu0 %v197
    %200 = vperm.xlu0 %199, %v195
    %v201 = vpop.permute.xlu0 %200
    %v202 = vperm.slane %v194, 1
    %v203 = vlaneseq
    %v204 = vshrl.u32 %v203, 7
    %206 = vset.pattern.permute.xlu0 %v204
    %207 = vperm.xlu0 %206, %v202
    %v208 = vpop.permute.xlu0 %207
    %v209 = vadd.f32 %v191, %v201
    %v210 = vadd.f32 %v192, %v208
    %v211 = vsel %vm54, %v209, -inf
    %212 = vmax.xlane.f32.xlu0 %v211
    %v213 = vpop.xlane.xlu0 %212
    %v214 = vsel %vm54, %v210, -inf
    %215 = vmax.xlane.f32.xlu0 %v214
    %v216 = vpop.xlane.xlu0 %215
    %217 = vmax.index.xlane.f32.xlu0 %v211
    %v218 = vpop.xlane.xlu0 %217
    %219 = vmax.index.xlane.f32.xlu0 %v214
    %v220 = vpop.xlane.xlu0 %219
    %s221 = scalar_lea.vmem %s1, 8
    %v222 = vld [vmem:[%s221] sm:$0x3]
    %vm223 = vcmp.gt.f32.partialorder %v222, 0.5
    %v224 = vsel %vm223, 1, 0
    %225 = vset.pattern.permute.xlu0 0
    %226 = vperm.xlu0 %225, %v224
    %v227 = vpop.permute.xlu0 %226
    %vm228 = vcmp.eq.s32.totalorder %v227, 1
    %v231 = vperm.slane %v213, %v76
    %v232 = vperm.slane %v216, %v76
    %v233 = vsel %vm79, %v232, %v231
    %v235 = vsel %vm228, %v233, %v184
    %v237 = vrot.slane %v235, 1
    %v238 = vperm.slane %v235, 0
    %v239 = vperm.slane %v237, 0
    %v242 = vadd.f32 %v238, %v21
    %v243 = vadd.f32 %v239, %v21
    %s244 = scalar_lea.vmem %s0, 10
    %v245 = vld [vmem:[%s244] sm:$0x3]
    %v246 = vperm.slane %v245, 0
    %v247 = vlaneseq
    %v248 = vshrl.u32 %v247, 7
    %250 = vset.pattern.permute.xlu0 %v248
    %251 = vperm.xlu0 %250, %v246
    %v252 = vpop.permute.xlu0 %251
    %v253 = vperm.slane %v245, 1
    %v254 = vlaneseq
    %v255 = vshrl.u32 %v254, 7
    %257 = vset.pattern.permute.xlu0 %v255
    %258 = vperm.xlu0 %257, %v253
    %v259 = vpop.permute.xlu0 %258
    %v260 = vadd.f32 %v242, %v252
    %v261 = vadd.f32 %v243, %v259
    %v262 = vsel %vm54, %v260, -inf
    %263 = vmax.xlane.f32.xlu0 %v262
    %v264 = vpop.xlane.xlu0 %263
    %v265 = vsel %vm54, %v261, -inf
    %266 = vmax.xlane.f32.xlu0 %v265
    %v267 = vpop.xlane.xlu0 %266
    %268 = vmax.index.xlane.f32.xlu0 %v262
    %v269 = vpop.xlane.xlu0 %268
    %270 = vmax.index.xlane.f32.xlu0 %v265
    %v271 = vpop.xlane.xlu0 %270
    %s272 = scalar_lea.vmem %s1, 10
    %v273 = vld [vmem:[%s272] sm:$0x3]
    %vm274 = vcmp.gt.f32.partialorder %v273, 0.5
    %v275 = vsel %vm274, 1, 0
    %276 = vset.pattern.permute.xlu0 0
    %277 = vperm.xlu0 %276, %v275
    %v278 = vpop.permute.xlu0 %277
    %vm279 = vcmp.eq.s32.totalorder %v278, 1
    %v282 = vperm.slane %v264, %v76
    %v283 = vperm.slane %v267, %v76
    %v284 = vsel %vm79, %v283, %v282
    %v286 = vsel %vm279, %v284, %v235
    %v288 = vrot.slane %v286, 1
    %v289 = vperm.slane %v286, 0
    %v290 = vperm.slane %v288, 0
    %v293 = vadd.f32 %v289, %v21
    %v294 = vadd.f32 %v290, %v21
    %s295 = scalar_lea.vmem %s0, 12
    %v296 = vld [vmem:[%s295] sm:$0x3]
    %v297 = vperm.slane %v296, 0
    %v298 = vlaneseq
    %v299 = vshrl.u32 %v298, 7
    %301 = vset.pattern.permute.xlu0 %v299
    %302 = vperm.xlu0 %301, %v297
    %v303 = vpop.permute.xlu0 %302
    %v304 = vperm.slane %v296, 1
    %v305 = vlaneseq
    %v306 = vshrl.u32 %v305, 7
    %308 = vset.pattern.permute.xlu0 %v306
    %309 = vperm.xlu0 %308, %v304
    %v310 = vpop.permute.xlu0 %309
    %v311 = vadd.f32 %v293, %v303
    %v312 = vadd.f32 %v294, %v310
    %v313 = vsel %vm54, %v311, -inf
    %314 = vmax.xlane.f32.xlu0 %v313
    %v315 = vpop.xlane.xlu0 %314
    %v316 = vsel %vm54, %v312, -inf
    %317 = vmax.xlane.f32.xlu0 %v316
    %v318 = vpop.xlane.xlu0 %317
    %319 = vmax.index.xlane.f32.xlu0 %v313
    %v320 = vpop.xlane.xlu0 %319
    %321 = vmax.index.xlane.f32.xlu0 %v316
    %v322 = vpop.xlane.xlu0 %321
    %s323 = scalar_lea.vmem %s1, 12
    %v324 = vld [vmem:[%s323] sm:$0x3]
    %vm325 = vcmp.gt.f32.partialorder %v324, 0.5
    %v326 = vsel %vm325, 1, 0
    %327 = vset.pattern.permute.xlu0 0
    %328 = vperm.xlu0 %327, %v326
    %v329 = vpop.permute.xlu0 %328
    %vm330 = vcmp.eq.s32.totalorder %v329, 1
    %v333 = vperm.slane %v315, %v76
    %v334 = vperm.slane %v318, %v76
    %v335 = vsel %vm79, %v334, %v333
    %v337 = vsel %vm330, %v335, %v286
    %v339 = vrot.slane %v337, 1
    %v340 = vperm.slane %v337, 0
    %v341 = vperm.slane %v339, 0
    %v344 = vadd.f32 %v340, %v21
    %v345 = vadd.f32 %v341, %v21
    %s346 = scalar_lea.vmem %s0, 14
    %v347 = vld [vmem:[%s346] sm:$0x3]
    %v348 = vperm.slane %v347, 0
    %v349 = vlaneseq
    %v350 = vshrl.u32 %v349, 7
    %352 = vset.pattern.permute.xlu0 %v350
    %353 = vperm.xlu0 %352, %v348
    %v354 = vpop.permute.xlu0 %353
    %v355 = vperm.slane %v347, 1
    %v356 = vlaneseq
    %v357 = vshrl.u32 %v356, 7
    %359 = vset.pattern.permute.xlu0 %v357
    %360 = vperm.xlu0 %359, %v355
    %v361 = vpop.permute.xlu0 %360
    %v362 = vadd.f32 %v344, %v354
    %v363 = vadd.f32 %v345, %v361
    %v364 = vsel %vm54, %v362, -inf
    %365 = vmax.xlane.f32.xlu0 %v364
    %v366 = vpop.xlane.xlu0 %365
    %v367 = vsel %vm54, %v363, -inf
    %368 = vmax.xlane.f32.xlu0 %v367
    %v369 = vpop.xlane.xlu0 %368
    %370 = vmax.index.xlane.f32.xlu0 %v364
    %v371 = vpop.xlane.xlu0 %370
    %372 = vmax.index.xlane.f32.xlu0 %v367
    %v373 = vpop.xlane.xlu0 %372
    %s374 = scalar_lea.vmem %s1, 14
    %v375 = vld [vmem:[%s374] sm:$0x3]
    %vm376 = vcmp.gt.f32.partialorder %v375, 0.5
    %v377 = vsel %vm376, 1, 0
    %378 = vset.pattern.permute.xlu0 0
    %379 = vperm.xlu0 %378, %v377
    %v380 = vpop.permute.xlu0 %379
    %vm381 = vcmp.eq.s32.totalorder %v380, 1
    %v384 = vperm.slane %v366, %v76
    %v385 = vperm.slane %v369, %v76
    %v386 = vsel %vm79, %v385, %v384
    %v388 = vsel %vm381, %v386, %v337
    %v389 = vld [vmem:[%s3] sm:$0x1]
    %v391 = vperm.slane %v389, 0
    %v393 = vadd.f32 %v388, %v391
    %vm394 = vcmask 58368
    %v395 = vsel %vm394, %v393, -inf
    %396 = vmax.xlane.f32.xlu0 %v395
    %v397 = vpop.xlane.xlu0 %396
    %vm398 = vcmp.ge.f32.partialorder %v393, %v397
    %v399 = vsel %vm398, %v76, 8
    %v400 = vsel %vm394, %v399, 2147483647
    %v401 = vand.u32 %v400, 65535
    %v402 = vshra.s32 %v400, 16
    %v403 = vcvt.s32.f32 %v401
    %v404 = vcvt.s32.f32 %v402
    %405 = vmin.xlane.f32.xlu0 %v404
    %v406 = vpop.xlane.xlu0 %405
    %vm407 = vcmp.eq.f32.partialorder %v404, %v406
    %v408 = vsel %vm407, %v403, inf
    %409 = vmin.xlane.f32.xlu0 %v408
    %v410 = vpop.xlane.xlu0 %409
    %v411 = vcvt.f32.s32 %v410
    %v412 = vcvt.f32.s32 %v406
    %v413 = vshll.u32 %v412, 16
    %v414 = vadd.s32 %v413, %v411
    %vm415 = vcmp.eq.s32.totalorder %v76, 7
    %v416 = vsel %vm376, %v414, 0
    %417 = vset.pattern.permute.xlu0 0
    %418 = vperm.xlu0 %417, %v416
    %v419 = vpop.permute.xlu0 %418
    %v420 = vsel %vm415, %v419, 0
    %vm421 = vcmp.eq.s32.totalorder %v76, %v414
    %v422 = vperm.slane %v371, %v76
    %v423 = vperm.slane %v373, %v76
    %v424 = vsel %vm79, %v423, %v422
    %v425 = vsel %vm421, %v424, 0
    %v426 = vsel %vm394, %v425, 0
    %v427 = vand.u32 %v426, 65535
    %v428 = vshrl.u32 %v426, 16
    %v429 = vcvt.s32.f32 %v427
    %v430 = vcvt.s32.f32 %v428
    %431 = vadd.xlane.f32.xlu0 %v429
    %v432 = vpop.xlane.xlu0 %431
    %433 = vadd.xlane.f32.xlu0 %v430
    %v434 = vpop.xlane.xlu0 %433
    %v435 = vcvt.f32.s32 %v432
    %v436 = vcvt.f32.s32 %v434
    %v437 = vshll.u32 %v436, 16
    %v438 = vadd.s32 %v437, %v435
    %vm439 = vmxor %vm376, 1
    %vm440 = vmand %vm325, %vm439
    %v441 = vsel %vm376, %v438, %v414
    %v442 = vsel %vm440, %v414, %v441
    %vm443 = vcmp.eq.s32.totalorder %v76, 6
    %v444 = vsel %vm325, %v442, 0
    %445 = vset.pattern.permute.xlu0 0
    %446 = vperm.xlu0 %445, %v444
    %v447 = vpop.permute.xlu0 %446
    %v448 = vsel %vm443, %v447, %v420
    %449 = vset.pattern.permute.xlu0 0
    %450 = vperm.xlu0 %449, %v442
    %v451 = vpop.permute.xlu0 %450
    %vm452 = vcmp.eq.s32.totalorder %v76, %v451
    %v453 = vperm.slane %v320, %v76
    %v454 = vperm.slane %v322, %v76
    %v455 = vsel %vm79, %v454, %v453
    %v456 = vsel %vm452, %v455, 0
    %v457 = vsel %vm394, %v456, 0
    %v458 = vand.u32 %v457, 65535
    %v459 = vshrl.u32 %v457, 16
    %v460 = vcvt.s32.f32 %v458
    %v461 = vcvt.s32.f32 %v459
    %462 = vadd.xlane.f32.xlu0 %v460
    %v463 = vpop.xlane.xlu0 %462
    %464 = vadd.xlane.f32.xlu0 %v461
    %v465 = vpop.xlane.xlu0 %464
    %v466 = vcvt.f32.s32 %v463
    %v467 = vcvt.f32.s32 %v465
    %v468 = vshll.u32 %v467, 16
    %v469 = vadd.s32 %v468, %v466
    %vm470 = vmxor %vm325, 1
    %vm471 = vmand %vm274, %vm470
    %v472 = vsel %vm325, %v469, %v442
    %v473 = vsel %vm471, %v414, %v472
    %vm474 = vcmp.eq.s32.totalorder %v76, 5
    %v475 = vsel %vm274, %v473, 0
    %476 = vset.pattern.permute.xlu0 0
    %477 = vperm.xlu0 %476, %v475
    %v478 = vpop.permute.xlu0 %477
    %v479 = vsel %vm474, %v478, %v448
    %480 = vset.pattern.permute.xlu0 0
    %481 = vperm.xlu0 %480, %v473
    %v482 = vpop.permute.xlu0 %481
    %vm483 = vcmp.eq.s32.totalorder %v76, %v482
    %v484 = vperm.slane %v269, %v76
    %v485 = vperm.slane %v271, %v76
    %v486 = vsel %vm79, %v485, %v484
    %v487 = vsel %vm483, %v486, 0
    %v488 = vsel %vm394, %v487, 0
    %v489 = vand.u32 %v488, 65535
    %v490 = vshrl.u32 %v488, 16
    %v491 = vcvt.s32.f32 %v489
    %v492 = vcvt.s32.f32 %v490
    %493 = vadd.xlane.f32.xlu0 %v491
    %v494 = vpop.xlane.xlu0 %493
    %495 = vadd.xlane.f32.xlu0 %v492
    %v496 = vpop.xlane.xlu0 %495
    %v497 = vcvt.f32.s32 %v494
    %v498 = vcvt.f32.s32 %v496
    %v499 = vshll.u32 %v498, 16
    %v500 = vadd.s32 %v499, %v497
    %vm501 = vmxor %vm274, 1
    %vm502 = vmand %vm223, %vm501
    %v503 = vsel %vm274, %v500, %v473
    %v504 = vsel %vm502, %v414, %v503
    %vm505 = vcmp.eq.s32.totalorder %v76, 4
    %v506 = vsel %vm223, %v504, 0
    %507 = vset.pattern.permute.xlu0 0
    %508 = vperm.xlu0 %507, %v506
    %v509 = vpop.permute.xlu0 %508
    %v510 = vsel %vm505, %v509, %v479
    %511 = vset.pattern.permute.xlu0 0
    %512 = vperm.xlu0 %511, %v504
    %v513 = vpop.permute.xlu0 %512
    %vm514 = vcmp.eq.s32.totalorder %v76, %v513
    %v515 = vperm.slane %v218, %v76
    %v516 = vperm.slane %v220, %v76
    %v517 = vsel %vm79, %v516, %v515
    %v518 = vsel %vm514, %v517, 0
    %v519 = vsel %vm394, %v518, 0
    %v520 = vand.u32 %v519, 65535
    %v521 = vshrl.u32 %v519, 16
    %v522 = vcvt.s32.f32 %v520
    %v523 = vcvt.s32.f32 %v521
    %524 = vadd.xlane.f32.xlu0 %v522
    %v525 = vpop.xlane.xlu0 %524
    %526 = vadd.xlane.f32.xlu0 %v523
    %v527 = vpop.xlane.xlu0 %526
    %v528 = vcvt.f32.s32 %v525
    %v529 = vcvt.f32.s32 %v527
    %v530 = vshll.u32 %v529, 16
    %v531 = vadd.s32 %v530, %v528
    %vm532 = vmxor %vm223, 1
    %vm533 = vmand %vm172, %vm532
    %v534 = vsel %vm223, %v531, %v504
    %v535 = vsel %vm533, %v414, %v534
    %vm536 = vcmp.eq.s32.totalorder %v76, 3
    %v537 = vsel %vm172, %v535, 0
    %538 = vset.pattern.permute.xlu0 0
    %539 = vperm.xlu0 %538, %v537
    %v540 = vpop.permute.xlu0 %539
    %v541 = vsel %vm536, %v540, %v510
    %542 = vset.pattern.permute.xlu0 0
    %543 = vperm.xlu0 %542, %v535
    %v544 = vpop.permute.xlu0 %543
    %vm545 = vcmp.eq.s32.totalorder %v76, %v544
    %v546 = vperm.slane %v167, %v76
    %v547 = vperm.slane %v169, %v76
    %v548 = vsel %vm79, %v547, %v546
    %v549 = vsel %vm545, %v548, 0
    %v550 = vsel %vm394, %v549, 0
    %v551 = vand.u32 %v550, 65535
    %v552 = vshrl.u32 %v550, 16
    %v553 = vcvt.s32.f32 %v551
    %v554 = vcvt.s32.f32 %v552
    %555 = vadd.xlane.f32.xlu0 %v553
    %v556 = vpop.xlane.xlu0 %555
    %557 = vadd.xlane.f32.xlu0 %v554
    %v558 = vpop.xlane.xlu0 %557
    %v559 = vcvt.f32.s32 %v556
    %v560 = vcvt.f32.s32 %v558
    %v561 = vshll.u32 %v560, 16
    %v562 = vadd.s32 %v561, %v559
    %vm563 = vmxor %vm172, 1
    %vm564 = vmand %vm121, %vm563
    %v565 = vsel %vm172, %v562, %v535
    %v566 = vsel %vm564, %v414, %v565
    %vm567 = vcmp.eq.s32.totalorder %v76, 2
    %v568 = vsel %vm121, %v566, 0
    %569 = vset.pattern.permute.xlu0 0
    %570 = vperm.xlu0 %569, %v568
    %v571 = vpop.permute.xlu0 %570
    %v572 = vsel %vm567, %v571, %v541
    %573 = vset.pattern.permute.xlu0 0
    %574 = vperm.xlu0 %573, %v566
    %v575 = vpop.permute.xlu0 %574
    %vm576 = vcmp.eq.s32.totalorder %v76, %v575
    %v577 = vperm.slane %v116, %v76
    %v578 = vperm.slane %v118, %v76
    %v579 = vsel %vm79, %v578, %v577
    %v580 = vsel %vm576, %v579, 0
    %v581 = vsel %vm394, %v580, 0
    %v582 = vand.u32 %v581, 65535
    %v583 = vshrl.u32 %v581, 16
    %v584 = vcvt.s32.f32 %v582
    %v585 = vcvt.s32.f32 %v583
    %586 = vadd.xlane.f32.xlu0 %v584
    %v587 = vpop.xlane.xlu0 %586
    %588 = vadd.xlane.f32.xlu0 %v585
    %v589 = vpop.xlane.xlu0 %588
    %v590 = vcvt.f32.s32 %v587
    %v591 = vcvt.f32.s32 %v589
    %v592 = vshll.u32 %v591, 16
    %v593 = vadd.s32 %v592, %v590
    %vm594 = vmxor %vm121, 1
    %vm595 = vmand %vm67, %vm594
    %v596 = vsel %vm121, %v593, %v566
    %v597 = vsel %vm595, %v414, %v596
    %vm598 = vcmp.eq.s32.totalorder %v76, 1
    %v599 = vsel %vm67, %v597, 0
    %600 = vset.pattern.permute.xlu0 0
    %601 = vperm.xlu0 %600, %v599
    %v602 = vpop.permute.xlu0 %601
    %v603 = vsel %vm598, %v602, %v572
    %v604 = vld [vmem:[%s1] sm:$0x3]
    %vm605 = vcmp.gt.f32.partialorder %v604, 0.5
    %606 = vset.pattern.permute.xlu0 0
    %607 = vperm.xlu0 %606, %v597
    %v608 = vpop.permute.xlu0 %607
    %vm609 = vcmp.eq.s32.totalorder %v76, %v608
    %v610 = vperm.slane %v62, %v76
    %v611 = vperm.slane %v64, %v76
    %v612 = vsel %vm79, %v611, %v610
    %v613 = vsel %vm609, %v612, 0
    %v614 = vsel %vm394, %v613, 0
    %v615 = vand.u32 %v614, 65535
    %v616 = vshrl.u32 %v614, 16
    %v617 = vcvt.s32.f32 %v615
    %v618 = vcvt.s32.f32 %v616
    %619 = vadd.xlane.f32.xlu0 %v617
    %v620 = vpop.xlane.xlu0 %619
    %621 = vadd.xlane.f32.xlu0 %v618
    %v622 = vpop.xlane.xlu0 %621
    %v623 = vcvt.f32.s32 %v620
    %v624 = vcvt.f32.s32 %v622
    %v625 = vshll.u32 %v624, 16
    %v626 = vadd.s32 %v625, %v623
    %vm627 = vmxor %vm67, 1
    %vm628 = vmand %vm605, %vm627
    %v629 = vsel %vm67, %v626, %v597
    %v630 = vsel %vm628, %v414, %v629
    %vm631 = vcmp.eq.s32.totalorder %v76, 0
    %v632 = vsel %vm605, %v630, 0
    %633 = vset.pattern.permute.xlu0 0
    %634 = vperm.xlu0 %633, %v632
    %v635 = vpop.permute.xlu0 %634
    %v636 = vsel %vm631, %v635, %v603
    %637 = vst.msk [vmem:[#allocation2] sm:$0x3] %vm394, %v636
    // Predicated region
    $region22: #{device_forward.3} parent=1 // pred_check
      _
    $region23: #{device_forward.3} parent=1 // pred_check_branch
      %639 = sbr.rel (0) target = $region25
    $region24: #{device_forward.3} parent=1 // pred_region
      %641 = vsyncadd [#allocation3], 0
      %s643 = sshll.u32 [#allocation2], 4
      %s644 = int_to_ptr.vmem [resolvable:$true] %s643
      %s645 = sshll.u32 %s5, 4
      %s646 = int_to_ptr.hbm [resolvable:$true] %s645
      %648 = dma.vmem_to_hbm [thread:$0]  %s644, 32, %s646, [#allocation3]
    $region25: #{device_forward.3} parent=1 // pred_fallthru
      _
    // Predicated region
    $region26: #{device_forward.3} parent=1 // pred_check
      _
    $region27: #{device_forward.3} parent=1 // pred_check_branch
      %650 = sbr.rel (0) target = $region29
    $region28: #{device_forward.3} parent=1 // pred_region
      %652 = dma.done [#allocation3], 32
    $region29: #{device_forward.3} parent=1 // pred_fallthru
      _
    %653 = vsyncpa [#allocation3], 1

// kernel: device_forward.2
$region0: #{device_forward.2}
  #allocation0 [shape = 'u32[]', space=smem, size = 0x4, offset = 0x4, fixed_abs, tag = 'smem constant byte address 0x4 - core index']
  #allocation1 [shape = 'u32[72,128]{1,0:T(1,128)}', space=vmem, size = 0x9000, scoped, tag = 'internal scratch']
  #allocation2 [shape = 'f32[16,32]{1,0:T(8,128)}', space=vmem, size = 0x2000, scoped, tag = 'scratch operand']
  #allocation3 [shape = 'f32[16,32]{1,0:T(8,128)}', space=vmem, size = 0x2000, scoped, tag = 'scratch operand']
  %s0 = inlined_call_operand.vmem [shape: f32[16,32], index: 0, kind: input, shape index: {}]
  %s1 = inlined_call_operand.vmem [shape: f32[2,1,8], index: 1, kind: input, shape index: {}]
  %s2 = inlined_call_operand.vmem [shape: f32[1,32], index: 2, kind: input, shape index: {}]
  %s3 = inlined_call_operand.vmem [shape: f32[1,32], index: 3, kind: input, shape index: {}]
  %s4 = inlined_call_operand.vmem [shape: bf16[2,32,96], index: 4, kind: input, shape index: {}]
  %s5 = inlined_call_operand.vmem [shape: f32[2,1,96], index: 5, kind: input, shape index: {}]
  %s6 = inlined_call_operand.vmem [shape: bf16[2,32,32], index: 6, kind: input, shape index: {}]
  %s7 = inlined_call_operand.vmem [shape: f32[2,1,32], index: 7, kind: input, shape index: {}]
  %s8 = inlined_call_operand.vmem [shape: f32[2,1,32], index: 8, kind: input, shape index: {}]
  %s9 = inlined_call_operand.vmem [shape: f32[2,1,32], index: 9, kind: input, shape index: {}]
  %s10 = inlined_call_operand.vmem [shape: bf16[2,32,64], index: 10, kind: input, shape index: {}]
  %s11 = inlined_call_operand.vmem [shape: f32[2,1,64], index: 11, kind: input, shape index: {}]
  %s12 = inlined_call_operand.vmem [shape: bf16[2,64,32], index: 12, kind: input, shape index: {}]
  %s13 = inlined_call_operand.vmem [shape: f32[2,1,32], index: 13, kind: input, shape index: {}]
  %s14 = inlined_call_operand.vmem [shape: f32[2,1,32], index: 14, kind: input, shape index: {}]
  %s15 = inlined_call_operand.vmem [shape: f32[2,1,32], index: 15, kind: input, shape index: {}]
  %s16 = inlined_call_operand.vmem [shape: bf16[2,32,32], index: 16, kind: input, shape index: {}]
  %s17 = inlined_call_operand.vmem [shape: f32[1,32], index: 17, kind: input, shape index: {}]
  %s18 = inlined_call_operand.vmem [shape: bf16[32,8], index: 18, kind: input, shape index: {}]
  %s19 = inlined_call_operand.vmem [shape: f32[1,8], index: 19, kind: input, shape index: {}]
  %s20 = inlined_call_operand.vmem [shape: f32[16,8], index: 20, kind: output, shape index: {}]
  %s21 = sld [smem:[#allocation0]]
  $region121: #{device_forward.2} parent=0
    _
  %s23 = ssub.s32 1, %s21
  %s24 = scalar_select 0, %s23, %s21
  loop: start=0, step=1, limit=4
  $region2: #{device_forward.2} parent=0 // loop_pre_header
    _
  $region3: #{device_forward.2} parent=0 // loop_header
    %s26 = sphi 0, %s30
    %p27 = scmp.ge.s32.totalorder %s26, 4
    %s34 = sphi 0, %s34
    %s36 = sphi 0, %s34
    %s37 = sphi 0, %s36
    %s51 = sphi 0, %s37
    %s55 = sphi 0, %s55
    %s57 = sphi 0, %s55
    %s58 = sphi 0, %s57
    %s72 = sphi 0, %s58
    %s76 = sphi 0, %s76
    %s78 = sphi 0, %s76
    %s79 = sphi 0, %s78
    %s93 = sphi 0, %s79
    %s97 = sphi 0, %s97
    %s99 = sphi 0, %s97
    %s100 = sphi 0, %s99
    %s114 = sphi 0, %s100
    %s120 = sphi 0, %s122
    %s123 = sphi 0, %s120
    %s124 = sphi 0, %s123
    %s140 = sphi 0, %s124
    %s146 = sphi 0, %s148
    %s149 = sphi 0, %s146
    %s150 = sphi 0, %s149
    %s166 = sphi 0, %s150
    %s172 = sphi 0, %s174
    %s175 = sphi 0, %s172
    %s176 = sphi 0, %s175
    %s192 = sphi 0, %s176
    %s198 = sphi 0, %s200
    %s201 = sphi 0, %s198
    %s202 = sphi 0, %s201
    %s218 = sphi 0, %s202
    %s224 = sphi 0, %s226
    %s227 = sphi 0, %s224
    %s228 = sphi 0, %s227
    %s244 = sphi 0, %s228
    %s250 = sphi 0, %s252
    %s253 = sphi 0, %s250
    %s254 = sphi 0, %s253
    %s270 = sphi 0, %s254
    %s276 = sphi 0, %s278
    %s279 = sphi 0, %s276
    %s280 = sphi 0, %s279
    %s296 = sphi 0, %s280
    %s302 = sphi 0, %s304
    %s305 = sphi 0, %s302
    %s306 = sphi 0, %s305
    %s322 = sphi 0, %s306
    %s328 = sphi 0, %s330
    %s331 = sphi 0, %s328
    %s332 = sphi 0, %s331
    %s348 = sphi 0, %s332
    %s354 = sphi 0, %s356
    %s357 = sphi 0, %s354
    %s358 = sphi 0, %s357
    %s374 = sphi 0, %s358
    %s380 = sphi 0, %s382
    %s383 = sphi 0, %s380
    %s384 = sphi 0, %s383
    %s400 = sphi 0, %s384
    %s406 = sphi 0, %s408
    %s409 = sphi 0, %s406
    %s410 = sphi 0, %s409
    %s426 = sphi 0, %s410
    %s432 = sphi 0, %s434
    %s435 = sphi 0, %s432
    %s436 = sphi 0, %s435
    %s452 = sphi 0, %s436
    %s456 = sphi 0, %s456
    %s458 = sphi 0, %s456
    %s459 = sphi 0, %s458
    %s473 = sphi 0, %s459
    %s477 = sphi 0, %s477
    %s479 = sphi 0, %s477
    %s480 = sphi 0, %s479
    %s494 = sphi 0, %s480
    %s498 = sphi 0, %s498
    %s500 = sphi 0, %s498
    %s501 = sphi 0, %s500
    %s515 = sphi 0, %s501
    %s519 = sphi 0, %s519
    %s521 = sphi 0, %s519
    %s522 = sphi 0, %s521
    %s536 = sphi 0, %s522
  $region4: #{device_forward.2} parent=0 // loop_header_branch
    %29 = sbr.rel (%p27) target = $region8
  $region5: #{device_forward.2} parent=0 // loop_body
    %s31 = ssub.s32 %s26, 1
    %s32 = ssub.s32 %s26, 2
    %s33 = sadd.s32 %s26, 1
    %s35 = sadd.s32 %s34, 1
    %p38 = scmp.eq.s32.totalorder %s26, 1
    %p39 = scmp.ne.s32.totalorder %s34, %s36
    %p40 = scmp.eq.s32.totalorder %s26, 0
    %p41 = por %p39, %p40
    %p42 = scmp.ne.s32.totalorder %s34, %s36
    %p43 = scmp.eq.s32.totalorder %s31, 1
    %p44 = por %p42, %p43
    %p45 = scmp.ne.s32.totalorder %s36, %s37
    %p46 = scmp.eq.s32.totalorder %s31, 0
    %p47 = por %p45, %p46
    %p48 = scmp.ne.s32.totalorder %s36, %s37
    %p49 = scmp.eq.s32.totalorder %s32, 1
    %p50 = por %p48, %p49
    %p52 = scmp.ne.s32.totalorder %s37, %s51
    %p53 = scmp.eq.s32.totalorder %s32, 0
    %p54 = por %p52, %p53
    %s56 = sadd.s32 %s55, 1
    %p59 = scmp.eq.s32.totalorder %s26, 1
    %p60 = scmp.ne.s32.totalorder %s55, %s57
    %p61 = scmp.eq.s32.totalorder %s26, 0
    %p62 = por %p60, %p61
    %p63 = scmp.ne.s32.totalorder %s55, %s57
    %p64 = scmp.eq.s32.totalorder %s31, 1
    %p65 = por %p63, %p64
    %p66 = scmp.ne.s32.totalorder %s57, %s58
    %p67 = scmp.eq.s32.totalorder %s31, 0
    %p68 = por %p66, %p67
    %p69 = scmp.ne.s32.totalorder %s57, %s58
    %p70 = scmp.eq.s32.totalorder %s32, 1
    %p71 = por %p69, %p70
    %p73 = scmp.ne.s32.totalorder %s58, %s72
    %p74 = scmp.eq.s32.totalorder %s32, 0
    %p75 = por %p73, %p74
    %s77 = sadd.s32 %s76, 1
    %p80 = scmp.eq.s32.totalorder %s26, 1
    %p81 = scmp.ne.s32.totalorder %s76, %s78
    %p82 = scmp.eq.s32.totalorder %s26, 0
    %p83 = por %p81, %p82
    %p84 = scmp.ne.s32.totalorder %s76, %s78
    %p85 = scmp.eq.s32.totalorder %s31, 1
    %p86 = por %p84, %p85
    %p87 = scmp.ne.s32.totalorder %s78, %s79
    %p88 = scmp.eq.s32.totalorder %s31, 0
    %p89 = por %p87, %p88
    %p90 = scmp.ne.s32.totalorder %s78, %s79
    %p91 = scmp.eq.s32.totalorder %s32, 1
    %p92 = por %p90, %p91
    %p94 = scmp.ne.s32.totalorder %s79, %s93
    %p95 = scmp.eq.s32.totalorder %s32, 0
    %p96 = por %p94, %p95
    %s98 = sadd.s32 %s97, 1
    %p101 = scmp.eq.s32.totalorder %s26, 1
    %p102 = scmp.ne.s32.totalorder %s97, %s99
    %p103 = scmp.eq.s32.totalorder %s26, 0
    %p104 = por %p102, %p103
    %p105 = scmp.ne.s32.totalorder %s97, %s99
    %p106 = scmp.eq.s32.totalorder %s31, 1
    %p107 = por %p105, %p106
    %p108 = scmp.ne.s32.totalorder %s99, %s100
    %p109 = scmp.eq.s32.totalorder %s31, 0
    %p110 = por %p108, %p109
    %p111 = scmp.ne.s32.totalorder %s99, %s100
    %p112 = scmp.eq.s32.totalorder %s32, 1
    %p113 = por %p111, %p112
    %p115 = scmp.ne.s32.totalorder %s100, %s114
    %p116 = scmp.eq.s32.totalorder %s32, 0
    %p117 = por %p115, %p116
    %s118 = ssub.s32 %s26, %s33
    %p119 = scmp.eq.s32.totalorder %s118, 0
    %s121 = sadd.s32 %s120, 1
    %s122 = scalar_select %p119, %s120, %s121
    %p125 = pneg %p119
    %p126 = scmp.eq.s32.totalorder %s26, 1
    %p127 = por %p125, %p126
    %p128 = scmp.ne.s32.totalorder %s120, %s123
    %p129 = scmp.eq.s32.totalorder %s26, 0
    %p130 = por %p128, %p129
    %p131 = scmp.ne.s32.totalorder %s120, %s123
    %p132 = scmp.eq.s32.totalorder %s31, 1
    %p133 = por %p131, %p132
    %p134 = scmp.ne.s32.totalorder %s123, %s124
    %p135 = scmp.eq.s32.totalorder %s31, 0
    %p136 = por %p134, %p135
    %p137 = scmp.ne.s32.totalorder %s123, %s124
    %p138 = scmp.eq.s32.totalorder %s32, 1
    %p139 = por %p137, %p138
    %p141 = scmp.ne.s32.totalorder %s124, %s140
    %p142 = scmp.eq.s32.totalorder %s32, 0
    %p143 = por %p141, %p142
    %s144 = ssub.s32 %s26, %s33
    %p145 = scmp.eq.s32.totalorder %s144, 0
    %s147 = sadd.s32 %s146, 1
    %s148 = scalar_select %p145, %s146, %s147
    %p151 = pneg %p145
    %p152 = scmp.eq.s32.totalorder %s26, 1
    %p153 = por %p151, %p152
    %p154 = scmp.ne.s32.totalorder %s146, %s149
    %p155 = scmp.eq.s32.totalorder %s26, 0
    %p156 = por %p154, %p155
    %p157 = scmp.ne.s32.totalorder %s146, %s149
    %p158 = scmp.eq.s32.totalorder %s31, 1
    %p159 = por %p157, %p158
    %p160 = scmp.ne.s32.totalorder %s149, %s150
    %p161 = scmp.eq.s32.totalorder %s31, 0
    %p162 = por %p160, %p161
    %p163 = scmp.ne.s32.totalorder %s149, %s150
    %p164 = scmp.eq.s32.totalorder %s32, 1
    %p165 = por %p163, %p164
    %p167 = scmp.ne.s32.totalorder %s150, %s166
    %p168 = scmp.eq.s32.totalorder %s32, 0
    %p169 = por %p167, %p168
    %s170 = ssub.s32 %s26, %s33
    %p171 = scmp.eq.s32.totalorder %s170, 0
    %s173 = sadd.s32 %s172, 1
    %s174 = scalar_select %p171, %s172, %s173
    %p177 = pneg %p171
    %p178 = scmp.eq.s32.totalorder %s26, 1
    %p179 = por %p177, %p178
    %p180 = scmp.ne.s32.totalorder %s172, %s175
    %p181 = scmp.eq.s32.totalorder %s26, 0
    %p182 = por %p180, %p181
    %p183 = scmp.ne.s32.totalorder %s172, %s175
    %p184 = scmp.eq.s32.totalorder %s31, 1
    %p185 = por %p183, %p184
    %p186 = scmp.ne.s32.totalorder %s175, %s176
    %p187 = scmp.eq.s32.totalorder %s31, 0
    %p188 = por %p186, %p187
    %p189 = scmp.ne.s32.totalorder %s175, %s176
    %p190 = scmp.eq.s32.totalorder %s32, 1
    %p191 = por %p189, %p190
    %p193 = scmp.ne.s32.totalorder %s176, %s192
    %p194 = scmp.eq.s32.totalorder %s32, 0
    %p195 = por %p193, %p194
    %s196 = ssub.s32 %s26, %s33
    %p197 = scmp.eq.s32.totalorder %s196, 0
    %s199 = sadd.s32 %s198, 1
    %s200 = scalar_select %p197, %s198, %s199
    %p203 = pneg %p197
    %p204 = scmp.eq.s32.totalorder %s26, 1
    %p205 = por %p203, %p204
    %p206 = scmp.ne.s32.totalorder %s198, %s201
    %p207 = scmp.eq.s32.totalorder %s26, 0
    %p208 = por %p206, %p207
    %p209 = scmp.ne.s32.totalorder %s198, %s201
    %p210 = scmp.eq.s32.totalorder %s31, 1
    %p211 = por %p209, %p210
    %p212 = scmp.ne.s32.totalorder %s201, %s202
    %p213 = scmp.eq.s32.totalorder %s31, 0
    %p214 = por %p212, %p213
    %p215 = scmp.ne.s32.totalorder %s201, %s202
    %p216 = scmp.eq.s32.totalorder %s32, 1
    %p217 = por %p215, %p216
    %p219 = scmp.ne.s32.totalorder %s202, %s218
    %p220 = scmp.eq.s32.totalorder %s32, 0
    %p221 = por %p219, %p220
    %s222 = ssub.s32 %s26, %s33
    %p223 = scmp.eq.s32.totalorder %s222, 0
    %s225 = sadd.s32 %s224, 1
    %s226 = scalar_select %p223, %s224, %s225
    %p229 = pneg %p223
    %p230 = scmp.eq.s32.totalorder %s26, 1
    %p231 = por %p229, %p230
    %p232 = scmp.ne.s32.totalorder %s224, %s227
    %p233 = scmp.eq.s32.totalorder %s26, 0
    %p234 = por %p232, %p233
    %p235 = scmp.ne.s32.totalorder %s224, %s227
    %p236 = scmp.eq.s32.totalorder %s31, 1
    %p237 = por %p235, %p236
    %p238 = scmp.ne.s32.totalorder %s227, %s228
    %p239 = scmp.eq.s32.totalorder %s31, 0
    %p240 = por %p238, %p239
    %p241 = scmp.ne.s32.totalorder %s227, %s228
    %p242 = scmp.eq.s32.totalorder %s32, 1
    %p243 = por %p241, %p242
    %p245 = scmp.ne.s32.totalorder %s228, %s244
    %p246 = scmp.eq.s32.totalorder %s32, 0
    %p247 = por %p245, %p246
    %s248 = ssub.s32 %s26, %s33
    %p249 = scmp.eq.s32.totalorder %s248, 0
    %s251 = sadd.s32 %s250, 1
    %s252 = scalar_select %p249, %s250, %s251
    %p255 = pneg %p249
    %p256 = scmp.eq.s32.totalorder %s26, 1
    %p257 = por %p255, %p256
    %p258 = scmp.ne.s32.totalorder %s250, %s253
    %p259 = scmp.eq.s32.totalorder %s26, 0
    %p260 = por %p258, %p259
    %p261 = scmp.ne.s32.totalorder %s250, %s253
    %p262 = scmp.eq.s32.totalorder %s31, 1
    %p263 = por %p261, %p262
    %p264 = scmp.ne.s32.totalorder %s253, %s254
    %p265 = scmp.eq.s32.totalorder %s31, 0
    %p266 = por %p264, %p265
    %p267 = scmp.ne.s32.totalorder %s253, %s254
    %p268 = scmp.eq.s32.totalorder %s32, 1
    %p269 = por %p267, %p268
    %p271 = scmp.ne.s32.totalorder %s254, %s270
    %p272 = scmp.eq.s32.totalorder %s32, 0
    %p273 = por %p271, %p272
    %s274 = ssub.s32 %s26, %s33
    %p275 = scmp.eq.s32.totalorder %s274, 0
    %s277 = sadd.s32 %s276, 1
    %s278 = scalar_select %p275, %s276, %s277
    %p281 = pneg %p275
    %p282 = scmp.eq.s32.totalorder %s26, 1
    %p283 = por %p281, %p282
    %p284 = scmp.ne.s32.totalorder %s276, %s279
    %p285 = scmp.eq.s32.totalorder %s26, 0
    %p286 = por %p284, %p285
    %p287 = scmp.ne.s32.totalorder %s276, %s279
    %p288 = scmp.eq.s32.totalorder %s31, 1
    %p289 = por %p287, %p288
    %p290 = scmp.ne.s32.totalorder %s279, %s280
    %p291 = scmp.eq.s32.totalorder %s31, 0
    %p292 = por %p290, %p291
    %p293 = scmp.ne.s32.totalorder %s279, %s280
    %p294 = scmp.eq.s32.totalorder %s32, 1
    %p295 = por %p293, %p294
    %p297 = scmp.ne.s32.totalorder %s280, %s296
    %p298 = scmp.eq.s32.totalorder %s32, 0
    %p299 = por %p297, %p298
    %s300 = ssub.s32 %s26, %s33
    %p301 = scmp.eq.s32.totalorder %s300, 0
    %s303 = sadd.s32 %s302, 1
    %s304 = scalar_select %p301, %s302, %s303
    %p307 = pneg %p301
    %p308 = scmp.eq.s32.totalorder %s26, 1
    %p309 = por %p307, %p308
    %p310 = scmp.ne.s32.totalorder %s302, %s305
    %p311 = scmp.eq.s32.totalorder %s26, 0
    %p312 = por %p310, %p311
    %p313 = scmp.ne.s32.totalorder %s302, %s305
    %p314 = scmp.eq.s32.totalorder %s31, 1
    %p315 = por %p313, %p314
    %p316 = scmp.ne.s32.totalorder %s305, %s306
    %p317 = scmp.eq.s32.totalorder %s31, 0
    %p318 = por %p316, %p317
    %p319 = scmp.ne.s32.totalorder %s305, %s306
    %p320 = scmp.eq.s32.totalorder %s32, 1
    %p321 = por %p319, %p320
    %p323 = scmp.ne.s32.totalorder %s306, %s322
    %p324 = scmp.eq.s32.totalorder %s32, 0
    %p325 = por %p323, %p324
    %s326 = ssub.s32 %s26, %s33
    %p327 = scmp.eq.s32.totalorder %s326, 0
    %s329 = sadd.s32 %s328, 1
    %s330 = scalar_select %p327, %s328, %s329
    %p333 = pneg %p327
    %p334 = scmp.eq.s32.totalorder %s26, 1
    %p335 = por %p333, %p334
    %p336 = scmp.ne.s32.totalorder %s328, %s331
    %p337 = scmp.eq.s32.totalorder %s26, 0
    %p338 = por %p336, %p337
    %p339 = scmp.ne.s32.totalorder %s328, %s331
    %p340 = scmp.eq.s32.totalorder %s31, 1
    %p341 = por %p339, %p340
    %p342 = scmp.ne.s32.totalorder %s331, %s332
    %p343 = scmp.eq.s32.totalorder %s31, 0
    %p344 = por %p342, %p343
    %p345 = scmp.ne.s32.totalorder %s331, %s332
    %p346 = scmp.eq.s32.totalorder %s32, 1
    %p347 = por %p345, %p346
    %p349 = scmp.ne.s32.totalorder %s332, %s348
    %p350 = scmp.eq.s32.totalorder %s32, 0
    %p351 = por %p349, %p350
    %s352 = ssub.s32 %s26, %s33
    %p353 = scmp.eq.s32.totalorder %s352, 0
    %s355 = sadd.s32 %s354, 1
    %s356 = scalar_select %p353, %s354, %s355
    %p359 = pneg %p353
    %p360 = scmp.eq.s32.totalorder %s26, 1
    %p361 = por %p359, %p360
    %p362 = scmp.ne.s32.totalorder %s354, %s357
    %p363 = scmp.eq.s32.totalorder %s26, 0
    %p364 = por %p362, %p363
    %p365 = scmp.ne.s32.totalorder %s354, %s357
    %p366 = scmp.eq.s32.totalorder %s31, 1
    %p367 = por %p365, %p366
    %p368 = scmp.ne.s32.totalorder %s357, %s358
    %p369 = scmp.eq.s32.totalorder %s31, 0
    %p370 = por %p368, %p369
    %p371 = scmp.ne.s32.totalorder %s357, %s358
    %p372 = scmp.eq.s32.totalorder %s32, 1
    %p373 = por %p371, %p372
    %p375 = scmp.ne.s32.totalorder %s358, %s374
    %p376 = scmp.eq.s32.totalorder %s32, 0
    %p377 = por %p375, %p376
    %s378 = ssub.s32 %s26, %s33
    %p379 = scmp.eq.s32.totalorder %s378, 0
    %s381 = sadd.s32 %s380, 1
    %s382 = scalar_select %p379, %s380, %s381
    %p385 = pneg %p379
    %p386 = scmp.eq.s32.totalorder %s26, 1
    %p387 = por %p385, %p386
    %p388 = scmp.ne.s32.totalorder %s380, %s383
    %p389 = scmp.eq.s32.totalorder %s26, 0
    %p390 = por %p388, %p389
    %p391 = scmp.ne.s32.totalorder %s380, %s383
    %p392 = scmp.eq.s32.totalorder %s31, 1
    %p393 = por %p391, %p392
    %p394 = scmp.ne.s32.totalorder %s383, %s384
    %p395 = scmp.eq.s32.totalorder %s31, 0
    %p396 = por %p394, %p395
    %p397 = scmp.ne.s32.totalorder %s383, %s384
    %p398 = scmp.eq.s32.totalorder %s32, 1
    %p399 = por %p397, %p398
    %p401 = scmp.ne.s32.totalorder %s384, %s400
    %p402 = scmp.eq.s32.totalorder %s32, 0
    %p403 = por %p401, %p402
    %s404 = ssub.s32 %s26, %s33
    %p405 = scmp.eq.s32.totalorder %s404, 0
    %s407 = sadd.s32 %s406, 1
    %s408 = scalar_select %p405, %s406, %s407
    %p411 = pneg %p405
    %p412 = scmp.eq.s32.totalorder %s26, 1
    %p413 = por %p411, %p412
    %p414 = scmp.ne.s32.totalorder %s406, %s409
    %p415 = scmp.eq.s32.totalorder %s26, 0
    %p416 = por %p414, %p415
    %p417 = scmp.ne.s32.totalorder %s406, %s409
    %p418 = scmp.eq.s32.totalorder %s31, 1
    %p419 = por %p417, %p418
    %p420 = scmp.ne.s32.totalorder %s409, %s410
    %p421 = scmp.eq.s32.totalorder %s31, 0
    %p422 = por %p420, %p421
    %p423 = scmp.ne.s32.totalorder %s409, %s410
    %p424 = scmp.eq.s32.totalorder %s32, 1
    %p425 = por %p423, %p424
    %p427 = scmp.ne.s32.totalorder %s410, %s426
    %p428 = scmp.eq.s32.totalorder %s32, 0
    %p429 = por %p427, %p428
    %s430 = ssub.s32 %s26, %s33
    %p431 = scmp.eq.s32.totalorder %s430, 0
    %s433 = sadd.s32 %s432, 1
    %s434 = scalar_select %p431, %s432, %s433
    %p437 = pneg %p431
    %p438 = scmp.eq.s32.totalorder %s26, 1
    %p439 = por %p437, %p438
    %p440 = scmp.ne.s32.totalorder %s432, %s435
    %p441 = scmp.eq.s32.totalorder %s26, 0
    %p442 = por %p440, %p441
    %p443 = scmp.ne.s32.totalorder %s432, %s435
    %p444 = scmp.eq.s32.totalorder %s31, 1
    %p445 = por %p443, %p444
    %p446 = scmp.ne.s32.totalorder %s435, %s436
    %p447 = scmp.eq.s32.totalorder %s31, 0
    %p448 = por %p446, %p447
    %p449 = scmp.ne.s32.totalorder %s435, %s436
    %p450 = scmp.eq.s32.totalorder %s32, 1
    %p451 = por %p449, %p450
    %p453 = scmp.ne.s32.totalorder %s436, %s452
    %p454 = scmp.eq.s32.totalorder %s32, 0
    %p455 = por %p453, %p454
    %s457 = sadd.s32 %s456, 1
    %p460 = scmp.eq.s32.totalorder %s26, 1
    %p461 = scmp.ne.s32.totalorder %s456, %s458
    %p462 = scmp.eq.s32.totalorder %s26, 0
    %p463 = por %p461, %p462
    %p464 = scmp.ne.s32.totalorder %s456, %s458
    %p465 = scmp.eq.s32.totalorder %s31, 1
    %p466 = por %p464, %p465
    %p467 = scmp.ne.s32.totalorder %s458, %s459
    %p468 = scmp.eq.s32.totalorder %s31, 0
    %p469 = por %p467, %p468
    %p470 = scmp.ne.s32.totalorder %s458, %s459
    %p471 = scmp.eq.s32.totalorder %s32, 1
    %p472 = por %p470, %p471
    %p474 = scmp.ne.s32.totalorder %s459, %s473
    %p475 = scmp.eq.s32.totalorder %s32, 0
    %p476 = por %p474, %p475
    %s478 = sadd.s32 %s477, 1
    %p481 = scmp.eq.s32.totalorder %s26, 1
    %p482 = scmp.ne.s32.totalorder %s477, %s479
    %p483 = scmp.eq.s32.totalorder %s26, 0
    %p484 = por %p482, %p483
    %p485 = scmp.ne.s32.totalorder %s477, %s479
    %p486 = scmp.eq.s32.totalorder %s31, 1
    %p487 = por %p485, %p486
    %p488 = scmp.ne.s32.totalorder %s479, %s480
    %p489 = scmp.eq.s32.totalorder %s31, 0
    %p490 = por %p488, %p489
    %p491 = scmp.ne.s32.totalorder %s479, %s480
    %p492 = scmp.eq.s32.totalorder %s32, 1
    %p493 = por %p491, %p492
    %p495 = scmp.ne.s32.totalorder %s480, %s494
    %p496 = scmp.eq.s32.totalorder %s32, 0
    %p497 = por %p495, %p496
    %s499 = sadd.s32 %s498, 1
    %p502 = scmp.eq.s32.totalorder %s26, 1
    %p503 = scmp.ne.s32.totalorder %s498, %s500
    %p504 = scmp.eq.s32.totalorder %s26, 0
    %p505 = por %p503, %p504
    %p506 = scmp.ne.s32.totalorder %s498, %s500
    %p507 = scmp.eq.s32.totalorder %s31, 1
    %p508 = por %p506, %p507
    %p509 = scmp.ne.s32.totalorder %s500, %s501
    %p510 = scmp.eq.s32.totalorder %s31, 0
    %p511 = por %p509, %p510
    %p512 = scmp.ne.s32.totalorder %s500, %s501
    %p513 = scmp.eq.s32.totalorder %s32, 1
    %p514 = por %p512, %p513
    %p516 = scmp.ne.s32.totalorder %s501, %s515
    %p517 = scmp.eq.s32.totalorder %s32, 0
    %p518 = por %p516, %p517
    %s520 = sadd.s32 %s519, 1
    %p523 = scmp.eq.s32.totalorder %s26, 1
    %p524 = scmp.ne.s32.totalorder %s519, %s521
    %p525 = scmp.eq.s32.totalorder %s26, 0
    %p526 = por %p524, %p525
    %p527 = scmp.ne.s32.totalorder %s519, %s521
    %p528 = scmp.eq.s32.totalorder %s31, 1
    %p529 = por %p527, %p528
    %p530 = scmp.ne.s32.totalorder %s521, %s522
    %p531 = scmp.eq.s32.totalorder %s31, 0
    %p532 = por %p530, %p531
    %p533 = scmp.ne.s32.totalorder %s521, %s522
    %p534 = scmp.eq.s32.totalorder %s32, 1
    %p535 = por %p533, %p534
    %p537 = scmp.ne.s32.totalorder %s522, %s536
    %p538 = scmp.eq.s32.totalorder %s32, 0
    %p539 = por %p537, %p538
    %p540 = scmp.le.s32.totalorder 1, %s26
    %p541 = scmp.lt.s32.totalorder %s26, 3
    %p542 = pnand %p540, %p541
    %p543 = pneg %p542
    // Predicated region
    $region9: #{device_forward.2} parent=5 // pred_check
      _
    $region10: #{device_forward.2} parent=5 // pred_check_branch
      %545 = sbr.rel (%p542) target = $region12
    $region11: #{device_forward.2} parent=5 // pred_region
      %s546 = ssub.s32 %s26, 1
      // Predicated region
      $region13: #{device_forward.2} parent=11 // pred_check
        %p547 = pneg %p47
      $region14: #{device_forward.2} parent=11 // pred_check_branch
        %549 = sbr.rel (%p547) target = $region16
      $region15: #{device_forward.2} parent=11 // pred_region
        _
      $region16: #{device_forward.2} parent=11 // pred_fallthru
        _
      // Predicated region
      $region17: #{device_forward.2} parent=11 // pred_check
        %p550 = pneg %p68
      $region18: #{device_forward.2} parent=11 // pred_check_branch
        %552 = sbr.rel (%p550) target = $region20
      $region19: #{device_forward.2} parent=11 // pred_region
        _
      $region20: #{device_forward.2} parent=11 // pred_fallthru
        _
      // Predicated region
      $region21: #{device_forward.2} parent=11 // pred_check
        %p553 = pneg %p89
      $region22: #{device_forward.2} parent=11 // pred_check_branch
        %555 = sbr.rel (%p553) target = $region24
      $region23: #{device_forward.2} parent=11 // pred_region
        _
      $region24: #{device_forward.2} parent=11 // pred_fallthru
        _
      // Predicated region
      $region25: #{device_forward.2} parent=11 // pred_check
        %p556 = pneg %p110
      $region26: #{device_forward.2} parent=11 // pred_check_branch
        %558 = sbr.rel (%p556) target = $region28
      $region27: #{device_forward.2} parent=11 // pred_region
        _
      $region28: #{device_forward.2} parent=11 // pred_fallthru
        _
      // Predicated region
      $region29: #{device_forward.2} parent=11 // pred_check
        %p559 = pneg %p469
      $region30: #{device_forward.2} parent=11 // pred_check_branch
        %561 = sbr.rel (%p559) target = $region32
      $region31: #{device_forward.2} parent=11 // pred_region
        _
      $region32: #{device_forward.2} parent=11 // pred_fallthru
        _
      // Predicated region
      $region33: #{device_forward.2} parent=11 // pred_check
        %p562 = pneg %p490
      $region34: #{device_forward.2} parent=11 // pred_check_branch
        %564 = sbr.rel (%p562) target = $region36
      $region35: #{device_forward.2} parent=11 // pred_region
        _
      $region36: #{device_forward.2} parent=11 // pred_fallthru
        _
      // Predicated region
      $region37: #{device_forward.2} parent=11 // pred_check
        %p565 = pneg %p511
      $region38: #{device_forward.2} parent=11 // pred_check_branch
        %567 = sbr.rel (%p565) target = $region40
      $region39: #{device_forward.2} parent=11 // pred_region
        _
      $region40: #{device_forward.2} parent=11 // pred_fallthru
        _
    $region12: #{device_forward.2} parent=5 // pred_fallthru
      _
    %p568 = scmp.lt.s32.totalorder %s26, 2
    // Predicated region
    $region41: #{device_forward.2} parent=5 // pred_check
      %p569 = pneg %p568
    $region42: #{device_forward.2} parent=5 // pred_check_branch
      %571 = sbr.rel (%p569) target = $region44
    $region43: #{device_forward.2} parent=5 // pred_region
      // Predicated region
      $region45: #{device_forward.2} parent=43 // pred_check
        %p572 = pneg %p130
      $region46: #{device_forward.2} parent=43 // pred_check_branch
        %574 = sbr.rel (%p572) target = $region48
      $region47: #{device_forward.2} parent=43 // pred_region
        %p575 = scmp.lt.s32.totalorder %s26, 1
        %s576 = scalar_select %p575, %s26, 1
        %s577 = smul.addr %s576, 4
        %s578 = smul.addr %s577, 4
        %s579 = scalar_lea.vmem %s4, %s578
      $region48: #{device_forward.2} parent=43 // pred_fallthru
        _
      // Predicated region
      $region49: #{device_forward.2} parent=43 // pred_check
        %p580 = pneg %p156
      $region50: #{device_forward.2} parent=43 // pred_check_branch
        %582 = sbr.rel (%p580) target = $region52
      $region51: #{device_forward.2} parent=43 // pred_region
        %p583 = scmp.lt.s32.totalorder %s26, 1
        %s584 = scalar_select %p583, %s26, 1
        %s585 = scalar_lea.vmem %s5, %s584
      $region52: #{device_forward.2} parent=43 // pred_fallthru
        _
      // Predicated region
      $region53: #{device_forward.2} parent=43 // pred_check
        %p586 = pneg %p182
      $region54: #{device_forward.2} parent=43 // pred_check_branch
        %588 = sbr.rel (%p586) target = $region56
      $region55: #{device_forward.2} parent=43 // pred_region
        %p589 = scmp.lt.s32.totalorder %s26, 1
        %s590 = scalar_select %p589, %s26, 1
        %s591 = smul.addr %s590, 4
        %s592 = smul.addr %s591, 4
        %s593 = scalar_lea.vmem %s6, %s592
      $region56: #{device_forward.2} parent=43 // pred_fallthru
        _
      // Predicated region
      $region57: #{device_forward.2} parent=43 // pred_check
        %p594 = pneg %p208
      $region58: #{device_forward.2} parent=43 // pred_check_branch
        %596 = sbr.rel (%p594) target = $region60
      $region59: #{device_forward.2} parent=43 // pred_region
        %p597 = scmp.lt.s32.totalorder %s26, 1
        %s598 = scalar_select %p597, %s26, 1
        %s599 = scalar_lea.vmem %s7, %s598
      $region60: #{device_forward.2} parent=43 // pred_fallthru
        _
      // Predicated region
      $region61: #{device_forward.2} parent=43 // pred_check
        %p600 = pneg %p234
      $region62: #{device_forward.2} parent=43 // pred_check_branch
        %602 = sbr.rel (%p600) target = $region64
      $region63: #{device_forward.2} parent=43 // pred_region
        %p603 = scmp.lt.s32.totalorder %s26, 1
        %s604 = scalar_select %p603, %s26, 1
        %s605 = scalar_lea.vmem %s8, %s604
      $region64: #{device_forward.2} parent=43 // pred_fallthru
        _
      // Predicated region
      $region65: #{device_forward.2} parent=43 // pred_check
        %p606 = pneg %p260
      $region66: #{device_forward.2} parent=43 // pred_check_branch
        %608 = sbr.rel (%p606) target = $region68
      $region67: #{device_forward.2} parent=43 // pred_region
        %p609 = scmp.lt.s32.totalorder %s26, 1
        %s610 = scalar_select %p609, %s26, 1
        %s611 = scalar_lea.vmem %s9, %s610
      $region68: #{device_forward.2} parent=43 // pred_fallthru
        _
      // Predicated region
      $region69: #{device_forward.2} parent=43 // pred_check
        %p612 = pneg %p286
      $region70: #{device_forward.2} parent=43 // pred_check_branch
        %614 = sbr.rel (%p612) target = $region72
      $region71: #{device_forward.2} parent=43 // pred_region
        %p615 = scmp.lt.s32.totalorder %s26, 1
        %s616 = scalar_select %p615, %s26, 1
        %s617 = smul.addr %s616, 4
        %s618 = smul.addr %s617, 4
        %s619 = scalar_lea.vmem %s10, %s618
      $region72: #{device_forward.2} parent=43 // pred_fallthru
        _
      // Predicated region
      $region73: #{device_forward.2} parent=43 // pred_check
        %p620 = pneg %p312
      $region74: #{device_forward.2} parent=43 // pred_check_branch
        %622 = sbr.rel (%p620) target = $region76
      $region75: #{device_forward.2} parent=43 // pred_region
        %p623 = scmp.lt.s32.totalorder %s26, 1
        %s624 = scalar_select %p623, %s26, 1
        %s625 = scalar_lea.vmem %s11, %s624
      $region76: #{device_forward.2} parent=43 // pred_fallthru
        _
      // Predicated region
      $region77: #{device_forward.2} parent=43 // pred_check
        %p626 = pneg %p338
      $region78: #{device_forward.2} parent=43 // pred_check_branch
        %628 = sbr.rel (%p626) target = $region80
      $region79: #{device_forward.2} parent=43 // pred_region
        %p629 = scmp.lt.s32.totalorder %s26, 1
        %s630 = scalar_select %p629, %s26, 1
        %s631 = smul.addr %s630, 8
        %s632 = smul.addr %s631, 4
        %s633 = scalar_lea.vmem %s12, %s632
      $region80: #{device_forward.2} parent=43 // pred_fallthru
        _
      // Predicated region
      $region81: #{device_forward.2} parent=43 // pred_check
        %p634 = pneg %p364
      $region82: #{device_forward.2} parent=43 // pred_check_branch
        %636 = sbr.rel (%p634) target = $region84
      $region83: #{device_forward.2} parent=43 // pred_region
        %p637 = scmp.lt.s32.totalorder %s26, 1
        %s638 = scalar_select %p637, %s26, 1
        %s639 = scalar_lea.vmem %s13, %s638
      $region84: #{device_forward.2} parent=43 // pred_fallthru
        _
      // Predicated region
      $region85: #{device_forward.2} parent=43 // pred_check
        %p640 = pneg %p390
      $region86: #{device_forward.2} parent=43 // pred_check_branch
        %642 = sbr.rel (%p640) target = $region88
      $region87: #{device_forward.2} parent=43 // pred_region
        %p643 = scmp.lt.s32.totalorder %s26, 1
        %s644 = scalar_select %p643, %s26, 1
        %s645 = scalar_lea.vmem %s14, %s644
      $region88: #{device_forward.2} parent=43 // pred_fallthru
        _
      // Predicated region
      $region89: #{device_forward.2} parent=43 // pred_check
        %p646 = pneg %p416
      $region90: #{device_forward.2} parent=43 // pred_check_branch
        %648 = sbr.rel (%p646) target = $region92
      $region91: #{device_forward.2} parent=43 // pred_region
        %p649 = scmp.lt.s32.totalorder %s26, 1
        %s650 = scalar_select %p649, %s26, 1
        %s651 = scalar_lea.vmem %s15, %s650
      $region92: #{device_forward.2} parent=43 // pred_fallthru
        _
      // Predicated region
      $region93: #{device_forward.2} parent=43 // pred_check
        %p652 = pneg %p442
      $region94: #{device_forward.2} parent=43 // pred_check_branch
        %654 = sbr.rel (%p652) target = $region96
      $region95: #{device_forward.2} parent=43 // pred_region
        %p655 = scmp.lt.s32.totalorder %s26, 1
        %s656 = scalar_select %p655, %s26, 1
        %s657 = smul.addr %s656, 4
        %s658 = smul.addr %s657, 4
        %s659 = scalar_lea.vmem %s16, %s658
      $region96: #{device_forward.2} parent=43 // pred_fallthru
        _
    $region44: #{device_forward.2} parent=5 // pred_fallthru
      _
    %p660 = scmp.le.s32.totalorder 1, %s26
    %p661 = scmp.lt.s32.totalorder %s26, 3
    %p662 = pnand %p660, %p661
    %p663 = pneg %p662
    // Predicated region
    $region97: #{device_forward.2} parent=5 // pred_check
      _
    $region98: #{device_forward.2} parent=5 // pred_check_branch
      %665 = sbr.rel (%p662) target = $region100
    $region99: #{device_forward.2} parent=5 // pred_region
      %s666 = ssub.s32 %s26, 1
      %p667 = pneg %p47
      %p668 = pneg %p44
      %p669 = pneg %p68
      %p670 = pneg %p65
      %p671 = pneg %p89
      %p672 = pneg %p86
      %p673 = pneg %p110
      %p674 = pneg %p107
      %p675 = scmp.lt.s32.totalorder %s31, 1
      %s676 = scalar_select %p675, %s31, 1
      %s677 = smul.addr %s676, 4
      %s678 = smul.addr %s677, 4
      %s679 = scalar_lea.vmem %s4, %s678
      %p680 = pneg %p136
      %p681 = pneg %p133
      %p682 = scmp.lt.s32.totalorder %s31, 1
      %s683 = scalar_select %p682, %s31, 1
      %s684 = scalar_lea.vmem %s5, %s683
      %p685 = pneg %p162
      %p686 = pneg %p159
      %p687 = scmp.lt.s32.totalorder %s31, 1
      %s688 = scalar_select %p687, %s31, 1
      %s689 = smul.addr %s688, 4
      %s690 = smul.addr %s689, 4
      %s691 = scalar_lea.vmem %s6, %s690
      %p692 = pneg %p188
      %p693 = pneg %p185
      %p694 = scmp.lt.s32.totalorder %s31, 1
      %s695 = scalar_select %p694, %s31, 1
      %s696 = scalar_lea.vmem %s7, %s695
      %p697 = pneg %p214
      %p698 = pneg %p211
      %p699 = scmp.lt.s32.totalorder %s31, 1
      %s700 = scalar_select %p699, %s31, 1
      %s701 = scalar_lea.vmem %s8, %s700
      %p702 = pneg %p240
      %p703 = pneg %p237
      %p704 = scmp.lt.s32.totalorder %s31, 1
      %s705 = scalar_select %p704, %s31, 1
      %s706 = scalar_lea.vmem %s9, %s705
      %p707 = pneg %p266
      %p708 = pneg %p263
      %p709 = scmp.lt.s32.totalorder %s31, 1
      %s710 = scalar_select %p709, %s31, 1
      %s711 = smul.addr %s710, 4
      %s712 = smul.addr %s711, 4
      %s713 = scalar_lea.vmem %s10, %s712
      %p714 = pneg %p292
      %p715 = pneg %p289
      %p716 = scmp.lt.s32.totalorder %s31, 1
      %s717 = scalar_select %p716, %s31, 1
      %s718 = scalar_lea.vmem %s11, %s717
      %p719 = pneg %p318
      %p720 = pneg %p315
      %p721 = scmp.lt.s32.totalorder %s31, 1
      %s722 = scalar_select %p721, %s31, 1
      %s723 = smul.addr %s722, 8
      %s724 = smul.addr %s723, 4
      %s725 = scalar_lea.vmem %s12, %s724
      %p726 = pneg %p344
      %p727 = pneg %p341
      %p728 = scmp.lt.s32.totalorder %s31, 1
      %s729 = scalar_select %p728, %s31, 1
      %s730 = scalar_lea.vmem %s13, %s729
      %p731 = pneg %p370
      %p732 = pneg %p367
      %p733 = scmp.lt.s32.totalorder %s31, 1
      %s734 = scalar_select %p733, %s31, 1
      %s735 = scalar_lea.vmem %s14, %s734
      %p736 = pneg %p396
      %p737 = pneg %p393
      %p738 = scmp.lt.s32.totalorder %s31, 1
      %s739 = scalar_select %p738, %s31, 1
      %s740 = scalar_lea.vmem %s15, %s739
      %p741 = pneg %p422
      %p742 = pneg %p419
      %p743 = scmp.lt.s32.totalorder %s31, 1
      %s744 = scalar_select %p743, %s31, 1
      %s745 = smul.addr %s744, 4
      %s746 = smul.addr %s745, 4
      %s747 = scalar_lea.vmem %s16, %s746
      %p748 = pneg %p448
      %p749 = pneg %p445
      %p750 = pneg %p469
      %p751 = pneg %p466
      %p752 = pneg %p490
      %p753 = pneg %p487
      %p754 = pneg %p511
      %p755 = pneg %p508
      %p756 = pneg %p532
      %p757 = pneg %p529
      %p758 = scmp.lt.s32.totalorder %s31, 1
      %s759 = scalar_select %p758, %s31, 1
      %s760 = smul.addr %s759, 4
      %s761 = smul.addr %s760, 4
      %s762 = scalar_lea.vmem %s4, %s761
      %p763 = scmp.lt.s32.totalorder %s31, 1
      %s764 = scalar_select %p763, %s31, 1
      %s765 = scalar_lea.vmem %s5, %s764
      %p766 = scmp.lt.s32.totalorder %s31, 1
      %s767 = scalar_select %p766, %s31, 1
      %s768 = smul.addr %s767, 4
      %s769 = smul.addr %s768, 4
      %s770 = scalar_lea.vmem %s6, %s769
      %p771 = scmp.lt.s32.totalorder %s31, 1
      %s772 = scalar_select %p771, %s31, 1
      %s773 = scalar_lea.vmem %s7, %s772
      %p774 = scmp.lt.s32.totalorder %s31, 1
      %s775 = scalar_select %p774, %s31, 1
      %s776 = scalar_lea.vmem %s8, %s775
      %p777 = scmp.lt.s32.totalorder %s31, 1
      %s778 = scalar_select %p777, %s31, 1
      %s779 = scalar_lea.vmem %s9, %s778
      %p780 = scmp.lt.s32.totalorder %s31, 1
      %s781 = scalar_select %p780, %s31, 1
      %s782 = smul.addr %s781, 4
      %s783 = smul.addr %s782, 4
      %s784 = scalar_lea.vmem %s10, %s783
      %p785 = scmp.lt.s32.totalorder %s31, 1
      %s786 = scalar_select %p785, %s31, 1
      %s787 = scalar_lea.vmem %s11, %s786
      %p788 = scmp.lt.s32.totalorder %s31, 1
      %s789 = scalar_select %p788, %s31, 1
      %s790 = smul.addr %s789, 8
      %s791 = smul.addr %s790, 4
      %s792 = scalar_lea.vmem %s12, %s791
      %p793 = scmp.lt.s32.totalorder %s31, 1
      %s794 = scalar_select %p793, %s31, 1
      %s795 = scalar_lea.vmem %s13, %s794
      %p796 = scmp.lt.s32.totalorder %s31, 1
      %s797 = scalar_select %p796, %s31, 1
      %s798 = scalar_lea.vmem %s14, %s797
      %p799 = scmp.lt.s32.totalorder %s31, 1
      %s800 = scalar_select %p799, %s31, 1
      %s801 = scalar_lea.vmem %s15, %s800
      %p802 = scmp.lt.s32.totalorder %s31, 1
      %s803 = scalar_select %p802, %s31, 1
      %s804 = smul.addr %s803, 4
      %s805 = smul.addr %s804, 4
      %s806 = scalar_lea.vmem %s16, %s805
      %p808 = scmp.eq.s32.totalorder %s31, 0
      // Predicated region
      $region101: #{device_forward.2} parent=99 // pred_check
        %p809 = pneg %p808
      $region102: #{device_forward.2} parent=99 // pred_check_branch
        %811 = sbr.rel (%p809) target = $region104
      $region103: #{device_forward.2} parent=99 // pred_region
        %v812 = vld [vmem:[%s0] sm:$0xff]
        %v813 = vld [vmem:[%s0 + $0x8] sm:$0xff]
        %v814 = vld [vmem:[%s2] sm:$0x1]
        %v815 = vld [vmem:[%s3] sm:$0x1]
        %vm816 = vcmask 261120
        %v817 = vsel %vm816, %v812, 0.0
        %818 = vadd.xlane.f32.xlu0 %v817
        %v819 = vpop.xlane.xlu0 %818
        %v820 = vsel %vm816, %v813, 0.0
        %821 = vadd.xlane.f32.xlu0 %v820
        %v822 = vpop.xlane.xlu0 %821
        %v823 = vrcp.pop 32.0
        %v824 = vmul.f32 32.0, %v823
        %v825 = vsub.f32 1.0, %v824
        %v826 = vmul.f32 %v823, %v825
        %v827 = vadd.f32 %v823, %v826
        %vm828 = vweird.f32 %v823
        %v829 = vsel %vm828, %v823, %v827
        %v830 = vmul.f32 %v819, %v829
        %v831 = vmul.f32 %v822, %v829
        %v832 = vsub.f32 %v812, %v830
        %v833 = vsub.f32 %v813, %v831
        %v834 = vmul.f32 %v832, %v832
        %v835 = vmul.f32 %v833, %v833
        %v836 = vsel %vm816, %v834, 0.0
        %837 = vadd.xlane.f32.xlu0 %v836
        %v838 = vpop.xlane.xlu0 %837
        %v839 = vsel %vm816, %v835, 0.0
        %840 = vadd.xlane.f32.xlu0 %v839
        %v841 = vpop.xlane.xlu0 %840
        %v842 = vmul.f32 %v838, %v829
        %v843 = vmul.f32 %v841, %v829
        %v844 = vadd.f32 %v842, 1e-12
        %v845 = vadd.f32 %v843, 1e-12
        %v846 = vrsqrt.pop %v844
        %v847 = vmul.f32 %v846, %v844
        %v848 = vmul.f32 %v847, %v846
        %v849 = vmul.f32 0.5, %v848
        %v850 = vsub.f32 1.5, %v849
        %v851 = vmul.f32 %v846, %v850
        %vm852 = vweird.f32 %v844
        %vm853 = vweird.f32 %v846
        %vm854 = vmor %vm852, %vm853
        %v855 = vsel %vm854, %v846, %v851
        %v856 = vrsqrt.pop %v845
        %v857 = vmul.f32 %v856, %v845
        %v858 = vmul.f32 %v857, %v856
        %v859 = vmul.f32 0.5, %v858
        %v860 = vsub.f32 1.5, %v859
        %v861 = vmul.f32 %v856, %v860
        %vm862 = vweird.f32 %v845
        %vm863 = vweird.f32 %v856
        %vm864 = vmor %vm862, %vm863
        %v865 = vsel %vm864, %v856, %v861
        %v866 = vmul.f32 %v832, %v855
        %v867 = vmul.f32 %v833, %v865
        %v869 = vperm.slane %v814, 0
        %v871 = vmul.f32 %v866, %v869
        %v872 = vmul.f32 %v867, %v869
        %v874 = vperm.slane %v815, 0
        %v876 = vadd.f32 %v871, %v874
        %v877 = vadd.f32 %v872, %v874
        %878 = vst.msk [vmem:[#allocation2] sm:$0xff] %vm816, %v876
        %879 = vst.msk [vmem:[#allocation2 + $0x8] sm:$0xff] %vm816, %v877
        %880 = vst.msk [vmem:[#allocation3] sm:$0xff] %vm816, 0.0
        %881 = vst.msk [vmem:[#allocation3 + $0x8] sm:$0xff] %vm816, 0.0
      $region104: #{device_forward.2} parent=99 // pred_fallthru
        _
      %v882 = vld [vmem:[#allocation2] sm:$0xff]
      %v883 = vld [vmem:[#allocation2 + $0x8] sm:$0xff]
      %v884 = vld [vmem:[%s762] sm:$0xf]
      %v885 = vld [vmem:[%s762 + $0x4] sm:$0xf]
      %v886 = vld [vmem:[%s762 + $0x8] sm:$0xf]
      %v887 = vld [vmem:[%s762 + $0xc] sm:$0xf]
      %v888 = vpack.c.bf16 %v883, %v882
      %v889 = vld [vmem:[%s765] sm:$0x1]
      %v891 = vperm.slane %v889, 0
      %v897 = vunpack.c.l.b16 %v884
      %v898 = vunpack.c.l.b16 %v885
      %v899 = vunpack.c.l.b16 %v886
      %v900 = vunpack.c.l.b16 %v887
      %v901 = vpack.c.b16 %v898, %v897
      %v902 = vpack.c.b16 %v900, %v899
      %vm905 = vcmask 261120
      %v907 = vsel %vm905, %v888, 0
      %909 = vmatpush.bf16.msra.mxu0 0
      %910 = vmatpush.bf16.msra.mxu0 0
      %911 = vmatpush.bf16.msra.mxu0 0
      %912 = vmatpush.bf16.msra.mxu0 0
      %913 = vmatpush.bf16.msra.mxu0 0
      %914 = vmatpush.bf16.msra.mxu0 0
      %915 = vmatpush.bf16.msra.mxu0 %v902
      %916 = vmatpush.bf16.msra.mxu0 %v901
      %917 = vmatmul.bf16.gmra.mxu0 %v907
      %v918 = vpop.f32.mrf.mxu0
      %v919 = vadd.f32 %v891, %v918
      %v920 = vpop.f32.mrf.mxu0
      %v921 = vadd.f32 %v891, %v920
      %922 = vdwg.mxu0
      %v923 = vld [vmem:[%s1] sm:$0x1]
      %v924 = vld [vmem:[%s1 + $0x1] sm:$0x1]
      %v925 = vld [vmem:[%s770] sm:$0xf]
      %v926 = vld [vmem:[%s770 + $0x4] sm:$0xf]
      %v927 = vld [vmem:[%s770 + $0x8] sm:$0xf]
      %v928 = vld [vmem:[%s770 + $0xc] sm:$0xf]
      %v929 = vpack.c.bf16 %v919, %v919
      %v930 = vpack.c.bf16 %v921, %v921
      %v932 = vunpack.c.l.b16 %v929
      %v933 = vpack.c.b16 %v932, %v932
      %934 = vrot.lane.b32.xlu0 %v933, 96
      %v935 = vpop.permute.xlu0 %934
      %vm936 = vcmask 130048
      %v938 = vsel %vm936, %v929, 0
      %v941 = vsel %vm936, %v935, 0
      %943 = vmatpush.bf16.xpose.msra.mxu0 0
      %944 = vmatpush.bf16.xpose.msra.mxu0 0
      %945 = vmatpush.bf16.xpose.msra.mxu0 0
      %946 = vmatpush.bf16.xpose.msra.mxu0 0
      %947 = vmatpush.bf16.xpose.msra.mxu0 0
      %948 = vmatpush.bf16.xpose.msra.mxu0 0
      %949 = vmatpush.bf16.xpose.msra.mxu0 0
      %950 = vmatpush.bf16.xpose.msra.mxu0 %v941
      %951 = vmatmul.bf16.gmra.mxu0 %v938
      %v952 = vpop.f32.mrf.mxu0
      %v953 = vadd.f32 0.0, %v952
      %v954 = vpop.f32.mrf.mxu0
      %955 = vdwg.mxu0
      %v957 = vunpack.c.l.b16 %v930
      %v958 = vpack.c.b16 %v957, %v957
      %959 = vrot.lane.b32.xlu0 %v958, 96
      %v960 = vpop.permute.xlu0 %959
      %v962 = vsel %vm936, %v930, 0
      %v965 = vsel %vm936, %v960, 0
      %967 = vmatpush.bf16.xpose.msra.mxu0 0
      %968 = vmatpush.bf16.xpose.msra.mxu0 0
      %969 = vmatpush.bf16.xpose.msra.mxu0 0
      %970 = vmatpush.bf16.xpose.msra.mxu0 0
      %971 = vmatpush.bf16.xpose.msra.mxu0 0
      %972 = vmatpush.bf16.xpose.msra.mxu0 0
      %973 = vmatpush.bf16.xpose.msra.mxu0 0
      %974 = vmatpush.bf16.xpose.msra.mxu0 %v965
      %975 = vmatmul.bf16.gmra.mxu0 %v962
      %v976 = vpop.f32.mrf.mxu0
      %v977 = vadd.f32 0.0, %v976
      %v978 = vpop.f32.mrf.mxu0
      %979 = vdwg.mxu0
      %v980 = vmul.f32 %v953, 0.25
      %v981 = vmul.f32 %v977, 0.25
      %v984 = vperm.slane %v923, 0
      %v985 = vperm.slane %v924, 0
      %v988 = vadd.f32 %v980, %v984
      %v989 = vadd.f32 %v981, %v985
      %vm990 = vcmask 64512
      %v991 = vsel %vm990, %v988, -inf
      %992 = vmax.xlane.f32.xlu0 %v991
      %v993 = vpop.xlane.xlu0 %992
      %v994 = vsel %vm990, %v989, -inf
      %995 = vmax.xlane.f32.xlu0 %v994
      %v996 = vpop.xlane.xlu0 %995
      %v997 = vsub.f32 %v988, %v993
      %v998 = vsub.f32 %v989, %v996
      %v999 = vmul.f32 %v997, 1.442695
      %v1000 = vpow.pop %v999
      %v1001 = vmul.f32 %v998, 1.442695
      %v1002 = vpow.pop %v1001
      %v1003 = vsel %vm990, %v1000, 0.0
      %1004 = vadd.xlane.f32.xlu0 %v1003
      %v1005 = vpop.xlane.xlu0 %1004
      %v1006 = vsel %vm990, %v1002, 0.0
      %1007 = vadd.xlane.f32.xlu0 %v1006
      %v1008 = vpop.xlane.xlu0 %1007
      %v1009 = vrcp.pop %v1005
      %v1010 = vrcp.pop %v1008
      %v1011 = vmul.f32 %v1000, %v1009
      %v1012 = vmul.f32 %v1002, %v1010
      %v1013 = vpack.c.bf16 %v1011, %v1011
      %v1014 = vpack.c.bf16 %v1012, %v1012
      %1015 = vrot.lane.b32.xlu0 %v933, 64
      %v1016 = vpop.permute.xlu0 %1015
      %v1018 = vsel %vm990, %v1013, 0
      %vm1020 = vcmask 1043456
      %v1022 = vsel %vm1020, %v1016, 0
      %1024 = vmatpush.bf16.msra.mxu0 0
      %1025 = vmatpush.bf16.msra.mxu0 0
      %1026 = vmatpush.bf16.msra.mxu0 0
      %1027 = vmatpush.bf16.msra.mxu0 0
      %1028 = vmatpush.bf16.msra.mxu0 0
      %1029 = vmatpush.bf16.msra.mxu0 0
      %1030 = vmatpush.bf16.msra.mxu0 0
      %1031 = vmatpush.bf16.msra.mxu0 %v1022
      %1032 = vmatmul.bf16.gmra.mxu0 %v1018
      %v1033 = vpop.f32.mrf.mxu0
      %v1034 = vadd.f32 0.0, %v1033
      %v1035 = vpop.f32.mrf.mxu0
      %1036 = vdwg.mxu0
      %1037 = vrot.lane.b32.xlu0 %v958, 64
      %v1038 = vpop.permute.xlu0 %1037
      %v1040 = vsel %vm990, %v1014, 0
      %v1043 = vsel %vm1020, %v1038, 0
      %1045 = vmatpush.bf16.msra.mxu0 0
      %1046 = vmatpush.bf16.msra.mxu0 0
      %1047 = vmatpush.bf16.msra.mxu0 0
      %1048 = vmatpush.bf16.msra.mxu0 0
      %1049 = vmatpush.bf16.msra.mxu0 0
      %1050 = vmatpush.bf16.msra.mxu0 0
      %1051 = vmatpush.bf16.msra.mxu0 0
      %1052 = vmatpush.bf16.msra.mxu0 %v1043
      %1053 = vmatmul.bf16.gmra.mxu0 %v1040
      %v1054 = vpop.f32.mrf.mxu0
      %v1055 = vadd.f32 0.0, %v1054
      %v1056 = vpop.f32.mrf.mxu0
      %1057 = vdwg.mxu0
      %v1058 = vpack.c.bf16 %v1055, %v1034
      %1059 = vrot.lane.b32.xlu0 %v933, 112
      %v1060 = vpop.permute.xlu0 %1059
      %1061 = vrot.lane.b32.xlu0 %v933, 80
      %v1062 = vpop.permute.xlu0 %1061
      %v1064 = vsel %vm936, %v1060, 0
      %v1067 = vsel %vm936, %v1062, 0
      %1069 = vmatpush.bf16.xpose.msra.mxu0 0
      %1070 = vmatpush.bf16.xpose.msra.mxu0 0
      %1071 = vmatpush.bf16.xpose.msra.mxu0 0
      %1072 = vmatpush.bf16.xpose.msra.mxu0 0
      %1073 = vmatpush.bf16.xpose.msra.mxu0 0
      %1074 = vmatpush.bf16.xpose.msra.mxu0 0
      %1075 = vmatpush.bf16.xpose.msra.mxu0 0
      %1076 = vmatpush.bf16.xpose.msra.mxu0 %v1067
      %1077 = vmatmul.bf16.gmra.mxu0 %v1064
      %v1078 = vpop.f32.mrf.mxu0
      %v1079 = vadd.f32 0.0, %v1078
      %v1080 = vpop.f32.mrf.mxu0
      %1081 = vdwg.mxu0
      %1082 = vrot.lane.b32.xlu0 %v958, 112
      %v1083 = vpop.permute.xlu0 %1082
      %1084 = vrot.lane.b32.xlu0 %v958, 80
      %v1085 = vpop.permute.xlu0 %1084
      %v1087 = vsel %vm936, %v1083, 0
      %v1090 = vsel %vm936, %v1085, 0
      %1092 = vmatpush.bf16.xpose.msra.mxu0 0
      %1093 = vmatpush.bf16.xpose.msra.mxu0 0
      %1094 = vmatpush.bf16.xpose.msra.mxu0 0
      %1095 = vmatpush.bf16.xpose.msra.mxu0 0
      %1096 = vmatpush.bf16.xpose.msra.mxu0 0
      %1097 = vmatpush.bf16.xpose.msra.mxu0 0
      %1098 = vmatpush.bf16.xpose.msra.mxu0 0
      %1099 = vmatpush.bf16.xpose.msra.mxu0 %v1090
      %1100 = vmatmul.bf16.gmra.mxu0 %v1087
      %v1101 = vpop.f32.mrf.mxu0
      %v1102 = vadd.f32 0.0, %v1101
      %v1103 = vpop.f32.mrf.mxu0
      %1104 = vdwg.mxu0
      %v1105 = vmul.f32 %v1079, 0.25
      %v1106 = vmul.f32 %v1102, 0.25
      %v1107 = vadd.f32 %v1105, %v984
      %v1108 = vadd.f32 %v1106, %v985
      %v1109 = vsel %vm990, %v1107, -inf
      %1110 = vmax.xlane.f32.xlu0 %v1109
      %v1111 = vpop.xlane.xlu0 %1110
      %v1112 = vsel %vm990, %v1108, -inf
      %1113 = vmax.xlane.f32.xlu0 %v1112
      %v1114 = vpop.xlane.xlu0 %1113
      %v1115 = vsub.f32 %v1107, %v1111
      %v1116 = vsub.f32 %v1108, %v1114
      %v1117 = vmul.f32 %v1115, 1.442695
      %v1118 = vpow.pop %v1117
      %v1119 = vmul.f32 %v1116, 1.442695
      %v1120 = vpow.pop %v1119
      %v1121 = vsel %vm990, %v1118, 0.0
      %1122 = vadd.xlane.f32.xlu0 %v1121
      %v1123 = vpop.xlane.xlu0 %1122
      %v1124 = vsel %vm990, %v1120, 0.0
      %1125 = vadd.xlane.f32.xlu0 %v1124
      %v1126 = vpop.xlane.xlu0 %1125
      %v1127 = vrcp.pop %v1123
      %v1128 = vrcp.pop %v1126
      %v1129 = vmul.f32 %v1118, %v1127
      %v1130 = vmul.f32 %v1120, %v1128
      %v1131 = vpack.c.bf16 %v1129, %v1129
      %v1132 = vpack.c.bf16 %v1130, %v1130
      %1133 = vrot.lane.b32.xlu0 %v933, 48
      %v1134 = vpop.permute.xlu0 %1133
      %v1136 = vsel %vm990, %v1131, 0
      %v1139 = vsel %vm1020, %v1134, 0
      %1141 = vmatpush.bf16.msra.mxu0 0
      %1142 = vmatpush.bf16.msra.mxu0 0
      %1143 = vmatpush.bf16.msra.mxu0 0
      %1144 = vmatpush.bf16.msra.mxu0 0
      %1145 = vmatpush.bf16.msra.mxu0 0
      %1146 = vmatpush.bf16.msra.mxu0 0
      %1147 = vmatpush.bf16.msra.mxu0 0
      %1148 = vmatpush.bf16.msra.mxu0 %v1139
      %1149 = vmatmul.bf16.gmra.mxu0 %v1136
      %v1150 = vpop.f32.mrf.mxu0
      %v1151 = vadd.f32 0.0, %v1150
      %v1152 = vpop.f32.mrf.mxu0
      %1153 = vdwg.mxu0
      %1154 = vrot.lane.b32.xlu0 %v958, 48
      %v1155 = vpop.permute.xlu0 %1154
      %v1157 = vsel %vm990, %v1132, 0
      %v1160 = vsel %vm1020, %v1155, 0
      %1162 = vmatpush.bf16.msra.mxu0 0
      %1163 = vmatpush.bf16.msra.mxu0 0
      %1164 = vmatpush.bf16.msra.mxu0 0
      %1165 = vmatpush.bf16.msra.mxu0 0
      %1166 = vmatpush.bf16.msra.mxu0 0
      %1167 = vmatpush.bf16.msra.mxu0 0
      %1168 = vmatpush.bf16.msra.mxu0 0
      %1169 = vmatpush.bf16.msra.mxu0 %v1160
      %1170 = vmatmul.bf16.gmra.mxu0 %v1157
      %v1171 = vpop.f32.mrf.mxu0
      %v1172 = vadd.f32 0.0, %v1171
      %v1173 = vpop.f32.mrf.mxu0
      %1174 = vdwg.mxu0
      %v1175 = vpack.c.bf16 %v1172, %v1151
      %v1178 = vunpack.c.l.b16 %v927
      %v1179 = vunpack.c.l.b16 %v928
      %v1180 = vpack.c.b16 %v1179, %v1178
      %v1183 = vsel %vm936, %v1175, 0
      %1185 = vmatpush.bf16.msra.mxu0 0
      %1186 = vmatpush.bf16.msra.mxu0 0
      %1187 = vmatpush.bf16.msra.mxu0 0
      %1188 = vmatpush.bf16.msra.mxu0 0
      %1189 = vmatpush.bf16.msra.mxu0 0
      %1190 = vmatpush.bf16.msra.mxu0 0
      %1191 = vmatpush.bf16.msra.mxu0 0
      %1192 = vmatpush.bf16.msra.mxu0 %v1180
      %1193 = vmatmul.bf16.gmra.mxu0 %v1183
      %v1194 = vpop.f32.mrf.mxu0
      %v1195 = vadd.f32 0.0, %v1194
      %v1196 = vpop.f32.mrf.mxu0
      %v1197 = vadd.f32 0.0, %v1196
      %1198 = vdwg.mxu0
      %v1201 = vunpack.c.l.b16 %v925
      %v1202 = vunpack.c.l.b16 %v926
      %v1203 = vpack.c.b16 %v1202, %v1201
      %v1206 = vsel %vm936, %v1058, 0
      %1208 = vmatpush.bf16.msra.mxu0 0
      %1209 = vmatpush.bf16.msra.mxu0 0
      %1210 = vmatpush.bf16.msra.mxu0 0
      %1211 = vmatpush.bf16.msra.mxu0 0
      %1212 = vmatpush.bf16.msra.mxu0 0
      %1213 = vmatpush.bf16.msra.mxu0 0
      %1214 = vmatpush.bf16.msra.mxu0 0
      %1215 = vmatpush.bf16.msra.mxu0 %v1203
      %1216 = vmatmul.bf16.gmra.mxu0 %v1206
      %v1217 = vpop.f32.mrf.mxu0
      %v1218 = vadd.f32 %v1195, %v1217
      %v1219 = vpop.f32.mrf.mxu0
      %v1220 = vadd.f32 %v1197, %v1219
      %1221 = vdwg.mxu0
      %v1222 = vld [vmem:[%s773] sm:$0x1]
      %v1224 = vperm.slane %v1222, 0
      %v1226 = vadd.f32 %v1218, %v1224
      %v1227 = vadd.f32 %v1220, %v1224
      %v1228 = vadd.f32 %v882, %v1226
      %v1229 = vadd.f32 %v883, %v1227
      %v1230 = vld [vmem:[%s776] sm:$0x1]
      %v1231 = vld [vmem:[%s779] sm:$0x1]
      %v1232 = vsel %vm905, %v1228, 0.0
      %1233 = vadd.xlane.f32.xlu0 %v1232
      %v1234 = vpop.xlane.xlu0 %1233
      %v1235 = vsel %vm905, %v1229, 0.0
      %1236 = vadd.xlane.f32.xlu0 %v1235
      %v1237 = vpop.xlane.xlu0 %1236
      %v1238 = vrcp.pop 32.0
      %v1239 = vmul.f32 32.0, %v1238
      %v1240 = vsub.f32 1.0, %v1239
      %v1241 = vmul.f32 %v1238, %v1240
      %v1242 = vadd.f32 %v1238, %v1241
      %vm1243 = vweird.f32 %v1238
      %v1244 = vsel %vm1243, %v1238, %v1242
      %v1245 = vmul.f32 %v1234, %v1244
      %v1246 = vmul.f32 %v1237, %v1244
      %v1247 = vsub.f32 %v1228, %v1245
      %v1248 = vsub.f32 %v1229, %v1246
      %v1249 = vmul.f32 %v1247, %v1247
      %v1250 = vmul.f32 %v1248, %v1248
      %v1251 = vsel %vm905, %v1249, 0.0
      %1252 = vadd.xlane.f32.xlu0 %v1251
      %v1253 = vpop.xlane.xlu0 %1252
      %v1254 = vsel %vm905, %v1250, 0.0
      %1255 = vadd.xlane.f32.xlu0 %v1254
      %v1256 = vpop.xlane.xlu0 %1255
      %v1257 = vmul.f32 %v1253, %v1244
      %v1258 = vmul.f32 %v1256, %v1244
      %v1259 = vadd.f32 %v1257, 1e-12
      %v1260 = vadd.f32 %v1258, 1e-12
      %v1261 = vrsqrt.pop %v1259
      %v1262 = vmul.f32 %v1261, %v1259
      %v1263 = vmul.f32 %v1262, %v1261
      %v1264 = vmul.f32 0.5, %v1263
      %v1265 = vsub.f32 1.5, %v1264
      %v1266 = vmul.f32 %v1261, %v1265
      %vm1267 = vweird.f32 %v1259
      %vm1268 = vweird.f32 %v1261
      %vm1269 = vmor %vm1267, %vm1268
      %v1270 = vsel %vm1269, %v1261, %v1266
      %v1271 = vrsqrt.pop %v1260
      %v1272 = vmul.f32 %v1271, %v1260
      %v1273 = vmul.f32 %v1272, %v1271
      %v1274 = vmul.f32 0.5, %v1273
      %v1275 = vsub.f32 1.5, %v1274
      %v1276 = vmul.f32 %v1271, %v1275
      %vm1277 = vweird.f32 %v1260
      %vm1278 = vweird.f32 %v1271
      %vm1279 = vmor %vm1277, %vm1278
      %v1280 = vsel %vm1279, %v1271, %v1276
      %v1281 = vmul.f32 %v1247, %v1270
      %v1282 = vmul.f32 %v1248, %v1280
      %v1284 = vperm.slane %v1230, 0
      %v1286 = vmul.f32 %v1281, %v1284
      %v1287 = vmul.f32 %v1282, %v1284
      %v1289 = vperm.slane %v1231, 0
      %v1291 = vadd.f32 %v1286, %v1289
      %v1292 = vadd.f32 %v1287, %v1289
      %v1293 = vld [vmem:[%s784] sm:$0xf]
      %v1294 = vld [vmem:[%s784 + $0x4] sm:$0xf]
      %v1295 = vld [vmem:[%s784 + $0x8] sm:$0xf]
      %v1296 = vld [vmem:[%s784 + $0xc] sm:$0xf]
      %v1297 = vpack.c.bf16 %v1292, %v1291
      %v1298 = vld [vmem:[%s787] sm:$0x1]
      %v1300 = vperm.slane %v1298, 0
      %v1306 = vunpack.c.l.b16 %v1293
      %v1307 = vunpack.c.l.b16 %v1294
      %v1308 = vunpack.c.l.b16 %v1295
      %v1309 = vunpack.c.l.b16 %v1296
      %v1310 = vpack.c.b16 %v1307, %v1306
      %v1311 = vpack.c.b16 %v1309, %v1308
      %v1315 = vsel %vm905, %v1297, 0
      %1317 = vmatpush.bf16.msra.mxu0 0
      %1318 = vmatpush.bf16.msra.mxu0 0
      %1319 = vmatpush.bf16.msra.mxu0 0
      %1320 = vmatpush.bf16.msra.mxu0 0
      %1321 = vmatpush.bf16.msra.mxu0 0
      %1322 = vmatpush.bf16.msra.mxu0 0
      %1323 = vmatpush.bf16.msra.mxu0 %v1311
      %1324 = vmatpush.bf16.msra.mxu0 %v1310
      %1325 = vmatmul.bf16.gmra.mxu0 %v1315
      %v1326 = vpop.f32.mrf.mxu0
      %v1327 = vadd.f32 %v1300, %v1326
      %v1328 = vpop.f32.mrf.mxu0
      %v1329 = vadd.f32 %v1300, %v1328
      %1330 = vdwg.mxu0
      %v1331 = vmul.f32 %v1327, %v1327
      %v1332 = vmul.f32 %v1329, %v1329
      %v1333 = vmul.f32 %v1327, %v1331
      %v1334 = vmul.f32 %v1329, %v1332
      %v1335 = vmul.f32 %v1333, 0.044715
      %v1336 = vmul.f32 %v1334, 0.044715
      %v1337 = vadd.f32 %v1327, %v1335
      %v1338 = vadd.f32 %v1329, %v1336
      %v1339 = vmul.f32 %v1337, 0.7978846
      %v1340 = vmul.f32 %v1338, 0.7978846
      %v1341 = vtanh.pop %v1339
      %v1342 = vtanh.pop %v1340
      %v1343 = vadd.f32 %v1341, 1.0
      %v1344 = vadd.f32 %v1342, 1.0
      %v1345 = vmul.f32 %v1343, 0.5
      %v1346 = vmul.f32 %v1344, 0.5
      %v1347 = vmul.f32 %v1327, %v1345
      %v1348 = vmul.f32 %v1329, %v1346
      %v1349 = vld [vmem:[%s792] sm:$0xf]
      %v1350 = vld [vmem:[%s792 + $0x4] sm:$0xf]
      %v1351 = vld [vmem:[%s792 + $0x8] sm:$0xf]
      %v1352 = vld [vmem:[%s792 + $0xc] sm:$0xf]
      %v1353 = vld [vmem:[%s792 + $0x10] sm:$0xf]
      %v1354 = vld [vmem:[%s792 + $0x14] sm:$0xf]
      %v1355 = vld [vmem:[%s792 + $0x18] sm:$0xf]
      %v1356 = vld [vmem:[%s792 + $0x1c] sm:$0xf]
      %v1357 = vpack.c.bf16 %v1348, %v1347
      %v1358 = vld [vmem:[%s795] sm:$0x1]
      %v1360 = vperm.slane %v1358, 0
      %v1370 = vunpack.c.l.b16 %v1349
      %v1371 = vunpack.c.l.b16 %v1350
      %v1372 = vunpack.c.l.b16 %v1351
      %v1373 = vunpack.c.l.b16 %v1352
      %v1374 = vunpack.c.l.b16 %v1353
      %v1375 = vunpack.c.l.b16 %v1354
      %v1376 = vunpack.c.l.b16 %v1355
      %v1377 = vunpack.c.l.b16 %v1356
      %v1378 = vpack.c.b16 %v1371, %v1370
      %v1379 = vpack.c.b16 %v1373, %v1372
      %v1380 = vpack.c.b16 %v1375, %v1374
      %v1381 = vpack.c.b16 %v1377, %v1376
      %vm1386 = vcmask 523264
      %v1388 = vsel %vm1386, %v1357, 0
      %1390 = vmatpush.bf16.msra.mxu0 0
      %1391 = vmatpush.bf16.msra.mxu0 0
      %1392 = vmatpush.bf16.msra.mxu0 0
      %1393 = vmatpush.bf16.msra.mxu0 0
      %1394 = vmatpush.bf16.msra.mxu0 %v1381
      %1395 = vmatpush.bf16.msra.mxu0 %v1380
      %1396 = vmatpush.bf16.msra.mxu0 %v1379
      %1397 = vmatpush.bf16.msra.mxu0 %v1378
      %1398 = vmatmul.bf16.gmra.mxu0 %v1388
      %v1399 = vpop.f32.mrf.mxu0
      %v1400 = vadd.f32 %v1360, %v1399
      %v1401 = vpop.f32.mrf.mxu0
      %v1402 = vadd.f32 %v1360, %v1401
      %1403 = vdwg.mxu0
      %v1404 = vadd.f32 %v1291, %v1400
      %v1405 = vadd.f32 %v1292, %v1402
      %v1406 = vld [vmem:[%s798] sm:$0x1]
      %v1407 = vld [vmem:[%s801] sm:$0x1]
      %v1408 = vsel %vm905, %v1404, 0.0
      %1409 = vadd.xlane.f32.xlu0 %v1408
      %v1410 = vpop.xlane.xlu0 %1409
      %v1411 = vsel %vm905, %v1405, 0.0
      %1412 = vadd.xlane.f32.xlu0 %v1411
      %v1413 = vpop.xlane.xlu0 %1412
      %v1414 = vmul.f32 %v1410, %v1244
      %v1415 = vmul.f32 %v1413, %v1244
      %v1416 = vsub.f32 %v1404, %v1414
      %v1417 = vsub.f32 %v1405, %v1415
      %v1418 = vmul.f32 %v1416, %v1416
      %v1419 = vmul.f32 %v1417, %v1417
      %v1420 = vsel %vm905, %v1418, 0.0
      %1421 = vadd.xlane.f32.xlu0 %v1420
      %v1422 = vpop.xlane.xlu0 %1421
      %v1423 = vsel %vm905, %v1419, 0.0
      %1424 = vadd.xlane.f32.xlu0 %v1423
      %v1425 = vpop.xlane.xlu0 %1424
      %v1426 = vmul.f32 %v1422, %v1244
      %v1427 = vmul.f32 %v1425, %v1244
      %v1428 = vadd.f32 %v1426, 1e-12
      %v1429 = vadd.f32 %v1427, 1e-12
      %v1430 = vrsqrt.pop %v1428
      %v1431 = vmul.f32 %v1430, %v1428
      %v1432 = vmul.f32 %v1431, %v1430
      %v1433 = vmul.f32 0.5, %v1432
      %v1434 = vsub.f32 1.5, %v1433
      %v1435 = vmul.f32 %v1430, %v1434
      %vm1436 = vweird.f32 %v1428
      %vm1437 = vweird.f32 %v1430
      %vm1438 = vmor %vm1436, %vm1437
      %v1439 = vsel %vm1438, %v1430, %v1435
      %v1440 = vrsqrt.pop %v1429
      %v1441 = vmul.f32 %v1440, %v1429
      %v1442 = vmul.f32 %v1441, %v1440
      %v1443 = vmul.f32 0.5, %v1442
      %v1444 = vsub.f32 1.5, %v1443
      %v1445 = vmul.f32 %v1440, %v1444
      %vm1446 = vweird.f32 %v1429
      %vm1447 = vweird.f32 %v1440
      %vm1448 = vmor %vm1446, %vm1447
      %v1449 = vsel %vm1448, %v1440, %v1445
      %v1450 = vmul.f32 %v1416, %v1439
      %v1451 = vmul.f32 %v1417, %v1449
      %v1453 = vperm.slane %v1406, 0
      %v1455 = vmul.f32 %v1450, %v1453
      %v1456 = vmul.f32 %v1451, %v1453
      %v1458 = vperm.slane %v1407, 0
      %v1460 = vadd.f32 %v1455, %v1458
      %v1461 = vadd.f32 %v1456, %v1458
      %1462 = vst.msk [vmem:[#allocation2] sm:$0xff] %vm905, %v1460
      %1463 = vst.msk [vmem:[#allocation2 + $0x8] sm:$0xff] %vm905, %v1461
      %v1464 = vld [vmem:[#allocation3] sm:$0xff]
      %v1465 = vld [vmem:[#allocation3 + $0x8] sm:$0xff]
      %v1466 = vld [vmem:[%s806] sm:$0xf]
      %v1467 = vld [vmem:[%s806 + $0x4] sm:$0xf]
      %v1468 = vld [vmem:[%s806 + $0x8] sm:$0xf]
      %v1469 = vld [vmem:[%s806 + $0xc] sm:$0xf]
      %v1470 = vpack.c.bf16 %v1461, %v1460
      %v1475 = vunpack.c.l.b16 %v1466
      %v1476 = vunpack.c.l.b16 %v1467
      %v1477 = vunpack.c.l.b16 %v1468
      %v1478 = vunpack.c.l.b16 %v1469
      %v1479 = vpack.c.b16 %v1476, %v1475
      %v1480 = vpack.c.b16 %v1478, %v1477
      %v1484 = vsel %vm905, %v1470, 0
      %1486 = vmatpush.bf16.msra.mxu0 0
      %1487 = vmatpush.bf16.msra.mxu0 0
      %1488 = vmatpush.bf16.msra.mxu0 0
      %1489 = vmatpush.bf16.msra.mxu0 0
      %1490 = vmatpush.bf16.msra.mxu0 0
      %1491 = vmatpush.bf16.msra.mxu0 0
      %1492 = vmatpush.bf16.msra.mxu0 %v1480
      %1493 = vmatpush.bf16.msra.mxu0 %v1479
      %1494 = vmatmul.bf16.gmra.mxu0 %v1484
      %v1495 = vpop.f32.mrf.mxu0
      %v1496 = vadd.f32 0.0, %v1495
      %v1497 = vpop.f32.mrf.mxu0
      %v1498 = vadd.f32 0.0, %v1497
      %1499 = vdwg.mxu0
      %v1500 = vadd.f32 %v1464, %v1496
      %v1501 = vadd.f32 %v1465, %v1498
      %1502 = vst.msk [vmem:[#allocation3] sm:$0xff] %vm905, %v1500
      %1503 = vst.msk [vmem:[#allocation3 + $0x8] sm:$0xff] %vm905, %v1501
      %p1504 = scmp.eq.s32.totalorder %s31, 1
      // Predicated region
      $region105: #{device_forward.2} parent=99 // pred_check
        %p1505 = pneg %p1504
      $region106: #{device_forward.2} parent=99 // pred_check_branch
        %1507 = sbr.rel (%p1505) target = $region108
      $region107: #{device_forward.2} parent=99 // pred_region
        %v1508 = vld [vmem:[#allocation3] sm:$0xff]
        %v1509 = vld [vmem:[#allocation3 + $0x8] sm:$0xff]
        %v1510 = vld [vmem:[%s17] sm:$0x1]
        %v1512 = vperm.slane %v1510, 0
        %v1514 = vadd.f32 %v1508, %v1512
        %v1515 = vadd.f32 %v1509, %v1512
        %v1516 = vld [vmem:[%s18] sm:$0xf]
        %v1517 = vld [vmem:[%s18 + $0x4] sm:$0xf]
        %v1518 = vld [vmem:[%s18 + $0x8] sm:$0xf]
        %v1519 = vld [vmem:[%s18 + $0xc] sm:$0xf]
        %v1520 = vpack.c.bf16 %v1515, %v1514
        %v1521 = vld [vmem:[%s19] sm:$0x1]
        %v1523 = vperm.slane %v1521, 0
        %v1529 = vunpack.c.l.b16 %v1516
        %v1530 = vunpack.c.l.b16 %v1517
        %v1531 = vunpack.c.l.b16 %v1518
        %v1532 = vunpack.c.l.b16 %v1519
        %v1533 = vpack.c.b16 %v1530, %v1529
        %v1534 = vpack.c.b16 %v1532, %v1531
        %v1538 = vsel %vm905, %v1520, 0
        %1540 = vmatpush.bf16.msra.mxu0 0
        %1541 = vmatpush.bf16.msra.mxu0 0
        %1542 = vmatpush.bf16.msra.mxu0 0
        %1543 = vmatpush.bf16.msra.mxu0 0
        %1544 = vmatpush.bf16.msra.mxu0 0
        %1545 = vmatpush.bf16.msra.mxu0 0
        %1546 = vmatpush.bf16.msra.mxu0 %v1534
        %1547 = vmatpush.bf16.msra.mxu0 %v1533
        %1548 = vmatmul.bf16.gmra.mxu0 %v1538
        %v1549 = vpop.f32.mrf.mxu0
        %v1550 = vadd.f32 %v1523, %v1549
        %v1551 = vpop.f32.mrf.mxu0
        %v1552 = vadd.f32 %v1523, %v1551
        %1553 = vdwg.mxu0
        %1554 = vst.msk [vmem:[%s20] sm:$0xff] %vm990, %v1550
        %1555 = vst.msk [vmem:[%s20 + $0x8] sm:$0xff] %vm990, %v1552
      $region108: #{device_forward.2} parent=99 // pred_fallthru
        _
      // Predicated region
      $region109: #{device_forward.2} parent=99 // pred_check
        %p1556 = pneg %p529
      $region110: #{device_forward.2} parent=99 // pred_check_branch
        %1558 = sbr.rel (%p1556) target = $region112
      $region111: #{device_forward.2} parent=99 // pred_region
        _
      $region112: #{device_forward.2} parent=99 // pred_fallthru
        _
      // Predicated region
      $region113: #{device_forward.2} parent=99 // pred_check
        %p1559 = pneg %p529
      $region114: #{device_forward.2} parent=99 // pred_check_branch
        %1561 = sbr.rel (%p1559) target = $region116
      $region115: #{device_forward.2} parent=99 // pred_region
        _
      $region116: #{device_forward.2} parent=99 // pred_fallthru
        _
    $region100: #{device_forward.2} parent=5 // pred_fallthru
      _
    %p1562 = scmp.le.s32.totalorder 2, %s26
    // Predicated region
    $region117: #{device_forward.2} parent=5 // pred_check
      %p1563 = pneg %p1562
    $region118: #{device_forward.2} parent=5 // pred_check_branch
      %1565 = sbr.rel (%p1563) target = $region120
    $region119: #{device_forward.2} parent=5 // pred_region
      %s1566 = ssub.s32 %s26, 2
    $region120: #{device_forward.2} parent=5 // pred_fallthru
      _
  $region6: #{device_forward.2} parent=0 // loop_footer
    %s30 = sadd.s32 1, %s26
  $region7: #{device_forward.2} parent=0 // loop_footer_branch
    %25 = sbr.rel target = $region3
  $region8: #{device_forward.2} parent=0 // loop_exit
    _

</llo_original>
